<compile_context>
chip_gen: v5e
topology: v5e:2x2
jax: 0.10.0
libtpu: 0.0.40
codegen_flags: <defaults>
</compile_context>

<pallas_src>
import numpy as np

import jax
import jax.numpy as jnp
from jax.experimental import pallas as pl
from jax.experimental.pallas import tpu as pltpu

INI = 0.01


# ---------------------------------------------------------------------------
# LSTM cell math (PyTorch gate order: i, f, g, o).
# The i/f/o gate weights & biases are PRE-SCALED by 0.5 in the wrapper, so
# sigmoid(a) == 0.5 + 0.5 * tanh(gates_scaled)  — one EUP tanh on the full
# (B, 4H) vreg covers all four gates.
# ---------------------------------------------------------------------------
def _lstm_cell(gates, c, H):
    t = jnp.tanh(gates)                       # one EUP push, full (B, 4H) vreg
    i = 0.5 + 0.5 * t[:, 0 * H:1 * H]
    f = 0.5 + 0.5 * t[:, 1 * H:2 * H]
    g = t[:, 2 * H:3 * H]
    o = 0.5 + 0.5 * t[:, 3 * H:4 * H]
    c_new = f * c + i * g
    h_new = o * jnp.tanh(c_new)               # second EUP push
    return h_new, c_new


# ---------------------------------------------------------------------------
# Fused multi-layer (bi)LSTM kernel builder — one invocation, no grid.
# ---------------------------------------------------------------------------
def _make_fused_lstm_kernel(n_layer, num_dir, T, B, H):
    G = 4 * H
    unroll = max(1, min(T, 8))                # partial unroll (review item)

    def kernel(*refs):
        if n_layer > 1:
            (xp0_ref,     # (num_dir, T, B, 4H) f32  layer-0 x@W_ih^T + bias
             whh_ref,     # (n_layer, num_dir, H, 4H) bf16  recurrent weights
             h0_ref,      # (n_layer, num_dir, B, H) f32
             c0_ref,      # (n_layer, num_dir, B, H) f32
             wihn_ref,    # (n_layer-1, num_dir*H, num_dir*4H) bf16
             bn_ref,      # (n_layer-1, 1, num_dir*4H) f32
             out_ref,     # (T, B, num_dir*H) f32
             buf_ref,     # scratch (T, B, num_dir*H) f32  inter-layer output
             xpb_ref,     # scratch (num_dir, T, B, 4H) f32 projected gates
             ) = refs
        else:
            xp0_ref, whh_ref, h0_ref, c0_ref, out_ref = refs
            wihn_ref = bn_ref = buf_ref = xpb_ref = None

        for l in range(n_layer):
            # ---- gate pre-activations from the layer input ------------------
            if l == 0:
                xp_views = [xp0_ref.at[d] for d in range(num_dir)]
            else:
                # Project the previous layer's VMEM-resident output into this
                # layer's gate pre-activations (off the serial critical path).
                w_next = wihn_ref[l - 1]              # (num_dir*H, num_dir*4H)
                b_next = bn_ref[l - 1]                # (1, num_dir*4H)
                xpb_views = [xpb_ref.at[d] for d in range(num_dir)]

                def project(t, carry):
                    prev = buf_ref[t].astype(jnp.bfloat16)      # (B, num_dir*H)
                    xp = jnp.dot(prev, w_next,
                                 preferred_element_type=jnp.float32) + b_next
                    for d in range(num_dir):
                        xpb_views[d][t] = xp[:, d * G:(d + 1) * G]
                    return carry

                jax.lax.fori_loop(0, T, project, 0, unroll=unroll)
                xp_views = xpb_views

            dst = out_ref if l == n_layer - 1 else buf_ref

            # Recurrent weights (bf16) loaded once per layer, live in vregs.
            w_f = whh_ref[l, 0]                                  # (H, 4H) bf16
            w_b = whh_ref[l, 1] if num_dir == 2 else None

            # ---- serial recurrence over time, both directions fused ---------
            def step(t, carry):
                if num_dir == 2:
                    h_f, c_f, h_b, c_b = carry
                else:
                    h_f, c_f = carry

                gates_f = xp_views[0][t] + jnp.dot(
                    h_f.astype(jnp.bfloat16), w_f,
                    preferred_element_type=jnp.float32)
                h_f, c_f = _lstm_cell(gates_f, c_f, H)

                if num_dir == 2:
                    dst[t, :, 0:H] = h_f
                    rt = T - 1 - t            # reverse direction by indexing
                    gates_b = xp_views[1][rt] + jnp.dot(
                        h_b.astype(jnp.bfloat16), w_b,
                        preferred_element_type=jnp.float32)
                    h_b, c_b = _lstm_cell(gates_b, c_b, H)
                    dst[rt, :, H:2 * H] = h_b
                    return h_f, c_f, h_b, c_b

                dst[t] = h_f
                return h_f, c_f

            if num_dir == 2:
                carry0 = (h0_ref[l, 0], c0_ref[l, 0],
                          h0_ref[l, 1], c0_ref[l, 1])
            else:
                carry0 = (h0_ref[l, 0], c0_ref[l, 0])
            jax.lax.fori_loop(0, T, step, carry0, unroll=unroll)

    return kernel


def _fused_lstm_call(n_layer, num_dir, T, B, H):
    kernel = _make_fused_lstm_kernel(n_layer, num_dir, T, B, H)
    n_in = 6 if n_layer > 1 else 4
    scratch = []
    if n_layer > 1:
        scratch = [pltpu.VMEM((T, B, num_dir * H), jnp.float32),
                   pltpu.VMEM((num_dir, T, B, 4 * H), jnp.float32)]
    return pl.pallas_call(
        kernel,
        out_shape=jax.ShapeDtypeStruct((T, B, num_dir * H), jnp.float32),
        in_specs=[pl.BlockSpec(memory_space=pltpu.MemorySpace.VMEM)] * n_in,
        out_specs=pl.BlockSpec(memory_space=pltpu.MemorySpace.VMEM),
        scratch_shapes=scratch,
    )


# ---------------------------------------------------------------------------
# Wrapper: weight pre-processing (transpose, gate pre-scale, bf16 cast) and
# the hoisted layer-0 input projection in plain JAX; one pallas_call total.
# ---------------------------------------------------------------------------
def _prescale_gates(arr, H):
    """Multiply the i/f/o gate blocks (PyTorch order i,f,g,o along dim 0) by
    0.5 so that sigmoid(a) == 0.5 + 0.5*tanh(prescaled gate)."""
    s = np.full((4 * H,), 0.5, np.float32)
    s[2 * H:3 * H] = 1.0                      # g-gate (tanh) keeps scale 1
    return arr * s.reshape((4 * H,) + (1,) * (arr.ndim - 1))


def lstm_encoder_forward(x_btd, params, init_h, init_c, n_layer, bidirectional):
    """x_btd: [B, T, input_dim]  ->  [B, T, num_dir * n_hidden]"""
    B, T, _ = x_btd.shape
    H = init_h.shape[-1]
    num_dir = 2 if bidirectional else 1
    G = 4 * H

    x = jnp.transpose(x_btd, (1, 0, 2))                       # (T, B, D)

    sc = {}
    for l in range(n_layer):
        for d in range(num_dir):
            w_ih, w_hh, b_ih, b_hh = params[(l, d)]
            sc[(l, d)] = (_prescale_gates(w_ih, H),
                          _prescale_gates(w_hh, H),
                          _prescale_gates(b_ih + b_hh, H))

    # Layer-0 hoisted input projection: one (T*B, D) x (D, num_dir*4H) matmul
    # with both directions concatenated along N (fills the MXU width).
    w0 = jnp.concatenate([sc[(0, d)][0].T for d in range(num_dir)], axis=1)
    b0 = jnp.concatenate([sc[(0, d)][2] for d in range(num_dir)], axis=0)
    xp0_cat = jnp.dot(x, w0) + b0                              # (T, B, nd*4H)
    xp0 = jnp.stack([xp0_cat[..., d * G:(d + 1) * G] for d in range(num_dir)],
                    axis=0)                                    # (nd, T, B, 4H)

    # Recurrent weights: pre-transposed (H, 4H), gate-prescaled, bf16.
    whh = jnp.stack([jnp.stack([sc[(l, d)][1].T for d in range(num_dir)])
                     for l in range(n_layer)]).astype(jnp.bfloat16)

    h0 = jnp.broadcast_to(init_h.reshape(n_layer, num_dir, 1, H),
                          (n_layer, num_dir, B, H)).astype(jnp.float32)
    c0 = jnp.broadcast_to(init_c.reshape(n_layer, num_dir, 1, H),
                          (n_layer, num_dir, B, H)).astype(jnp.float32)

    args = [xp0, whh, h0, c0]
    if n_layer > 1:
        # Input-projection weights/biases for layers >= 1 (used in-kernel).
        wihn = jnp.stack([
            jnp.concatenate([sc[(l, d)][0].T for d in range(num_dir)], axis=1)
            for l in range(1, n_layer)]).astype(jnp.bfloat16)
        bn = jnp.stack([
            jnp.concatenate([sc[(l, d)][2] for d in range(num_dir)], axis=0)
            for l in range(1, n_layer)])[:, None, :]
        args += [wihn, bn]

    out = _fused_lstm_call(n_layer, num_dir, T, B, H)(*args)   # (T, B, nd*H)
    return jnp.transpose(out, (1, 0, 2))                       # batch-first


# ---------------------------------------------------------------------------
# Deterministic parameter construction (matches nn.LSTM parameter shapes)
# ---------------------------------------------------------------------------
def make_params(key, input_dim, n_hidden, n_layer, bidirectional):
    num_dir = 2 if bidirectional else 1
    bound = 1.0 / (n_hidden ** 0.5)
    params = {}
    keys = iter(jax.random.split(key, n_layer * num_dir * 4 + 2))
    for layer in range(n_layer):
        in_dim = input_dim if layer == 0 else n_hidden * num_dir
        for d in range(num_dir):
            w_ih = jax.random.uniform(next(keys), (4 * n_hidden, in_dim),
                                      jnp.float32, -bound, bound)
            w_hh = jax.random.uniform(next(keys), (4 * n_hidden, n_hidden),
                                      jnp.float32, -bound, bound)
            b_ih = jax.random.uniform(next(keys), (4 * n_hidden,),
                                      jnp.float32, -bound, bound)
            b_hh = jax.random.uniform(next(keys), (4 * n_hidden,),
                                      jnp.float32, -bound, bound)
            params[(layer, d)] = (w_ih, w_hh, b_ih, b_hh)
    init_h = jax.random.uniform(next(keys), (n_layer * num_dir, n_hidden),
                                jnp.float32, -INI, INI)
    init_c = jax.random.uniform(next(keys), (n_layer * num_dir, n_hidden),
                                jnp.float32, -INI, INI)
    return params, init_h, init_c


# ---------------------------------------------------------------------------
# Pure-JAX f32 reference (lax.scan) for correctness checking
# ---------------------------------------------------------------------------
def lstm_encoder_ref(x_btd, params, init_h, init_c, n_layer, bidirectional):
    num_dir = 2 if bidirectional else 1
    B, T, _ = x_btd.shape
    H = init_h.shape[-1]
    x = jnp.transpose(x_btd, (1, 0, 2))
    for layer in range(n_layer):
        outs = []
        for d in range(num_dir):
            idx = layer * num_dir + d
            w_ih, w_hh, b_ih, b_hh = params[(layer, d)]
            b = b_ih + b_hh
            h0 = jnp.broadcast_to(init_h[idx][None, :], (B, H))
            c0 = jnp.broadcast_to(init_c[idx][None, :], (B, H))
            xin = x if d == 0 else jnp.flip(x, axis=0)

            def step(carry, x_t, w_ih=w_ih, w_hh=w_hh, b=b):
                h, c = carry
                gates = x_t @ w_ih.T + h @ w_hh.T + b
                i, f, g, o = jnp.split(gates, 4, axis=-1)
                c2 = jax.nn.sigmoid(f) * c + jax.nn.sigmoid(i) * jnp.tanh(g)
                h2 = jax.nn.sigmoid(o) * jnp.tanh(c2)
                return (h2, c2), h2

            _, ys = jax.lax.scan(step, (h0, c0), xin)
            if d == 1:
                ys = jnp.flip(ys, axis=0)
            outs.append(ys)
        x = jnp.concatenate(outs, axis=-1) if num_dir == 2 else outs[0]
    return jnp.transpose(x, (1, 0, 2))


if __name__ == "__main__":
    # Small shapes implied by the forward: input [batch, max_num_sent, input_dim]
    B, T, D = 2, 8, 16
    n_hidden, n_layer, bidirectional = 32, 2, True

    key = jax.random.PRNGKey(0)
    k_x, k_p = jax.random.split(key)
    x = jax.random.normal(k_x, (B, T, D), dtype=jnp.float32)
    params, init_h, init_c = make_params(k_p, D, n_hidden, n_layer, bidirectional)

    out = lstm_encoder_forward(x, params, init_h, init_c, n_layer, bidirectional)
    out = jax.block_until_ready(out)
    expected_shape = (B, T, 2 * n_hidden)
    assert out.shape == expected_shape, (out.shape, expected_shape)

    ref = lstm_encoder_ref(x, params, init_h, init_c, n_layer, bidirectional)
    ref = jax.block_until_ready(ref)
    # Tolerance accounts for bf16 MXU operands (f32 accumulate) compounding
    # over T recurrent steps; real bugs produce O(0.1-1) errors.
    assert jnp.allclose(out, ref, atol=3e-2, rtol=3e-2), (
        float(jnp.max(jnp.abs(out - ref))))

    # Also exercise the unidirectional single-layer path (no scratch buffers).
    params1, ih1, ic1 = make_params(k_p, D, n_hidden, 1, False)
    out1 = jax.block_until_ready(
        lstm_encoder_forward(x, params1, ih1, ic1, 1, False))
    ref1 = lstm_encoder_ref(x, params1, ih1, ic1, 1, False)
    assert out1.shape == (B, T, n_hidden), out1.shape
    assert jnp.allclose(out1, ref1, atol=3e-2, rtol=3e-2), (
        float(jnp.max(jnp.abs(out1 - ref1))))

    print("KERNEL_OK")
</pallas_src>

<mosaic_0001>
module attributes {stable_mosaic.version = 11 : i64} {
  func.func @kernel(%arg0: memref<2x8x2x128xf32, #tpu.memory_space<vmem>>, %arg1: memref<2x2x32x128xbf16, #tpu.memory_space<vmem>>, %arg2: memref<2x2x2x32xf32, #tpu.memory_space<vmem>>, %arg3: memref<2x2x2x32xf32, #tpu.memory_space<vmem>>, %arg4: memref<1x64x256xbf16, #tpu.memory_space<vmem>>, %arg5: memref<1x1x256xf32, #tpu.memory_space<vmem>>, %arg6: memref<8x2x64xf32, #tpu.memory_space<vmem>>, %arg7: memref<8x2x64xf32, #tpu.memory_space<vmem>>, %arg8: memref<2x8x2x128xf32, #tpu.memory_space<vmem>>) attributes {dimension_semantics = [], scalar_prefetch = 0 : i64, scratch_operands = 2 : i64, tpu.core_type = #tpu.core_type<tc>} {
    %c0 = arith.constant 0 : index
    %c0_0 = arith.constant 0 : index
    %c0_1 = arith.constant 0 : index
    %c0_2 = arith.constant 0 : index
    %0 = vector.load %arg1[%c0, %c0_0, %c0_1, %c0_2] : memref<2x2x32x128xbf16, #tpu.memory_space<vmem>>, vector<1x1x32x128xbf16>
    %1 = vector.shape_cast %0 : vector<1x1x32x128xbf16> to vector<32x128xbf16>
    %c0_3 = arith.constant 0 : index
    %c1 = arith.constant 1 : index
    %c0_4 = arith.constant 0 : index
    %c0_5 = arith.constant 0 : index
    %2 = vector.load %arg1[%c0_3, %c1, %c0_4, %c0_5] : memref<2x2x32x128xbf16, #tpu.memory_space<vmem>>, vector<1x1x32x128xbf16>
    %3 = vector.shape_cast %2 : vector<1x1x32x128xbf16> to vector<32x128xbf16>
    %c0_6 = arith.constant 0 : index
    %c0_7 = arith.constant 0 : index
    %c0_8 = arith.constant 0 : index
    %c0_9 = arith.constant 0 : index
    %4 = vector.load %arg2[%c0_6, %c0_7, %c0_8, %c0_9] : memref<2x2x2x32xf32, #tpu.memory_space<vmem>>, vector<1x1x2x32xf32>
    %5 = vector.shape_cast %4 : vector<1x1x2x32xf32> to vector<2x32xf32>
    %c0_10 = arith.constant 0 : index
    %c0_11 = arith.constant 0 : index
    %c0_12 = arith.constant 0 : index
    %c0_13 = arith.constant 0 : index
    %6 = vector.load %arg3[%c0_10, %c0_11, %c0_12, %c0_13] : memref<2x2x2x32xf32, #tpu.memory_space<vmem>>, vector<1x1x2x32xf32>
    %7 = vector.shape_cast %6 : vector<1x1x2x32xf32> to vector<2x32xf32>
    %c0_14 = arith.constant 0 : index
    %c1_15 = arith.constant 1 : index
    %c0_16 = arith.constant 0 : index
    %c0_17 = arith.constant 0 : index
    %8 = vector.load %arg2[%c0_14, %c1_15, %c0_16, %c0_17] : memref<2x2x2x32xf32, #tpu.memory_space<vmem>>, vector<1x1x2x32xf32>
    %9 = vector.shape_cast %8 : vector<1x1x2x32xf32> to vector<2x32xf32>
    %c0_18 = arith.constant 0 : index
    %c1_19 = arith.constant 1 : index
    %c0_20 = arith.constant 0 : index
    %c0_21 = arith.constant 0 : index
    %10 = vector.load %arg3[%c0_18, %c1_19, %c0_20, %c0_21] : memref<2x2x2x32xf32, #tpu.memory_space<vmem>>, vector<1x1x2x32xf32>
    %11 = vector.shape_cast %10 : vector<1x1x2x32xf32> to vector<2x32xf32>
    %c0_i32 = arith.constant 0 : i32
    %c1_i32 = arith.constant 1 : i32
    %c0_i32_22 = arith.constant 0 : i32
    %c0_i32_23 = arith.constant 0 : i32
    %c0_i32_24 = arith.constant 0 : i32
    %c0_i32_25 = arith.constant 0 : i32
    %12 = tpu.memref_slice %arg0[%c0_i32, %c0_i32_23, %c0_i32_24, %c0_i32_25] : memref<2x8x2x128xf32, #tpu.memory_space<vmem>> -> memref<1x8x2x128xf32, #tpu.memory_space<vmem>>
    %13 = tpu.memref_squeeze %12 : memref<1x8x2x128xf32, #tpu.memory_space<vmem>> -> memref<8x2x128xf32, #tpu.memory_space<vmem>>
    %14 = arith.index_cast %c0_i32_22 : i32 to index
    %c0_26 = arith.constant 0 : index
    %c0_27 = arith.constant 0 : index
    %15 = vector.load %13[%14, %c0_26, %c0_27] : memref<8x2x128xf32, #tpu.memory_space<vmem>>, vector<1x2x128xf32>
    %16 = vector.shape_cast %15 : vector<1x2x128xf32> to vector<2x128xf32>
    %17 = arith.truncf %5 : vector<2x32xf32> to vector<2x32xbf16>
    %cst = arith.constant dense<0.000000e+00> : vector<2x128xf32>
    %18 = tpu.matmul %17, %1, %cst {dimension_numbers = #tpu.dot_dimension_numbers<[1], [0], [0], [1], [0, 0, 1, 1], [], []>} : vector<2x32xbf16>, vector<32x128xbf16>, vector<2x128xf32> -> vector<2x128xf32>
    %19 = arith.addf %16, %18 : vector<2x128xf32>
    %20 = math.tanh %19 : vector<2x128xf32>
    %21 = vector.extract_strided_slice %20 {offsets = [0, 0], sizes = [2, 32], strides = [1, 1]} : vector<2x128xf32> to vector<2x32xf32>
    %cst_28 = arith.constant 5.000000e-01 : f32
    %22 = vector.broadcast %cst_28 : f32 to vector<2x32xf32>
    %23 = arith.mulf %22, %21 : vector<2x32xf32>
    %cst_29 = arith.constant 5.000000e-01 : f32
    %24 = vector.broadcast %cst_29 : f32 to vector<2x32xf32>
    %25 = arith.addf %24, %23 : vector<2x32xf32>
    %26 = vector.extract_strided_slice %20 {offsets = [0, 32], sizes = [2, 32], strides = [1, 1]} : vector<2x128xf32> to vector<2x32xf32>
    %cst_30 = arith.constant 5.000000e-01 : f32
    %27 = vector.broadcast %cst_30 : f32 to vector<2x32xf32>
    %28 = arith.mulf %27, %26 : vector<2x32xf32>
    %cst_31 = arith.constant 5.000000e-01 : f32
    %29 = vector.broadcast %cst_31 : f32 to vector<2x32xf32>
    %30 = arith.addf %29, %28 : vector<2x32xf32>
    %31 = vector.extract_strided_slice %20 {offsets = [0, 64], sizes = [2, 32], strides = [1, 1]} : vector<2x128xf32> to vector<2x32xf32>
    %32 = vector.extract_strided_slice %20 {offsets = [0, 96], sizes = [2, 32], strides = [1, 1]} : vector<2x128xf32> to vector<2x32xf32>
    %cst_32 = arith.constant 5.000000e-01 : f32
    %33 = vector.broadcast %cst_32 : f32 to vector<2x32xf32>
    %34 = arith.mulf %33, %32 : vector<2x32xf32>
    %cst_33 = arith.constant 5.000000e-01 : f32
    %35 = vector.broadcast %cst_33 : f32 to vector<2x32xf32>
    %36 = arith.addf %35, %34 : vector<2x32xf32>
    %37 = arith.mulf %30, %7 : vector<2x32xf32>
    %38 = arith.mulf %25, %31 : vector<2x32xf32>
    %39 = arith.addf %37, %38 : vector<2x32xf32>
    %40 = math.tanh %39 : vector<2x32xf32>
    %41 = arith.mulf %36, %40 : vector<2x32xf32>
    %42 = arith.index_cast %c0_i32_22 : i32 to index
    %c0_34 = arith.constant 0 : index
    %c0_35 = arith.constant 0 : index
    %43 = vector.load %arg7[%42, %c0_34, %c0_35] : memref<8x2x64xf32, #tpu.memory_space<vmem>>, vector<1x2x32xf32>
    %44 = vector.shape_cast %43 : vector<1x2x32xf32> to vector<2x32xf32>
    %45 = vector.shape_cast %41 : vector<2x32xf32> to vector<1x2x32xf32>
    tpu.vector_store %arg7[%42, %c0_34, %c0_35], %45 {strides = array<i32>} : memref<8x2x64xf32, #tpu.memory_space<vmem>>, vector<1x2x32xf32>,
    %c7_i32 = arith.constant 7 : i32
    %46 = arith.subi %c7_i32, %c0_i32_22 : i32
    %c0_i32_36 = arith.constant 0 : i32
    %c0_i32_37 = arith.constant 0 : i32
    %c0_i32_38 = arith.constant 0 : i32
    %47 = tpu.memref_slice %arg0[%c1_i32, %c0_i32_36, %c0_i32_37, %c0_i32_38] : memref<2x8x2x128xf32, #tpu.memory_space<vmem>> -> memref<1x8x2x128xf32, #tpu.memory_space<vmem>>
    %48 = tpu.memref_squeeze %47 : memref<1x8x2x128xf32, #tpu.memory_space<vmem>> -> memref<8x2x128xf32, #tpu.memory_space<vmem>>
    %49 = arith.index_cast %46 : i32 to index
    %c0_39 = arith.constant 0 : index
    %c0_40 = arith.constant 0 : index
    %50 = vector.load %48[%49, %c0_39, %c0_40] : memref<8x2x128xf32, #tpu.memory_space<vmem>>, vector<1x2x128xf32>
    %51 = vector.shape_cast %50 : vector<1x2x128xf32> to vector<2x128xf32>
    %52 = arith.truncf %9 : vector<2x32xf32> to vector<2x32xbf16>
    %cst_41 = arith.constant dense<0.000000e+00> : vector<2x128xf32>
    %53 = tpu.matmul %52, %3, %cst_41 {dimension_numbers = #tpu.dot_dimension_numbers<[1], [0], [0], [1], [0, 0, 1, 1], [], []>} : vector<2x32xbf16>, vector<32x128xbf16>, vector<2x128xf32> -> vector<2x128xf32>
    %54 = arith.addf %51, %53 : vector<2x128xf32>
    %55 = math.tanh %54 : vector<2x128xf32>
    %56 = vector.extract_strided_slice %55 {offsets = [0, 0], sizes = [2, 32], strides = [1, 1]} : vector<2x128xf32> to vector<2x32xf32>
    %cst_42 = arith.constant 5.000000e-01 : f32
    %57 = vector.broadcast %cst_42 : f32 to vector<2x32xf32>
    %58 = arith.mulf %57, %56 : vector<2x32xf32>
    %cst_43 = arith.constant 5.000000e-01 : f32
    %59 = vector.broadcast %cst_43 : f32 to vector<2x32xf32>
    %60 = arith.addf %59, %58 : vector<2x32xf32>
    %61 = vector.extract_strided_slice %55 {offsets = [0, 32], sizes = [2, 32], strides = [1, 1]} : vector<2x128xf32> to vector<2x32xf32>
    %cst_44 = arith.constant 5.000000e-01 : f32
    %62 = vector.broadcast %cst_44 : f32 to vector<2x32xf32>
    %63 = arith.mulf %62, %61 : vector<2x32xf32>
    %cst_45 = arith.constant 5.000000e-01 : f32
    %64 = vector.broadcast %cst_45 : f32 to vector<2x32xf32>
    %65 = arith.addf %64, %63 : vector<2x32xf32>
    %66 = vector.extract_strided_slice %55 {offsets = [0, 64], sizes = [2, 32], strides = [1, 1]} : vector<2x128xf32> to vector<2x32xf32>
    %67 = vector.extract_strided_slice %55 {offsets = [0, 96], sizes = [2, 32], strides = [1, 1]} : vector<2x128xf32> to vector<2x32xf32>
    %cst_46 = arith.constant 5.000000e-01 : f32
    %68 = vector.broadcast %cst_46 : f32 to vector<2x32xf32>
    %69 = arith.mulf %68, %67 : vector<2x32xf32>
    %cst_47 = arith.constant 5.000000e-01 : f32
    %70 = vector.broadcast %cst_47 : f32 to vector<2x32xf32>
    %71 = arith.addf %70, %69 : vector<2x32xf32>
    %72 = arith.mulf %65, %11 : vector<2x32xf32>
    %73 = arith.mulf %60, %66 : vector<2x32xf32>
    %74 = arith.addf %72, %73 : vector<2x32xf32>
    %75 = math.tanh %74 : vector<2x32xf32>
    %76 = arith.mulf %71, %75 : vector<2x32xf32>
    %77 = arith.index_cast %46 : i32 to index
    %c0_48 = arith.constant 0 : index
    %c32 = arith.constant 32 : index
    %78 = vector.load %arg7[%77, %c0_48, %c32] : memref<8x2x64xf32, #tpu.memory_space<vmem>>, vector<1x2x32xf32>
    %79 = vector.shape_cast %78 : vector<1x2x32xf32> to vector<2x32xf32>
    %80 = vector.shape_cast %76 : vector<2x32xf32> to vector<1x2x32xf32>
    tpu.vector_store %arg7[%77, %c0_48, %c32], %80 {strides = array<i32>} : memref<8x2x64xf32, #tpu.memory_space<vmem>>, vector<1x2x32xf32>,
    %c1_i32_49 = arith.constant 1 : i32
    %c0_i32_50 = arith.constant 0 : i32
    %c0_i32_51 = arith.constant 0 : i32
    %c0_i32_52 = arith.constant 0 : i32
    %81 = tpu.memref_slice %arg0[%c0_i32, %c0_i32_50, %c0_i32_51, %c0_i32_52] : memref<2x8x2x128xf32, #tpu.memory_space<vmem>> -> memref<1x8x2x128xf32, #tpu.memory_space<vmem>>
    %82 = tpu.memref_squeeze %81 : memref<1x8x2x128xf32, #tpu.memory_space<vmem>> -> memref<8x2x128xf32, #tpu.memory_space<vmem>>
    %83 = arith.index_cast %c1_i32_49 : i32 to index
    %c0_53 = arith.constant 0 : index
    %c0_54 = arith.constant 0 : index
    %84 = vector.load %82[%83, %c0_53, %c0_54] : memref<8x2x128xf32, #tpu.memory_space<vmem>>, vector<1x2x128xf32>
    %85 = vector.shape_cast %84 : vector<1x2x128xf32> to vector<2x128xf32>
    %86 = arith.truncf %41 : vector<2x32xf32> to vector<2x32xbf16>
    %cst_55 = arith.constant dense<0.000000e+00> : vector<2x128xf32>
    %87 = tpu.matmul %86, %1, %cst_55 {dimension_numbers = #tpu.dot_dimension_numbers<[1], [0], [0], [1], [0, 0, 1, 1], [], []>} : vector<2x32xbf16>, vector<32x128xbf16>, vector<2x128xf32> -> vector<2x128xf32>
    %88 = arith.addf %85, %87 : vector<2x128xf32>
    %89 = math.tanh %88 : vector<2x128xf32>
    %90 = vector.extract_strided_slice %89 {offsets = [0, 0], sizes = [2, 32], strides = [1, 1]} : vector<2x128xf32> to vector<2x32xf32>
    %cst_56 = arith.constant 5.000000e-01 : f32
    %91 = vector.broadcast %cst_56 : f32 to vector<2x32xf32>
    %92 = arith.mulf %91, %90 : vector<2x32xf32>
    %cst_57 = arith.constant 5.000000e-01 : f32
    %93 = vector.broadcast %cst_57 : f32 to vector<2x32xf32>
    %94 = arith.addf %93, %92 : vector<2x32xf32>
    %95 = vector.extract_strided_slice %89 {offsets = [0, 32], sizes = [2, 32], strides = [1, 1]} : vector<2x128xf32> to vector<2x32xf32>
    %cst_58 = arith.constant 5.000000e-01 : f32
    %96 = vector.broadcast %cst_58 : f32 to vector<2x32xf32>
    %97 = arith.mulf %96, %95 : vector<2x32xf32>
    %cst_59 = arith.constant 5.000000e-01 : f32
    %98 = vector.broadcast %cst_59 : f32 to vector<2x32xf32>
    %99 = arith.addf %98, %97 : vector<2x32xf32>
    %100 = vector.extract_strided_slice %89 {offsets = [0, 64], sizes = [2, 32], strides = [1, 1]} : vector<2x128xf32> to vector<2x32xf32>
    %101 = vector.extract_strided_slice %89 {offsets = [0, 96], sizes = [2, 32], strides = [1, 1]} : vector<2x128xf32> to vector<2x32xf32>
    %cst_60 = arith.constant 5.000000e-01 : f32
    %102 = vector.broadcast %cst_60 : f32 to vector<2x32xf32>
    %103 = arith.mulf %102, %101 : vector<2x32xf32>
    %cst_61 = arith.constant 5.000000e-01 : f32
    %104 = vector.broadcast %cst_61 : f32 to vector<2x32xf32>
    %105 = arith.addf %104, %103 : vector<2x32xf32>
    %106 = arith.mulf %99, %39 : vector<2x32xf32>
    %107 = arith.mulf %94, %100 : vector<2x32xf32>
    %108 = arith.addf %106, %107 : vector<2x32xf32>
    %109 = math.tanh %108 : vector<2x32xf32>
    %110 = arith.mulf %105, %109 : vector<2x32xf32>
    %111 = arith.index_cast %c1_i32_49 : i32 to index
    %c0_62 = arith.constant 0 : index
    %c0_63 = arith.constant 0 : index
    %112 = vector.load %arg7[%111, %c0_62, %c0_63] : memref<8x2x64xf32, #tpu.memory_space<vmem>>, vector<1x2x32xf32>
    %113 = vector.shape_cast %112 : vector<1x2x32xf32> to vector<2x32xf32>
    %114 = vector.shape_cast %110 : vector<2x32xf32> to vector<1x2x32xf32>
    tpu.vector_store %arg7[%111, %c0_62, %c0_63], %114 {strides = array<i32>} : memref<8x2x64xf32, #tpu.memory_space<vmem>>, vector<1x2x32xf32>,
    %c7_i32_64 = arith.constant 7 : i32
    %115 = arith.subi %c7_i32_64, %c1_i32_49 : i32
    %c0_i32_65 = arith.constant 0 : i32
    %c0_i32_66 = arith.constant 0 : i32
    %c0_i32_67 = arith.constant 0 : i32
    %116 = tpu.memref_slice %arg0[%c1_i32, %c0_i32_65, %c0_i32_66, %c0_i32_67] : memref<2x8x2x128xf32, #tpu.memory_space<vmem>> -> memref<1x8x2x128xf32, #tpu.memory_space<vmem>>
    %117 = tpu.memref_squeeze %116 : memref<1x8x2x128xf32, #tpu.memory_space<vmem>> -> memref<8x2x128xf32, #tpu.memory_space<vmem>>
    %118 = arith.index_cast %115 : i32 to index
    %c0_68 = arith.constant 0 : index
    %c0_69 = arith.constant 0 : index
    %119 = vector.load %117[%118, %c0_68, %c0_69] : memref<8x2x128xf32, #tpu.memory_space<vmem>>, vector<1x2x128xf32>
    %120 = vector.shape_cast %119 : vector<1x2x128xf32> to vector<2x128xf32>
    %121 = arith.truncf %76 : vector<2x32xf32> to vector<2x32xbf16>
    %cst_70 = arith.constant dense<0.000000e+00> : vector<2x128xf32>
    %122 = tpu.matmul %121, %3, %cst_70 {dimension_numbers = #tpu.dot_dimension_numbers<[1], [0], [0], [1], [0, 0, 1, 1], [], []>} : vector<2x32xbf16>, vector<32x128xbf16>, vector<2x128xf32> -> vector<2x128xf32>
    %123 = arith.addf %120, %122 : vector<2x128xf32>
    %124 = math.tanh %123 : vector<2x128xf32>
    %125 = vector.extract_strided_slice %124 {offsets = [0, 0], sizes = [2, 32], strides = [1, 1]} : vector<2x128xf32> to vector<2x32xf32>
    %cst_71 = arith.constant 5.000000e-01 : f32
    %126 = vector.broadcast %cst_71 : f32 to vector<2x32xf32>
    %127 = arith.mulf %126, %125 : vector<2x32xf32>
    %cst_72 = arith.constant 5.000000e-01 : f32
    %128 = vector.broadcast %cst_72 : f32 to vector<2x32xf32>
    %129 = arith.addf %128, %127 : vector<2x32xf32>
    %130 = vector.extract_strided_slice %124 {offsets = [0, 32], sizes = [2, 32], strides = [1, 1]} : vector<2x128xf32> to vector<2x32xf32>
    %cst_73 = arith.constant 5.000000e-01 : f32
    %131 = vector.broadcast %cst_73 : f32 to vector<2x32xf32>
    %132 = arith.mulf %131, %130 : vector<2x32xf32>
    %cst_74 = arith.constant 5.000000e-01 : f32
    %133 = vector.broadcast %cst_74 : f32 to vector<2x32xf32>
    %134 = arith.addf %133, %132 : vector<2x32xf32>
    %135 = vector.extract_strided_slice %124 {offsets = [0, 64], sizes = [2, 32], strides = [1, 1]} : vector<2x128xf32> to vector<2x32xf32>
    %136 = vector.extract_strided_slice %124 {offsets = [0, 96], sizes = [2, 32], strides = [1, 1]} : vector<2x128xf32> to vector<2x32xf32>
    %cst_75 = arith.constant 5.000000e-01 : f32
    %137 = vector.broadcast %cst_75 : f32 to vector<2x32xf32>
    %138 = arith.mulf %137, %136 : vector<2x32xf32>
    %cst_76 = arith.constant 5.000000e-01 : f32
    %139 = vector.broadcast %cst_76 : f32 to vector<2x32xf32>
    %140 = arith.addf %139, %138 : vector<2x32xf32>
    %141 = arith.mulf %134, %74 : vector<2x32xf32>
    %142 = arith.mulf %129, %135 : vector<2x32xf32>
    %143 = arith.addf %141, %142 : vector<2x32xf32>
    %144 = math.tanh %143 : vector<2x32xf32>
    %145 = arith.mulf %140, %144 : vector<2x32xf32>
    %146 = arith.index_cast %115 : i32 to index
    %c0_77 = arith.constant 0 : index
    %c32_78 = arith.constant 32 : index
    %147 = vector.load %arg7[%146, %c0_77, %c32_78] : memref<8x2x64xf32, #tpu.memory_space<vmem>>, vector<1x2x32xf32>
    %148 = vector.shape_cast %147 : vector<1x2x32xf32> to vector<2x32xf32>
    %149 = vector.shape_cast %145 : vector<2x32xf32> to vector<1x2x32xf32>
    tpu.vector_store %arg7[%146, %c0_77, %c32_78], %149 {strides = array<i32>} : memref<8x2x64xf32, #tpu.memory_space<vmem>>, vector<1x2x32xf32>,
    %c2_i32 = arith.constant 2 : i32
    %c0_i32_79 = arith.constant 0 : i32
    %c0_i32_80 = arith.constant 0 : i32
    %c0_i32_81 = arith.constant 0 : i32
    %150 = tpu.memref_slice %arg0[%c0_i32, %c0_i32_79, %c0_i32_80, %c0_i32_81] : memref<2x8x2x128xf32, #tpu.memory_space<vmem>> -> memref<1x8x2x128xf32, #tpu.memory_space<vmem>>
    %151 = tpu.memref_squeeze %150 : memref<1x8x2x128xf32, #tpu.memory_space<vmem>> -> memref<8x2x128xf32, #tpu.memory_space<vmem>>
    %152 = arith.index_cast %c2_i32 : i32 to index
    %c0_82 = arith.constant 0 : index
    %c0_83 = arith.constant 0 : index
    %153 = vector.load %151[%152, %c0_82, %c0_83] : memref<8x2x128xf32, #tpu.memory_space<vmem>>, vector<1x2x128xf32>
    %154 = vector.shape_cast %153 : vector<1x2x128xf32> to vector<2x128xf32>
    %155 = arith.truncf %110 : vector<2x32xf32> to vector<2x32xbf16>
    %cst_84 = arith.constant dense<0.000000e+00> : vector<2x128xf32>
    %156 = tpu.matmul %155, %1, %cst_84 {dimension_numbers = #tpu.dot_dimension_numbers<[1], [0], [0], [1], [0, 0, 1, 1], [], []>} : vector<2x32xbf16>, vector<32x128xbf16>, vector<2x128xf32> -> vector<2x128xf32>
    %157 = arith.addf %154, %156 : vector<2x128xf32>
    %158 = math.tanh %157 : vector<2x128xf32>
    %159 = vector.extract_strided_slice %158 {offsets = [0, 0], sizes = [2, 32], strides = [1, 1]} : vector<2x128xf32> to vector<2x32xf32>
    %cst_85 = arith.constant 5.000000e-01 : f32
    %160 = vector.broadcast %cst_85 : f32 to vector<2x32xf32>
    %161 = arith.mulf %160, %159 : vector<2x32xf32>
    %cst_86 = arith.constant 5.000000e-01 : f32
    %162 = vector.broadcast %cst_86 : f32 to vector<2x32xf32>
    %163 = arith.addf %162, %161 : vector<2x32xf32>
    %164 = vector.extract_strided_slice %158 {offsets = [0, 32], sizes = [2, 32], strides = [1, 1]} : vector<2x128xf32> to vector<2x32xf32>
    %cst_87 = arith.constant 5.000000e-01 : f32
    %165 = vector.broadcast %cst_87 : f32 to vector<2x32xf32>
    %166 = arith.mulf %165, %164 : vector<2x32xf32>
    %cst_88 = arith.constant 5.000000e-01 : f32
    %167 = vector.broadcast %cst_88 : f32 to vector<2x32xf32>
    %168 = arith.addf %167, %166 : vector<2x32xf32>
    %169 = vector.extract_strided_slice %158 {offsets = [0, 64], sizes = [2, 32], strides = [1, 1]} : vector<2x128xf32> to vector<2x32xf32>
    %170 = vector.extract_strided_slice %158 {offsets = [0, 96], sizes = [2, 32], strides = [1, 1]} : vector<2x128xf32> to vector<2x32xf32>
    %cst_89 = arith.constant 5.000000e-01 : f32
    %171 = vector.broadcast %cst_89 : f32 to vector<2x32xf32>
    %172 = arith.mulf %171, %170 : vector<2x32xf32>
    %cst_90 = arith.constant 5.000000e-01 : f32
    %173 = vector.broadcast %cst_90 : f32 to vector<2x32xf32>
    %174 = arith.addf %173, %172 : vector<2x32xf32>
    %175 = arith.mulf %168, %108 : vector<2x32xf32>
    %176 = arith.mulf %163, %169 : vector<2x32xf32>
    %177 = arith.addf %175, %176 : vector<2x32xf32>
    %178 = math.tanh %177 : vector<2x32xf32>
    %179 = arith.mulf %174, %178 : vector<2x32xf32>
    %180 = arith.index_cast %c2_i32 : i32 to index
    %c0_91 = arith.constant 0 : index
    %c0_92 = arith.constant 0 : index
    %181 = vector.load %arg7[%180, %c0_91, %c0_92] : memref<8x2x64xf32, #tpu.memory_space<vmem>>, vector<1x2x32xf32>
    %182 = vector.shape_cast %181 : vector<1x2x32xf32> to vector<2x32xf32>
    %183 = vector.shape_cast %179 : vector<2x32xf32> to vector<1x2x32xf32>
    tpu.vector_store %arg7[%180, %c0_91, %c0_92], %183 {strides = array<i32>} : memref<8x2x64xf32, #tpu.memory_space<vmem>>, vector<1x2x32xf32>,
    %c7_i32_93 = arith.constant 7 : i32
    %184 = arith.subi %c7_i32_93, %c2_i32 : i32
    %c0_i32_94 = arith.constant 0 : i32
    %c0_i32_95 = arith.constant 0 : i32
    %c0_i32_96 = arith.constant 0 : i32
    %185 = tpu.memref_slice %arg0[%c1_i32, %c0_i32_94, %c0_i32_95, %c0_i32_96] : memref<2x8x2x128xf32, #tpu.memory_space<vmem>> -> memref<1x8x2x128xf32, #tpu.memory_space<vmem>>
    %186 = tpu.memref_squeeze %185 : memref<1x8x2x128xf32, #tpu.memory_space<vmem>> -> memref<8x2x128xf32, #tpu.memory_space<vmem>>
    %187 = arith.index_cast %184 : i32 to index
    %c0_97 = arith.constant 0 : index
    %c0_98 = arith.constant 0 : index
    %188 = vector.load %186[%187, %c0_97, %c0_98] : memref<8x2x128xf32, #tpu.memory_space<vmem>>, vector<1x2x128xf32>
    %189 = vector.shape_cast %188 : vector<1x2x128xf32> to vector<2x128xf32>
    %190 = arith.truncf %145 : vector<2x32xf32> to vector<2x32xbf16>
    %cst_99 = arith.constant dense<0.000000e+00> : vector<2x128xf32>
    %191 = tpu.matmul %190, %3, %cst_99 {dimension_numbers = #tpu.dot_dimension_numbers<[1], [0], [0], [1], [0, 0, 1, 1], [], []>} : vector<2x32xbf16>, vector<32x128xbf16>, vector<2x128xf32> -> vector<2x128xf32>
    %192 = arith.addf %189, %191 : vector<2x128xf32>
    %193 = math.tanh %192 : vector<2x128xf32>
    %194 = vector.extract_strided_slice %193 {offsets = [0, 0], sizes = [2, 32], strides = [1, 1]} : vector<2x128xf32> to vector<2x32xf32>
    %cst_100 = arith.constant 5.000000e-01 : f32
    %195 = vector.broadcast %cst_100 : f32 to vector<2x32xf32>
    %196 = arith.mulf %195, %194 : vector<2x32xf32>
    %cst_101 = arith.constant 5.000000e-01 : f32
    %197 = vector.broadcast %cst_101 : f32 to vector<2x32xf32>
    %198 = arith.addf %197, %196 : vector<2x32xf32>
    %199 = vector.extract_strided_slice %193 {offsets = [0, 32], sizes = [2, 32], strides = [1, 1]} : vector<2x128xf32> to vector<2x32xf32>
    %cst_102 = arith.constant 5.000000e-01 : f32
    %200 = vector.broadcast %cst_102 : f32 to vector<2x32xf32>
    %201 = arith.mulf %200, %199 : vector<2x32xf32>
    %cst_103 = arith.constant 5.000000e-01 : f32
    %202 = vector.broadcast %cst_103 : f32 to vector<2x32xf32>
    %203 = arith.addf %202, %201 : vector<2x32xf32>
    %204 = vector.extract_strided_slice %193 {offsets = [0, 64], sizes = [2, 32], strides = [1, 1]} : vector<2x128xf32> to vector<2x32xf32>
    %205 = vector.extract_strided_slice %193 {offsets = [0, 96], sizes = [2, 32], strides = [1, 1]} : vector<2x128xf32> to vector<2x32xf32>
    %cst_104 = arith.constant 5.000000e-01 : f32
    %206 = vector.broadcast %cst_104 : f32 to vector<2x32xf32>
    %207 = arith.mulf %206, %205 : vector<2x32xf32>
    %cst_105 = arith.constant 5.000000e-01 : f32
    %208 = vector.broadcast %cst_105 : f32 to vector<2x32xf32>
    %209 = arith.addf %208, %207 : vector<2x32xf32>
    %210 = arith.mulf %203, %143 : vector<2x32xf32>
    %211 = arith.mulf %198, %204 : vector<2x32xf32>
    %212 = arith.addf %210, %211 : vector<2x32xf32>
    %213 = math.tanh %212 : vector<2x32xf32>
    %214 = arith.mulf %209, %213 : vector<2x32xf32>
    %215 = arith.index_cast %184 : i32 to index
    %c0_106 = arith.constant 0 : index
    %c32_107 = arith.constant 32 : index
    %216 = vector.load %arg7[%215, %c0_106, %c32_107] : memref<8x2x64xf32, #tpu.memory_space<vmem>>, vector<1x2x32xf32>
    %217 = vector.shape_cast %216 : vector<1x2x32xf32> to vector<2x32xf32>
    %218 = vector.shape_cast %214 : vector<2x32xf32> to vector<1x2x32xf32>
    tpu.vector_store %arg7[%215, %c0_106, %c32_107], %218 {strides = array<i32>} : memref<8x2x64xf32, #tpu.memory_space<vmem>>, vector<1x2x32xf32>,
    %c3_i32 = arith.constant 3 : i32
    %c0_i32_108 = arith.constant 0 : i32
    %c0_i32_109 = arith.constant 0 : i32
    %c0_i32_110 = arith.constant 0 : i32
    %219 = tpu.memref_slice %arg0[%c0_i32, %c0_i32_108, %c0_i32_109, %c0_i32_110] : memref<2x8x2x128xf32, #tpu.memory_space<vmem>> -> memref<1x8x2x128xf32, #tpu.memory_space<vmem>>
    %220 = tpu.memref_squeeze %219 : memref<1x8x2x128xf32, #tpu.memory_space<vmem>> -> memref<8x2x128xf32, #tpu.memory_space<vmem>>
    %221 = arith.index_cast %c3_i32 : i32 to index
    %c0_111 = arith.constant 0 : index
    %c0_112 = arith.constant 0 : index
    %222 = vector.load %220[%221, %c0_111, %c0_112] : memref<8x2x128xf32, #tpu.memory_space<vmem>>, vector<1x2x128xf32>
    %223 = vector.shape_cast %222 : vector<1x2x128xf32> to vector<2x128xf32>
    %224 = arith.truncf %179 : vector<2x32xf32> to vector<2x32xbf16>
    %cst_113 = arith.constant dense<0.000000e+00> : vector<2x128xf32>
    %225 = tpu.matmul %224, %1, %cst_113 {dimension_numbers = #tpu.dot_dimension_numbers<[1], [0], [0], [1], [0, 0, 1, 1], [], []>} : vector<2x32xbf16>, vector<32x128xbf16>, vector<2x128xf32> -> vector<2x128xf32>
    %226 = arith.addf %223, %225 : vector<2x128xf32>
    %227 = math.tanh %226 : vector<2x128xf32>
    %228 = vector.extract_strided_slice %227 {offsets = [0, 0], sizes = [2, 32], strides = [1, 1]} : vector<2x128xf32> to vector<2x32xf32>
    %cst_114 = arith.constant 5.000000e-01 : f32
    %229 = vector.broadcast %cst_114 : f32 to vector<2x32xf32>
    %230 = arith.mulf %229, %228 : vector<2x32xf32>
    %cst_115 = arith.constant 5.000000e-01 : f32
    %231 = vector.broadcast %cst_115 : f32 to vector<2x32xf32>
    %232 = arith.addf %231, %230 : vector<2x32xf32>
    %233 = vector.extract_strided_slice %227 {offsets = [0, 32], sizes = [2, 32], strides = [1, 1]} : vector<2x128xf32> to vector<2x32xf32>
    %cst_116 = arith.constant 5.000000e-01 : f32
    %234 = vector.broadcast %cst_116 : f32 to vector<2x32xf32>
    %235 = arith.mulf %234, %233 : vector<2x32xf32>
    %cst_117 = arith.constant 5.000000e-01 : f32
    %236 = vector.broadcast %cst_117 : f32 to vector<2x32xf32>
    %237 = arith.addf %236, %235 : vector<2x32xf32>
    %238 = vector.extract_strided_slice %227 {offsets = [0, 64], sizes = [2, 32], strides = [1, 1]} : vector<2x128xf32> to vector<2x32xf32>
    %239 = vector.extract_strided_slice %227 {offsets = [0, 96], sizes = [2, 32], strides = [1, 1]} : vector<2x128xf32> to vector<2x32xf32>
    %cst_118 = arith.constant 5.000000e-01 : f32
    %240 = vector.broadcast %cst_118 : f32 to vector<2x32xf32>
    %241 = arith.mulf %240, %239 : vector<2x32xf32>
    %cst_119 = arith.constant 5.000000e-01 : f32
    %242 = vector.broadcast %cst_119 : f32 to vector<2x32xf32>
    %243 = arith.addf %242, %241 : vector<2x32xf32>
    %244 = arith.mulf %237, %177 : vector<2x32xf32>
    %245 = arith.mulf %232, %238 : vector<2x32xf32>
    %246 = arith.addf %244, %245 : vector<2x32xf32>
    %247 = math.tanh %246 : vector<2x32xf32>
    %248 = arith.mulf %243, %247 : vector<2x32xf32>
    %249 = arith.index_cast %c3_i32 : i32 to index
    %c0_120 = arith.constant 0 : index
    %c0_121 = arith.constant 0 : index
    %250 = vector.load %arg7[%249, %c0_120, %c0_121] : memref<8x2x64xf32, #tpu.memory_space<vmem>>, vector<1x2x32xf32>
    %251 = vector.shape_cast %250 : vector<1x2x32xf32> to vector<2x32xf32>
    %252 = vector.shape_cast %248 : vector<2x32xf32> to vector<1x2x32xf32>
    tpu.vector_store %arg7[%249, %c0_120, %c0_121], %252 {strides = array<i32>} : memref<8x2x64xf32, #tpu.memory_space<vmem>>, vector<1x2x32xf32>,
    %c7_i32_122 = arith.constant 7 : i32
    %253 = arith.subi %c7_i32_122, %c3_i32 : i32
    %c0_i32_123 = arith.constant 0 : i32
    %c0_i32_124 = arith.constant 0 : i32
    %c0_i32_125 = arith.constant 0 : i32
    %254 = tpu.memref_slice %arg0[%c1_i32, %c0_i32_123, %c0_i32_124, %c0_i32_125] : memref<2x8x2x128xf32, #tpu.memory_space<vmem>> -> memref<1x8x2x128xf32, #tpu.memory_space<vmem>>
    %255 = tpu.memref_squeeze %254 : memref<1x8x2x128xf32, #tpu.memory_space<vmem>> -> memref<8x2x128xf32, #tpu.memory_space<vmem>>
    %256 = arith.index_cast %253 : i32 to index
    %c0_126 = arith.constant 0 : index
    %c0_127 = arith.constant 0 : index
    %257 = vector.load %255[%256, %c0_126, %c0_127] : memref<8x2x128xf32, #tpu.memory_space<vmem>>, vector<1x2x128xf32>
    %258 = vector.shape_cast %257 : vector<1x2x128xf32> to vector<2x128xf32>
    %259 = arith.truncf %214 : vector<2x32xf32> to vector<2x32xbf16>
    %cst_128 = arith.constant dense<0.000000e+00> : vector<2x128xf32>
    %260 = tpu.matmul %259, %3, %cst_128 {dimension_numbers = #tpu.dot_dimension_numbers<[1], [0], [0], [1], [0, 0, 1, 1], [], []>} : vector<2x32xbf16>, vector<32x128xbf16>, vector<2x128xf32> -> vector<2x128xf32>
    %261 = arith.addf %258, %260 : vector<2x128xf32>
    %262 = math.tanh %261 : vector<2x128xf32>
    %263 = vector.extract_strided_slice %262 {offsets = [0, 0], sizes = [2, 32], strides = [1, 1]} : vector<2x128xf32> to vector<2x32xf32>
    %cst_129 = arith.constant 5.000000e-01 : f32
    %264 = vector.broadcast %cst_129 : f32 to vector<2x32xf32>
    %265 = arith.mulf %264, %263 : vector<2x32xf32>
    %cst_130 = arith.constant 5.000000e-01 : f32
    %266 = vector.broadcast %cst_130 : f32 to vector<2x32xf32>
    %267 = arith.addf %266, %265 : vector<2x32xf32>
    %268 = vector.extract_strided_slice %262 {offsets = [0, 32], sizes = [2, 32], strides = [1, 1]} : vector<2x128xf32> to vector<2x32xf32>
    %cst_131 = arith.constant 5.000000e-01 : f32
    %269 = vector.broadcast %cst_131 : f32 to vector<2x32xf32>
    %270 = arith.mulf %269, %268 : vector<2x32xf32>
    %cst_132 = arith.constant 5.000000e-01 : f32
    %271 = vector.broadcast %cst_132 : f32 to vector<2x32xf32>
    %272 = arith.addf %271, %270 : vector<2x32xf32>
    %273 = vector.extract_strided_slice %262 {offsets = [0, 64], sizes = [2, 32], strides = [1, 1]} : vector<2x128xf32> to vector<2x32xf32>
    %274 = vector.extract_strided_slice %262 {offsets = [0, 96], sizes = [2, 32], strides = [1, 1]} : vector<2x128xf32> to vector<2x32xf32>
    %cst_133 = arith.constant 5.000000e-01 : f32
    %275 = vector.broadcast %cst_133 : f32 to vector<2x32xf32>
    %276 = arith.mulf %275, %274 : vector<2x32xf32>
    %cst_134 = arith.constant 5.000000e-01 : f32
    %277 = vector.broadcast %cst_134 : f32 to vector<2x32xf32>
    %278 = arith.addf %277, %276 : vector<2x32xf32>
    %279 = arith.mulf %272, %212 : vector<2x32xf32>
    %280 = arith.mulf %267, %273 : vector<2x32xf32>
    %281 = arith.addf %279, %280 : vector<2x32xf32>
    %282 = math.tanh %281 : vector<2x32xf32>
    %283 = arith.mulf %278, %282 : vector<2x32xf32>
    %284 = arith.index_cast %253 : i32 to index
    %c0_135 = arith.constant 0 : index
    %c32_136 = arith.constant 32 : index
    %285 = vector.load %arg7[%284, %c0_135, %c32_136] : memref<8x2x64xf32, #tpu.memory_space<vmem>>, vector<1x2x32xf32>
    %286 = vector.shape_cast %285 : vector<1x2x32xf32> to vector<2x32xf32>
    %287 = vector.shape_cast %283 : vector<2x32xf32> to vector<1x2x32xf32>
    tpu.vector_store %arg7[%284, %c0_135, %c32_136], %287 {strides = array<i32>} : memref<8x2x64xf32, #tpu.memory_space<vmem>>, vector<1x2x32xf32>,
    %c4_i32 = arith.constant 4 : i32
    %c0_i32_137 = arith.constant 0 : i32
    %c0_i32_138 = arith.constant 0 : i32
    %c0_i32_139 = arith.constant 0 : i32
    %288 = tpu.memref_slice %arg0[%c0_i32, %c0_i32_137, %c0_i32_138, %c0_i32_139] : memref<2x8x2x128xf32, #tpu.memory_space<vmem>> -> memref<1x8x2x128xf32, #tpu.memory_space<vmem>>
    %289 = tpu.memref_squeeze %288 : memref<1x8x2x128xf32, #tpu.memory_space<vmem>> -> memref<8x2x128xf32, #tpu.memory_space<vmem>>
    %290 = arith.index_cast %c4_i32 : i32 to index
    %c0_140 = arith.constant 0 : index
    %c0_141 = arith.constant 0 : index
    %291 = vector.load %289[%290, %c0_140, %c0_141] : memref<8x2x128xf32, #tpu.memory_space<vmem>>, vector<1x2x128xf32>
    %292 = vector.shape_cast %291 : vector<1x2x128xf32> to vector<2x128xf32>
    %293 = arith.truncf %248 : vector<2x32xf32> to vector<2x32xbf16>
    %cst_142 = arith.constant dense<0.000000e+00> : vector<2x128xf32>
    %294 = tpu.matmul %293, %1, %cst_142 {dimension_numbers = #tpu.dot_dimension_numbers<[1], [0], [0], [1], [0, 0, 1, 1], [], []>} : vector<2x32xbf16>, vector<32x128xbf16>, vector<2x128xf32> -> vector<2x128xf32>
    %295 = arith.addf %292, %294 : vector<2x128xf32>
    %296 = math.tanh %295 : vector<2x128xf32>
    %297 = vector.extract_strided_slice %296 {offsets = [0, 0], sizes = [2, 32], strides = [1, 1]} : vector<2x128xf32> to vector<2x32xf32>
    %cst_143 = arith.constant 5.000000e-01 : f32
    %298 = vector.broadcast %cst_143 : f32 to vector<2x32xf32>
    %299 = arith.mulf %298, %297 : vector<2x32xf32>
    %cst_144 = arith.constant 5.000000e-01 : f32
    %300 = vector.broadcast %cst_144 : f32 to vector<2x32xf32>
    %301 = arith.addf %300, %299 : vector<2x32xf32>
    %302 = vector.extract_strided_slice %296 {offsets = [0, 32], sizes = [2, 32], strides = [1, 1]} : vector<2x128xf32> to vector<2x32xf32>
    %cst_145 = arith.constant 5.000000e-01 : f32
    %303 = vector.broadcast %cst_145 : f32 to vector<2x32xf32>
    %304 = arith.mulf %303, %302 : vector<2x32xf32>
    %cst_146 = arith.constant 5.000000e-01 : f32
    %305 = vector.broadcast %cst_146 : f32 to vector<2x32xf32>
    %306 = arith.addf %305, %304 : vector<2x32xf32>
    %307 = vector.extract_strided_slice %296 {offsets = [0, 64], sizes = [2, 32], strides = [1, 1]} : vector<2x128xf32> to vector<2x32xf32>
    %308 = vector.extract_strided_slice %296 {offsets = [0, 96], sizes = [2, 32], strides = [1, 1]} : vector<2x128xf32> to vector<2x32xf32>
    %cst_147 = arith.constant 5.000000e-01 : f32
    %309 = vector.broadcast %cst_147 : f32 to vector<2x32xf32>
    %310 = arith.mulf %309, %308 : vector<2x32xf32>
    %cst_148 = arith.constant 5.000000e-01 : f32
    %311 = vector.broadcast %cst_148 : f32 to vector<2x32xf32>
    %312 = arith.addf %311, %310 : vector<2x32xf32>
    %313 = arith.mulf %306, %246 : vector<2x32xf32>
    %314 = arith.mulf %301, %307 : vector<2x32xf32>
    %315 = arith.addf %313, %314 : vector<2x32xf32>
    %316 = math.tanh %315 : vector<2x32xf32>
    %317 = arith.mulf %312, %316 : vector<2x32xf32>
    %318 = arith.index_cast %c4_i32 : i32 to index
    %c0_149 = arith.constant 0 : index
    %c0_150 = arith.constant 0 : index
    %319 = vector.load %arg7[%318, %c0_149, %c0_150] : memref<8x2x64xf32, #tpu.memory_space<vmem>>, vector<1x2x32xf32>
    %320 = vector.shape_cast %319 : vector<1x2x32xf32> to vector<2x32xf32>
    %321 = vector.shape_cast %317 : vector<2x32xf32> to vector<1x2x32xf32>
    tpu.vector_store %arg7[%318, %c0_149, %c0_150], %321 {strides = array<i32>} : memref<8x2x64xf32, #tpu.memory_space<vmem>>, vector<1x2x32xf32>,
    %c7_i32_151 = arith.constant 7 : i32
    %322 = arith.subi %c7_i32_151, %c4_i32 : i32
    %c0_i32_152 = arith.constant 0 : i32
    %c0_i32_153 = arith.constant 0 : i32
    %c0_i32_154 = arith.constant 0 : i32
    %323 = tpu.memref_slice %arg0[%c1_i32, %c0_i32_152, %c0_i32_153, %c0_i32_154] : memref<2x8x2x128xf32, #tpu.memory_space<vmem>> -> memref<1x8x2x128xf32, #tpu.memory_space<vmem>>
    %324 = tpu.memref_squeeze %323 : memref<1x8x2x128xf32, #tpu.memory_space<vmem>> -> memref<8x2x128xf32, #tpu.memory_space<vmem>>
    %325 = arith.index_cast %322 : i32 to index
    %c0_155 = arith.constant 0 : index
    %c0_156 = arith.constant 0 : index
    %326 = vector.load %324[%325, %c0_155, %c0_156] : memref<8x2x128xf32, #tpu.memory_space<vmem>>, vector<1x2x128xf32>
    %327 = vector.shape_cast %326 : vector<1x2x128xf32> to vector<2x128xf32>
    %328 = arith.truncf %283 : vector<2x32xf32> to vector<2x32xbf16>
    %cst_157 = arith.constant dense<0.000000e+00> : vector<2x128xf32>
    %329 = tpu.matmul %328, %3, %cst_157 {dimension_numbers = #tpu.dot_dimension_numbers<[1], [0], [0], [1], [0, 0, 1, 1], [], []>} : vector<2x32xbf16>, vector<32x128xbf16>, vector<2x128xf32> -> vector<2x128xf32>
    %330 = arith.addf %327, %329 : vector<2x128xf32>
    %331 = math.tanh %330 : vector<2x128xf32>
    %332 = vector.extract_strided_slice %331 {offsets = [0, 0], sizes = [2, 32], strides = [1, 1]} : vector<2x128xf32> to vector<2x32xf32>
    %cst_158 = arith.constant 5.000000e-01 : f32
    %333 = vector.broadcast %cst_158 : f32 to vector<2x32xf32>
    %334 = arith.mulf %333, %332 : vector<2x32xf32>
    %cst_159 = arith.constant 5.000000e-01 : f32
    %335 = vector.broadcast %cst_159 : f32 to vector<2x32xf32>
    %336 = arith.addf %335, %334 : vector<2x32xf32>
    %337 = vector.extract_strided_slice %331 {offsets = [0, 32], sizes = [2, 32], strides = [1, 1]} : vector<2x128xf32> to vector<2x32xf32>
    %cst_160 = arith.constant 5.000000e-01 : f32
    %338 = vector.broadcast %cst_160 : f32 to vector<2x32xf32>
    %339 = arith.mulf %338, %337 : vector<2x32xf32>
    %cst_161 = arith.constant 5.000000e-01 : f32
    %340 = vector.broadcast %cst_161 : f32 to vector<2x32xf32>
    %341 = arith.addf %340, %339 : vector<2x32xf32>
    %342 = vector.extract_strided_slice %331 {offsets = [0, 64], sizes = [2, 32], strides = [1, 1]} : vector<2x128xf32> to vector<2x32xf32>
    %343 = vector.extract_strided_slice %331 {offsets = [0, 96], sizes = [2, 32], strides = [1, 1]} : vector<2x128xf32> to vector<2x32xf32>
    %cst_162 = arith.constant 5.000000e-01 : f32
    %344 = vector.broadcast %cst_162 : f32 to vector<2x32xf32>
    %345 = arith.mulf %344, %343 : vector<2x32xf32>
    %cst_163 = arith.constant 5.000000e-01 : f32
    %346 = vector.broadcast %cst_163 : f32 to vector<2x32xf32>
    %347 = arith.addf %346, %345 : vector<2x32xf32>
    %348 = arith.mulf %341, %281 : vector<2x32xf32>
    %349 = arith.mulf %336, %342 : vector<2x32xf32>
    %350 = arith.addf %348, %349 : vector<2x32xf32>
    %351 = math.tanh %350 : vector<2x32xf32>
    %352 = arith.mulf %347, %351 : vector<2x32xf32>
    %353 = arith.index_cast %322 : i32 to index
    %c0_164 = arith.constant 0 : index
    %c32_165 = arith.constant 32 : index
    %354 = vector.load %arg7[%353, %c0_164, %c32_165] : memref<8x2x64xf32, #tpu.memory_space<vmem>>, vector<1x2x32xf32>
    %355 = vector.shape_cast %354 : vector<1x2x32xf32> to vector<2x32xf32>
    %356 = vector.shape_cast %352 : vector<2x32xf32> to vector<1x2x32xf32>
    tpu.vector_store %arg7[%353, %c0_164, %c32_165], %356 {strides = array<i32>} : memref<8x2x64xf32, #tpu.memory_space<vmem>>, vector<1x2x32xf32>,
    %c5_i32 = arith.constant 5 : i32
    %c0_i32_166 = arith.constant 0 : i32
    %c0_i32_167 = arith.constant 0 : i32
    %c0_i32_168 = arith.constant 0 : i32
    %357 = tpu.memref_slice %arg0[%c0_i32, %c0_i32_166, %c0_i32_167, %c0_i32_168] : memref<2x8x2x128xf32, #tpu.memory_space<vmem>> -> memref<1x8x2x128xf32, #tpu.memory_space<vmem>>
    %358 = tpu.memref_squeeze %357 : memref<1x8x2x128xf32, #tpu.memory_space<vmem>> -> memref<8x2x128xf32, #tpu.memory_space<vmem>>
    %359 = arith.index_cast %c5_i32 : i32 to index
    %c0_169 = arith.constant 0 : index
    %c0_170 = arith.constant 0 : index
    %360 = vector.load %358[%359, %c0_169, %c0_170] : memref<8x2x128xf32, #tpu.memory_space<vmem>>, vector<1x2x128xf32>
    %361 = vector.shape_cast %360 : vector<1x2x128xf32> to vector<2x128xf32>
    %362 = arith.truncf %317 : vector<2x32xf32> to vector<2x32xbf16>
    %cst_171 = arith.constant dense<0.000000e+00> : vector<2x128xf32>
    %363 = tpu.matmul %362, %1, %cst_171 {dimension_numbers = #tpu.dot_dimension_numbers<[1], [0], [0], [1], [0, 0, 1, 1], [], []>} : vector<2x32xbf16>, vector<32x128xbf16>, vector<2x128xf32> -> vector<2x128xf32>
    %364 = arith.addf %361, %363 : vector<2x128xf32>
    %365 = math.tanh %364 : vector<2x128xf32>
    %366 = vector.extract_strided_slice %365 {offsets = [0, 0], sizes = [2, 32], strides = [1, 1]} : vector<2x128xf32> to vector<2x32xf32>
    %cst_172 = arith.constant 5.000000e-01 : f32
    %367 = vector.broadcast %cst_172 : f32 to vector<2x32xf32>
    %368 = arith.mulf %367, %366 : vector<2x32xf32>
    %cst_173 = arith.constant 5.000000e-01 : f32
    %369 = vector.broadcast %cst_173 : f32 to vector<2x32xf32>
    %370 = arith.addf %369, %368 : vector<2x32xf32>
    %371 = vector.extract_strided_slice %365 {offsets = [0, 32], sizes = [2, 32], strides = [1, 1]} : vector<2x128xf32> to vector<2x32xf32>
    %cst_174 = arith.constant 5.000000e-01 : f32
    %372 = vector.broadcast %cst_174 : f32 to vector<2x32xf32>
    %373 = arith.mulf %372, %371 : vector<2x32xf32>
    %cst_175 = arith.constant 5.000000e-01 : f32
    %374 = vector.broadcast %cst_175 : f32 to vector<2x32xf32>
    %375 = arith.addf %374, %373 : vector<2x32xf32>
    %376 = vector.extract_strided_slice %365 {offsets = [0, 64], sizes = [2, 32], strides = [1, 1]} : vector<2x128xf32> to vector<2x32xf32>
    %377 = vector.extract_strided_slice %365 {offsets = [0, 96], sizes = [2, 32], strides = [1, 1]} : vector<2x128xf32> to vector<2x32xf32>
    %cst_176 = arith.constant 5.000000e-01 : f32
    %378 = vector.broadcast %cst_176 : f32 to vector<2x32xf32>
    %379 = arith.mulf %378, %377 : vector<2x32xf32>
    %cst_177 = arith.constant 5.000000e-01 : f32
    %380 = vector.broadcast %cst_177 : f32 to vector<2x32xf32>
    %381 = arith.addf %380, %379 : vector<2x32xf32>
    %382 = arith.mulf %375, %315 : vector<2x32xf32>
    %383 = arith.mulf %370, %376 : vector<2x32xf32>
    %384 = arith.addf %382, %383 : vector<2x32xf32>
    %385 = math.tanh %384 : vector<2x32xf32>
    %386 = arith.mulf %381, %385 : vector<2x32xf32>
    %387 = arith.index_cast %c5_i32 : i32 to index
    %c0_178 = arith.constant 0 : index
    %c0_179 = arith.constant 0 : index
    %388 = vector.load %arg7[%387, %c0_178, %c0_179] : memref<8x2x64xf32, #tpu.memory_space<vmem>>, vector<1x2x32xf32>
    %389 = vector.shape_cast %388 : vector<1x2x32xf32> to vector<2x32xf32>
    %390 = vector.shape_cast %386 : vector<2x32xf32> to vector<1x2x32xf32>
    tpu.vector_store %arg7[%387, %c0_178, %c0_179], %390 {strides = array<i32>} : memref<8x2x64xf32, #tpu.memory_space<vmem>>, vector<1x2x32xf32>,
    %c7_i32_180 = arith.constant 7 : i32
    %391 = arith.subi %c7_i32_180, %c5_i32 : i32
    %c0_i32_181 = arith.constant 0 : i32
    %c0_i32_182 = arith.constant 0 : i32
    %c0_i32_183 = arith.constant 0 : i32
    %392 = tpu.memref_slice %arg0[%c1_i32, %c0_i32_181, %c0_i32_182, %c0_i32_183] : memref<2x8x2x128xf32, #tpu.memory_space<vmem>> -> memref<1x8x2x128xf32, #tpu.memory_space<vmem>>
    %393 = tpu.memref_squeeze %392 : memref<1x8x2x128xf32, #tpu.memory_space<vmem>> -> memref<8x2x128xf32, #tpu.memory_space<vmem>>
    %394 = arith.index_cast %391 : i32 to index
    %c0_184 = arith.constant 0 : index
    %c0_185 = arith.constant 0 : index
    %395 = vector.load %393[%394, %c0_184, %c0_185] : memref<8x2x128xf32, #tpu.memory_space<vmem>>, vector<1x2x128xf32>
    %396 = vector.shape_cast %395 : vector<1x2x128xf32> to vector<2x128xf32>
    %397 = arith.truncf %352 : vector<2x32xf32> to vector<2x32xbf16>
    %cst_186 = arith.constant dense<0.000000e+00> : vector<2x128xf32>
    %398 = tpu.matmul %397, %3, %cst_186 {dimension_numbers = #tpu.dot_dimension_numbers<[1], [0], [0], [1], [0, 0, 1, 1], [], []>} : vector<2x32xbf16>, vector<32x128xbf16>, vector<2x128xf32> -> vector<2x128xf32>
    %399 = arith.addf %396, %398 : vector<2x128xf32>
    %400 = math.tanh %399 : vector<2x128xf32>
    %401 = vector.extract_strided_slice %400 {offsets = [0, 0], sizes = [2, 32], strides = [1, 1]} : vector<2x128xf32> to vector<2x32xf32>
    %cst_187 = arith.constant 5.000000e-01 : f32
    %402 = vector.broadcast %cst_187 : f32 to vector<2x32xf32>
    %403 = arith.mulf %402, %401 : vector<2x32xf32>
    %cst_188 = arith.constant 5.000000e-01 : f32
    %404 = vector.broadcast %cst_188 : f32 to vector<2x32xf32>
    %405 = arith.addf %404, %403 : vector<2x32xf32>
    %406 = vector.extract_strided_slice %400 {offsets = [0, 32], sizes = [2, 32], strides = [1, 1]} : vector<2x128xf32> to vector<2x32xf32>
    %cst_189 = arith.constant 5.000000e-01 : f32
    %407 = vector.broadcast %cst_189 : f32 to vector<2x32xf32>
    %408 = arith.mulf %407, %406 : vector<2x32xf32>
    %cst_190 = arith.constant 5.000000e-01 : f32
    %409 = vector.broadcast %cst_190 : f32 to vector<2x32xf32>
    %410 = arith.addf %409, %408 : vector<2x32xf32>
    %411 = vector.extract_strided_slice %400 {offsets = [0, 64], sizes = [2, 32], strides = [1, 1]} : vector<2x128xf32> to vector<2x32xf32>
    %412 = vector.extract_strided_slice %400 {offsets = [0, 96], sizes = [2, 32], strides = [1, 1]} : vector<2x128xf32> to vector<2x32xf32>
    %cst_191 = arith.constant 5.000000e-01 : f32
    %413 = vector.broadcast %cst_191 : f32 to vector<2x32xf32>
    %414 = arith.mulf %413, %412 : vector<2x32xf32>
    %cst_192 = arith.constant 5.000000e-01 : f32
    %415 = vector.broadcast %cst_192 : f32 to vector<2x32xf32>
    %416 = arith.addf %415, %414 : vector<2x32xf32>
    %417 = arith.mulf %410, %350 : vector<2x32xf32>
    %418 = arith.mulf %405, %411 : vector<2x32xf32>
    %419 = arith.addf %417, %418 : vector<2x32xf32>
    %420 = math.tanh %419 : vector<2x32xf32>
    %421 = arith.mulf %416, %420 : vector<2x32xf32>
    %422 = arith.index_cast %391 : i32 to index
    %c0_193 = arith.constant 0 : index
    %c32_194 = arith.constant 32 : index
    %423 = vector.load %arg7[%422, %c0_193, %c32_194] : memref<8x2x64xf32, #tpu.memory_space<vmem>>, vector<1x2x32xf32>
    %424 = vector.shape_cast %423 : vector<1x2x32xf32> to vector<2x32xf32>
    %425 = vector.shape_cast %421 : vector<2x32xf32> to vector<1x2x32xf32>
    tpu.vector_store %arg7[%422, %c0_193, %c32_194], %425 {strides = array<i32>} : memref<8x2x64xf32, #tpu.memory_space<vmem>>, vector<1x2x32xf32>,
    %c6_i32 = arith.constant 6 : i32
    %c0_i32_195 = arith.constant 0 : i32
    %c0_i32_196 = arith.constant 0 : i32
    %c0_i32_197 = arith.constant 0 : i32
    %426 = tpu.memref_slice %arg0[%c0_i32, %c0_i32_195, %c0_i32_196, %c0_i32_197] : memref<2x8x2x128xf32, #tpu.memory_space<vmem>> -> memref<1x8x2x128xf32, #tpu.memory_space<vmem>>
    %427 = tpu.memref_squeeze %426 : memref<1x8x2x128xf32, #tpu.memory_space<vmem>> -> memref<8x2x128xf32, #tpu.memory_space<vmem>>
    %428 = arith.index_cast %c6_i32 : i32 to index
    %c0_198 = arith.constant 0 : index
    %c0_199 = arith.constant 0 : index
    %429 = vector.load %427[%428, %c0_198, %c0_199] : memref<8x2x128xf32, #tpu.memory_space<vmem>>, vector<1x2x128xf32>
    %430 = vector.shape_cast %429 : vector<1x2x128xf32> to vector<2x128xf32>
    %431 = arith.truncf %386 : vector<2x32xf32> to vector<2x32xbf16>
    %cst_200 = arith.constant dense<0.000000e+00> : vector<2x128xf32>
    %432 = tpu.matmul %431, %1, %cst_200 {dimension_numbers = #tpu.dot_dimension_numbers<[1], [0], [0], [1], [0, 0, 1, 1], [], []>} : vector<2x32xbf16>, vector<32x128xbf16>, vector<2x128xf32> -> vector<2x128xf32>
    %433 = arith.addf %430, %432 : vector<2x128xf32>
    %434 = math.tanh %433 : vector<2x128xf32>
    %435 = vector.extract_strided_slice %434 {offsets = [0, 0], sizes = [2, 32], strides = [1, 1]} : vector<2x128xf32> to vector<2x32xf32>
    %cst_201 = arith.constant 5.000000e-01 : f32
    %436 = vector.broadcast %cst_201 : f32 to vector<2x32xf32>
    %437 = arith.mulf %436, %435 : vector<2x32xf32>
    %cst_202 = arith.constant 5.000000e-01 : f32
    %438 = vector.broadcast %cst_202 : f32 to vector<2x32xf32>
    %439 = arith.addf %438, %437 : vector<2x32xf32>
    %440 = vector.extract_strided_slice %434 {offsets = [0, 32], sizes = [2, 32], strides = [1, 1]} : vector<2x128xf32> to vector<2x32xf32>
    %cst_203 = arith.constant 5.000000e-01 : f32
    %441 = vector.broadcast %cst_203 : f32 to vector<2x32xf32>
    %442 = arith.mulf %441, %440 : vector<2x32xf32>
    %cst_204 = arith.constant 5.000000e-01 : f32
    %443 = vector.broadcast %cst_204 : f32 to vector<2x32xf32>
    %444 = arith.addf %443, %442 : vector<2x32xf32>
    %445 = vector.extract_strided_slice %434 {offsets = [0, 64], sizes = [2, 32], strides = [1, 1]} : vector<2x128xf32> to vector<2x32xf32>
    %446 = vector.extract_strided_slice %434 {offsets = [0, 96], sizes = [2, 32], strides = [1, 1]} : vector<2x128xf32> to vector<2x32xf32>
    %cst_205 = arith.constant 5.000000e-01 : f32
    %447 = vector.broadcast %cst_205 : f32 to vector<2x32xf32>
    %448 = arith.mulf %447, %446 : vector<2x32xf32>
    %cst_206 = arith.constant 5.000000e-01 : f32
    %449 = vector.broadcast %cst_206 : f32 to vector<2x32xf32>
    %450 = arith.addf %449, %448 : vector<2x32xf32>
    %451 = arith.mulf %444, %384 : vector<2x32xf32>
    %452 = arith.mulf %439, %445 : vector<2x32xf32>
    %453 = arith.addf %451, %452 : vector<2x32xf32>
    %454 = math.tanh %453 : vector<2x32xf32>
    %455 = arith.mulf %450, %454 : vector<2x32xf32>
    %456 = arith.index_cast %c6_i32 : i32 to index
    %c0_207 = arith.constant 0 : index
    %c0_208 = arith.constant 0 : index
    %457 = vector.load %arg7[%456, %c0_207, %c0_208] : memref<8x2x64xf32, #tpu.memory_space<vmem>>, vector<1x2x32xf32>
    %458 = vector.shape_cast %457 : vector<1x2x32xf32> to vector<2x32xf32>
    %459 = vector.shape_cast %455 : vector<2x32xf32> to vector<1x2x32xf32>
    tpu.vector_store %arg7[%456, %c0_207, %c0_208], %459 {strides = array<i32>} : memref<8x2x64xf32, #tpu.memory_space<vmem>>, vector<1x2x32xf32>,
    %c7_i32_209 = arith.constant 7 : i32
    %460 = arith.subi %c7_i32_209, %c6_i32 : i32
    %c0_i32_210 = arith.constant 0 : i32
    %c0_i32_211 = arith.constant 0 : i32
    %c0_i32_212 = arith.constant 0 : i32
    %461 = tpu.memref_slice %arg0[%c1_i32, %c0_i32_210, %c0_i32_211, %c0_i32_212] : memref<2x8x2x128xf32, #tpu.memory_space<vmem>> -> memref<1x8x2x128xf32, #tpu.memory_space<vmem>>
    %462 = tpu.memref_squeeze %461 : memref<1x8x2x128xf32, #tpu.memory_space<vmem>> -> memref<8x2x128xf32, #tpu.memory_space<vmem>>
    %463 = arith.index_cast %460 : i32 to index
    %c0_213 = arith.constant 0 : index
    %c0_214 = arith.constant 0 : index
    %464 = vector.load %462[%463, %c0_213, %c0_214] : memref<8x2x128xf32, #tpu.memory_space<vmem>>, vector<1x2x128xf32>
    %465 = vector.shape_cast %464 : vector<1x2x128xf32> to vector<2x128xf32>
    %466 = arith.truncf %421 : vector<2x32xf32> to vector<2x32xbf16>
    %cst_215 = arith.constant dense<0.000000e+00> : vector<2x128xf32>
    %467 = tpu.matmul %466, %3, %cst_215 {dimension_numbers = #tpu.dot_dimension_numbers<[1], [0], [0], [1], [0, 0, 1, 1], [], []>} : vector<2x32xbf16>, vector<32x128xbf16>, vector<2x128xf32> -> vector<2x128xf32>
    %468 = arith.addf %465, %467 : vector<2x128xf32>
    %469 = math.tanh %468 : vector<2x128xf32>
    %470 = vector.extract_strided_slice %469 {offsets = [0, 0], sizes = [2, 32], strides = [1, 1]} : vector<2x128xf32> to vector<2x32xf32>
    %cst_216 = arith.constant 5.000000e-01 : f32
    %471 = vector.broadcast %cst_216 : f32 to vector<2x32xf32>
    %472 = arith.mulf %471, %470 : vector<2x32xf32>
    %cst_217 = arith.constant 5.000000e-01 : f32
    %473 = vector.broadcast %cst_217 : f32 to vector<2x32xf32>
    %474 = arith.addf %473, %472 : vector<2x32xf32>
    %475 = vector.extract_strided_slice %469 {offsets = [0, 32], sizes = [2, 32], strides = [1, 1]} : vector<2x128xf32> to vector<2x32xf32>
    %cst_218 = arith.constant 5.000000e-01 : f32
    %476 = vector.broadcast %cst_218 : f32 to vector<2x32xf32>
    %477 = arith.mulf %476, %475 : vector<2x32xf32>
    %cst_219 = arith.constant 5.000000e-01 : f32
    %478 = vector.broadcast %cst_219 : f32 to vector<2x32xf32>
    %479 = arith.addf %478, %477 : vector<2x32xf32>
    %480 = vector.extract_strided_slice %469 {offsets = [0, 64], sizes = [2, 32], strides = [1, 1]} : vector<2x128xf32> to vector<2x32xf32>
    %481 = vector.extract_strided_slice %469 {offsets = [0, 96], sizes = [2, 32], strides = [1, 1]} : vector<2x128xf32> to vector<2x32xf32>
    %cst_220 = arith.constant 5.000000e-01 : f32
    %482 = vector.broadcast %cst_220 : f32 to vector<2x32xf32>
    %483 = arith.mulf %482, %481 : vector<2x32xf32>
    %cst_221 = arith.constant 5.000000e-01 : f32
    %484 = vector.broadcast %cst_221 : f32 to vector<2x32xf32>
    %485 = arith.addf %484, %483 : vector<2x32xf32>
    %486 = arith.mulf %479, %419 : vector<2x32xf32>
    %487 = arith.mulf %474, %480 : vector<2x32xf32>
    %488 = arith.addf %486, %487 : vector<2x32xf32>
    %489 = math.tanh %488 : vector<2x32xf32>
    %490 = arith.mulf %485, %489 : vector<2x32xf32>
    %491 = arith.index_cast %460 : i32 to index
    %c0_222 = arith.constant 0 : index
    %c32_223 = arith.constant 32 : index
    %492 = vector.load %arg7[%491, %c0_222, %c32_223] : memref<8x2x64xf32, #tpu.memory_space<vmem>>, vector<1x2x32xf32>
    %493 = vector.shape_cast %492 : vector<1x2x32xf32> to vector<2x32xf32>
    %494 = vector.shape_cast %490 : vector<2x32xf32> to vector<1x2x32xf32>
    tpu.vector_store %arg7[%491, %c0_222, %c32_223], %494 {strides = array<i32>} : memref<8x2x64xf32, #tpu.memory_space<vmem>>, vector<1x2x32xf32>,
    %c7_i32_224 = arith.constant 7 : i32
    %c0_i32_225 = arith.constant 0 : i32
    %c0_i32_226 = arith.constant 0 : i32
    %c0_i32_227 = arith.constant 0 : i32
    %495 = tpu.memref_slice %arg0[%c0_i32, %c0_i32_225, %c0_i32_226, %c0_i32_227] : memref<2x8x2x128xf32, #tpu.memory_space<vmem>> -> memref<1x8x2x128xf32, #tpu.memory_space<vmem>>
    %496 = tpu.memref_squeeze %495 : memref<1x8x2x128xf32, #tpu.memory_space<vmem>> -> memref<8x2x128xf32, #tpu.memory_space<vmem>>
    %497 = arith.index_cast %c7_i32_224 : i32 to index
    %c0_228 = arith.constant 0 : index
    %c0_229 = arith.constant 0 : index
    %498 = vector.load %496[%497, %c0_228, %c0_229] : memref<8x2x128xf32, #tpu.memory_space<vmem>>, vector<1x2x128xf32>
    %499 = vector.shape_cast %498 : vector<1x2x128xf32> to vector<2x128xf32>
    %500 = arith.truncf %455 : vector<2x32xf32> to vector<2x32xbf16>
    %cst_230 = arith.constant dense<0.000000e+00> : vector<2x128xf32>
    %501 = tpu.matmul %500, %1, %cst_230 {dimension_numbers = #tpu.dot_dimension_numbers<[1], [0], [0], [1], [0, 0, 1, 1], [], []>} : vector<2x32xbf16>, vector<32x128xbf16>, vector<2x128xf32> -> vector<2x128xf32>
    %502 = arith.addf %499, %501 : vector<2x128xf32>
    %503 = math.tanh %502 : vector<2x128xf32>
    %504 = vector.extract_strided_slice %503 {offsets = [0, 0], sizes = [2, 32], strides = [1, 1]} : vector<2x128xf32> to vector<2x32xf32>
    %cst_231 = arith.constant 5.000000e-01 : f32
    %505 = vector.broadcast %cst_231 : f32 to vector<2x32xf32>
    %506 = arith.mulf %505, %504 : vector<2x32xf32>
    %cst_232 = arith.constant 5.000000e-01 : f32
    %507 = vector.broadcast %cst_232 : f32 to vector<2x32xf32>
    %508 = arith.addf %507, %506 : vector<2x32xf32>
    %509 = vector.extract_strided_slice %503 {offsets = [0, 32], sizes = [2, 32], strides = [1, 1]} : vector<2x128xf32> to vector<2x32xf32>
    %cst_233 = arith.constant 5.000000e-01 : f32
    %510 = vector.broadcast %cst_233 : f32 to vector<2x32xf32>
    %511 = arith.mulf %510, %509 : vector<2x32xf32>
    %cst_234 = arith.constant 5.000000e-01 : f32
    %512 = vector.broadcast %cst_234 : f32 to vector<2x32xf32>
    %513 = arith.addf %512, %511 : vector<2x32xf32>
    %514 = vector.extract_strided_slice %503 {offsets = [0, 64], sizes = [2, 32], strides = [1, 1]} : vector<2x128xf32> to vector<2x32xf32>
    %515 = vector.extract_strided_slice %503 {offsets = [0, 96], sizes = [2, 32], strides = [1, 1]} : vector<2x128xf32> to vector<2x32xf32>
    %cst_235 = arith.constant 5.000000e-01 : f32
    %516 = vector.broadcast %cst_235 : f32 to vector<2x32xf32>
    %517 = arith.mulf %516, %515 : vector<2x32xf32>
    %cst_236 = arith.constant 5.000000e-01 : f32
    %518 = vector.broadcast %cst_236 : f32 to vector<2x32xf32>
    %519 = arith.addf %518, %517 : vector<2x32xf32>
    %520 = arith.mulf %513, %453 : vector<2x32xf32>
    %521 = arith.mulf %508, %514 : vector<2x32xf32>
    %522 = arith.addf %520, %521 : vector<2x32xf32>
    %523 = math.tanh %522 : vector<2x32xf32>
    %524 = arith.mulf %519, %523 : vector<2x32xf32>
    %525 = arith.index_cast %c7_i32_224 : i32 to index
    %c0_237 = arith.constant 0 : index
    %c0_238 = arith.constant 0 : index
    %526 = vector.load %arg7[%525, %c0_237, %c0_238] : memref<8x2x64xf32, #tpu.memory_space<vmem>>, vector<1x2x32xf32>
    %527 = vector.shape_cast %526 : vector<1x2x32xf32> to vector<2x32xf32>
    %528 = vector.shape_cast %524 : vector<2x32xf32> to vector<1x2x32xf32>
    tpu.vector_store %arg7[%525, %c0_237, %c0_238], %528 {strides = array<i32>} : memref<8x2x64xf32, #tpu.memory_space<vmem>>, vector<1x2x32xf32>,
    %c7_i32_239 = arith.constant 7 : i32
    %529 = arith.subi %c7_i32_239, %c7_i32_224 : i32
    %c0_i32_240 = arith.constant 0 : i32
    %c0_i32_241 = arith.constant 0 : i32
    %c0_i32_242 = arith.constant 0 : i32
    %530 = tpu.memref_slice %arg0[%c1_i32, %c0_i32_240, %c0_i32_241, %c0_i32_242] : memref<2x8x2x128xf32, #tpu.memory_space<vmem>> -> memref<1x8x2x128xf32, #tpu.memory_space<vmem>>
    %531 = tpu.memref_squeeze %530 : memref<1x8x2x128xf32, #tpu.memory_space<vmem>> -> memref<8x2x128xf32, #tpu.memory_space<vmem>>
    %532 = arith.index_cast %529 : i32 to index
    %c0_243 = arith.constant 0 : index
    %c0_244 = arith.constant 0 : index
    %533 = vector.load %531[%532, %c0_243, %c0_244] : memref<8x2x128xf32, #tpu.memory_space<vmem>>, vector<1x2x128xf32>
    %534 = vector.shape_cast %533 : vector<1x2x128xf32> to vector<2x128xf32>
    %535 = arith.truncf %490 : vector<2x32xf32> to vector<2x32xbf16>
    %cst_245 = arith.constant dense<0.000000e+00> : vector<2x128xf32>
    %536 = tpu.matmul %535, %3, %cst_245 {dimension_numbers = #tpu.dot_dimension_numbers<[1], [0], [0], [1], [0, 0, 1, 1], [], []>} : vector<2x32xbf16>, vector<32x128xbf16>, vector<2x128xf32> -> vector<2x128xf32>
    %537 = arith.addf %534, %536 : vector<2x128xf32>
    %538 = math.tanh %537 : vector<2x128xf32>
    %539 = vector.extract_strided_slice %538 {offsets = [0, 0], sizes = [2, 32], strides = [1, 1]} : vector<2x128xf32> to vector<2x32xf32>
    %cst_246 = arith.constant 5.000000e-01 : f32
    %540 = vector.broadcast %cst_246 : f32 to vector<2x32xf32>
    %541 = arith.mulf %540, %539 : vector<2x32xf32>
    %cst_247 = arith.constant 5.000000e-01 : f32
    %542 = vector.broadcast %cst_247 : f32 to vector<2x32xf32>
    %543 = arith.addf %542, %541 : vector<2x32xf32>
    %544 = vector.extract_strided_slice %538 {offsets = [0, 32], sizes = [2, 32], strides = [1, 1]} : vector<2x128xf32> to vector<2x32xf32>
    %cst_248 = arith.constant 5.000000e-01 : f32
    %545 = vector.broadcast %cst_248 : f32 to vector<2x32xf32>
    %546 = arith.mulf %545, %544 : vector<2x32xf32>
    %cst_249 = arith.constant 5.000000e-01 : f32
    %547 = vector.broadcast %cst_249 : f32 to vector<2x32xf32>
    %548 = arith.addf %547, %546 : vector<2x32xf32>
    %549 = vector.extract_strided_slice %538 {offsets = [0, 64], sizes = [2, 32], strides = [1, 1]} : vector<2x128xf32> to vector<2x32xf32>
    %550 = vector.extract_strided_slice %538 {offsets = [0, 96], sizes = [2, 32], strides = [1, 1]} : vector<2x128xf32> to vector<2x32xf32>
    %cst_250 = arith.constant 5.000000e-01 : f32
    %551 = vector.broadcast %cst_250 : f32 to vector<2x32xf32>
    %552 = arith.mulf %551, %550 : vector<2x32xf32>
    %cst_251 = arith.constant 5.000000e-01 : f32
    %553 = vector.broadcast %cst_251 : f32 to vector<2x32xf32>
    %554 = arith.addf %553, %552 : vector<2x32xf32>
    %555 = arith.mulf %548, %488 : vector<2x32xf32>
    %556 = arith.mulf %543, %549 : vector<2x32xf32>
    %557 = arith.addf %555, %556 : vector<2x32xf32>
    %558 = math.tanh %557 : vector<2x32xf32>
    %559 = arith.mulf %554, %558 : vector<2x32xf32>
    %560 = arith.index_cast %529 : i32 to index
    %c0_252 = arith.constant 0 : index
    %c32_253 = arith.constant 32 : index
    %561 = vector.load %arg7[%560, %c0_252, %c32_253] : memref<8x2x64xf32, #tpu.memory_space<vmem>>, vector<1x2x32xf32>
    %562 = vector.shape_cast %561 : vector<1x2x32xf32> to vector<2x32xf32>
    %563 = vector.shape_cast %559 : vector<2x32xf32> to vector<1x2x32xf32>
    tpu.vector_store %arg7[%560, %c0_252, %c32_253], %563 {strides = array<i32>} : memref<8x2x64xf32, #tpu.memory_space<vmem>>, vector<1x2x32xf32>,
    %c8_i32 = arith.constant 8 : i32
    %c0_254 = arith.constant 0 : index
    %c0_255 = arith.constant 0 : index
    %c0_256 = arith.constant 0 : index
    %564 = vector.load %arg4[%c0_254, %c0_255, %c0_256] : memref<1x64x256xbf16, #tpu.memory_space<vmem>>, vector<1x64x256xbf16>
    %565 = vector.shape_cast %564 : vector<1x64x256xbf16> to vector<64x256xbf16>
    %c0_257 = arith.constant 0 : index
    %c0_258 = arith.constant 0 : index
    %c0_259 = arith.constant 0 : index
    %566 = vector.load %arg5[%c0_257, %c0_258, %c0_259] : memref<1x1x256xf32, #tpu.memory_space<vmem>>, vector<1x1x256xf32>
    %567 = vector.shape_cast %566 : vector<1x1x256xf32> to vector<1x256xf32>
    %c0_i32_260 = arith.constant 0 : i32
    %c1_i32_261 = arith.constant 1 : i32
    %c0_i32_262 = arith.constant 0 : i32
    %568 = arith.index_cast %c0_i32_262 : i32 to index
    %c0_263 = arith.constant 0 : index
    %c0_264 = arith.constant 0 : index
    %569 = vector.load %arg7[%568, %c0_263, %c0_264] : memref<8x2x64xf32, #tpu.memory_space<vmem>>, vector<1x2x64xf32>
    %570 = vector.shape_cast %569 : vector<1x2x64xf32> to vector<2x64xf32>
    %571 = arith.truncf %570 : vector<2x64xf32> to vector<2x64xbf16>
    %cst_265 = arith.constant dense<0.000000e+00> : vector<2x256xf32>
    %572 = tpu.matmul %571, %565, %cst_265 {dimension_numbers = #tpu.dot_dimension_numbers<[1], [0], [0], [1], [0, 0, 1, 1], [], []>} : vector<2x64xbf16>, vector<64x256xbf16>, vector<2x256xf32> -> vector<2x256xf32>
    %573 = vector.broadcast %567 : vector<1x256xf32> to vector<2x256xf32>
    %574 = arith.addf %572, %573 : vector<2x256xf32>
    %575 = vector.extract_strided_slice %574 {offsets = [0, 0], sizes = [2, 128], strides = [1, 1]} : vector<2x256xf32> to vector<2x128xf32>
    %c0_i32_266 = arith.constant 0 : i32
    %c0_i32_267 = arith.constant 0 : i32
    %c0_i32_268 = arith.constant 0 : i32
    %576 = tpu.memref_slice %arg8[%c0_i32_260, %c0_i32_266, %c0_i32_267, %c0_i32_268] : memref<2x8x2x128xf32, #tpu.memory_space<vmem>> -> memref<1x8x2x128xf32, #tpu.memory_space<vmem>>
    %577 = tpu.memref_squeeze %576 : memref<1x8x2x128xf32, #tpu.memory_space<vmem>> -> memref<8x2x128xf32, #tpu.memory_space<vmem>>
    %578 = arith.index_cast %c0_i32_262 : i32 to index
    %c0_269 = arith.constant 0 : index
    %c0_270 = arith.constant 0 : index
    %579 = vector.load %577[%578, %c0_269, %c0_270] : memref<8x2x128xf32, #tpu.memory_space<vmem>>, vector<1x2x128xf32>
    %580 = vector.shape_cast %579 : vector<1x2x128xf32> to vector<2x128xf32>
    %581 = vector.shape_cast %575 : vector<2x128xf32> to vector<1x2x128xf32>
    tpu.vector_store %577[%578, %c0_269, %c0_270], %581 {strides = array<i32>} : memref<8x2x128xf32, #tpu.memory_space<vmem>>, vector<1x2x128xf32>,
    %582 = vector.extract_strided_slice %574 {offsets = [0, 128], sizes = [2, 128], strides = [1, 1]} : vector<2x256xf32> to vector<2x128xf32>
    %c0_i32_271 = arith.constant 0 : i32
    %c0_i32_272 = arith.constant 0 : i32
    %c0_i32_273 = arith.constant 0 : i32
    %583 = tpu.memref_slice %arg8[%c1_i32_261, %c0_i32_271, %c0_i32_272, %c0_i32_273] : memref<2x8x2x128xf32, #tpu.memory_space<vmem>> -> memref<1x8x2x128xf32, #tpu.memory_space<vmem>>
    %584 = tpu.memref_squeeze %583 : memref<1x8x2x128xf32, #tpu.memory_space<vmem>> -> memref<8x2x128xf32, #tpu.memory_space<vmem>>
    %585 = arith.index_cast %c0_i32_262 : i32 to index
    %c0_274 = arith.constant 0 : index
    %c0_275 = arith.constant 0 : index
    %586 = vector.load %584[%585, %c0_274, %c0_275] : memref<8x2x128xf32, #tpu.memory_space<vmem>>, vector<1x2x128xf32>
    %587 = vector.shape_cast %586 : vector<1x2x128xf32> to vector<2x128xf32>
    %588 = vector.shape_cast %582 : vector<2x128xf32> to vector<1x2x128xf32>
    tpu.vector_store %584[%585, %c0_274, %c0_275], %588 {strides = array<i32>} : memref<8x2x128xf32, #tpu.memory_space<vmem>>, vector<1x2x128xf32>,
    %c1_i32_276 = arith.constant 1 : i32
    %589 = arith.index_cast %c1_i32_276 : i32 to index
    %c0_277 = arith.constant 0 : index
    %c0_278 = arith.constant 0 : index
    %590 = vector.load %arg7[%589, %c0_277, %c0_278] : memref<8x2x64xf32, #tpu.memory_space<vmem>>, vector<1x2x64xf32>
    %591 = vector.shape_cast %590 : vector<1x2x64xf32> to vector<2x64xf32>
    %592 = arith.truncf %591 : vector<2x64xf32> to vector<2x64xbf16>
    %cst_279 = arith.constant dense<0.000000e+00> : vector<2x256xf32>
    %593 = tpu.matmul %592, %565, %cst_279 {dimension_numbers = #tpu.dot_dimension_numbers<[1], [0], [0], [1], [0, 0, 1, 1], [], []>} : vector<2x64xbf16>, vector<64x256xbf16>, vector<2x256xf32> -> vector<2x256xf32>
    %594 = vector.broadcast %567 : vector<1x256xf32> to vector<2x256xf32>
    %595 = arith.addf %593, %594 : vector<2x256xf32>
    %596 = vector.extract_strided_slice %595 {offsets = [0, 0], sizes = [2, 128], strides = [1, 1]} : vector<2x256xf32> to vector<2x128xf32>
    %c0_i32_280 = arith.constant 0 : i32
    %c0_i32_281 = arith.constant 0 : i32
    %c0_i32_282 = arith.constant 0 : i32
    %597 = tpu.memref_slice %arg8[%c0_i32_260, %c0_i32_280, %c0_i32_281, %c0_i32_282] : memref<2x8x2x128xf32, #tpu.memory_space<vmem>> -> memref<1x8x2x128xf32, #tpu.memory_space<vmem>>
    %598 = tpu.memref_squeeze %597 : memref<1x8x2x128xf32, #tpu.memory_space<vmem>> -> memref<8x2x128xf32, #tpu.memory_space<vmem>>
    %599 = arith.index_cast %c1_i32_276 : i32 to index
    %c0_283 = arith.constant 0 : index
    %c0_284 = arith.constant 0 : index
    %600 = vector.load %598[%599, %c0_283, %c0_284] : memref<8x2x128xf32, #tpu.memory_space<vmem>>, vector<1x2x128xf32>
    %601 = vector.shape_cast %600 : vector<1x2x128xf32> to vector<2x128xf32>
    %602 = vector.shape_cast %596 : vector<2x128xf32> to vector<1x2x128xf32>
    tpu.vector_store %598[%599, %c0_283, %c0_284], %602 {strides = array<i32>} : memref<8x2x128xf32, #tpu.memory_space<vmem>>, vector<1x2x128xf32>,
    %603 = vector.extract_strided_slice %595 {offsets = [0, 128], sizes = [2, 128], strides = [1, 1]} : vector<2x256xf32> to vector<2x128xf32>
    %c0_i32_285 = arith.constant 0 : i32
    %c0_i32_286 = arith.constant 0 : i32
    %c0_i32_287 = arith.constant 0 : i32
    %604 = tpu.memref_slice %arg8[%c1_i32_261, %c0_i32_285, %c0_i32_286, %c0_i32_287] : memref<2x8x2x128xf32, #tpu.memory_space<vmem>> -> memref<1x8x2x128xf32, #tpu.memory_space<vmem>>
    %605 = tpu.memref_squeeze %604 : memref<1x8x2x128xf32, #tpu.memory_space<vmem>> -> memref<8x2x128xf32, #tpu.memory_space<vmem>>
    %606 = arith.index_cast %c1_i32_276 : i32 to index
    %c0_288 = arith.constant 0 : index
    %c0_289 = arith.constant 0 : index
    %607 = vector.load %605[%606, %c0_288, %c0_289] : memref<8x2x128xf32, #tpu.memory_space<vmem>>, vector<1x2x128xf32>
    %608 = vector.shape_cast %607 : vector<1x2x128xf32> to vector<2x128xf32>
    %609 = vector.shape_cast %603 : vector<2x128xf32> to vector<1x2x128xf32>
    tpu.vector_store %605[%606, %c0_288, %c0_289], %609 {strides = array<i32>} : memref<8x2x128xf32, #tpu.memory_space<vmem>>, vector<1x2x128xf32>,
    %c2_i32_290 = arith.constant 2 : i32
    %610 = arith.index_cast %c2_i32_290 : i32 to index
    %c0_291 = arith.constant 0 : index
    %c0_292 = arith.constant 0 : index
    %611 = vector.load %arg7[%610, %c0_291, %c0_292] : memref<8x2x64xf32, #tpu.memory_space<vmem>>, vector<1x2x64xf32>
    %612 = vector.shape_cast %611 : vector<1x2x64xf32> to vector<2x64xf32>
    %613 = arith.truncf %612 : vector<2x64xf32> to vector<2x64xbf16>
    %cst_293 = arith.constant dense<0.000000e+00> : vector<2x256xf32>
    %614 = tpu.matmul %613, %565, %cst_293 {dimension_numbers = #tpu.dot_dimension_numbers<[1], [0], [0], [1], [0, 0, 1, 1], [], []>} : vector<2x64xbf16>, vector<64x256xbf16>, vector<2x256xf32> -> vector<2x256xf32>
    %615 = vector.broadcast %567 : vector<1x256xf32> to vector<2x256xf32>
    %616 = arith.addf %614, %615 : vector<2x256xf32>
    %617 = vector.extract_strided_slice %616 {offsets = [0, 0], sizes = [2, 128], strides = [1, 1]} : vector<2x256xf32> to vector<2x128xf32>
    %c0_i32_294 = arith.constant 0 : i32
    %c0_i32_295 = arith.constant 0 : i32
    %c0_i32_296 = arith.constant 0 : i32
    %618 = tpu.memref_slice %arg8[%c0_i32_260, %c0_i32_294, %c0_i32_295, %c0_i32_296] : memref<2x8x2x128xf32, #tpu.memory_space<vmem>> -> memref<1x8x2x128xf32, #tpu.memory_space<vmem>>
    %619 = tpu.memref_squeeze %618 : memref<1x8x2x128xf32, #tpu.memory_space<vmem>> -> memref<8x2x128xf32, #tpu.memory_space<vmem>>
    %620 = arith.index_cast %c2_i32_290 : i32 to index
    %c0_297 = arith.constant 0 : index
    %c0_298 = arith.constant 0 : index
    %621 = vector.load %619[%620, %c0_297, %c0_298] : memref<8x2x128xf32, #tpu.memory_space<vmem>>, vector<1x2x128xf32>
    %622 = vector.shape_cast %621 : vector<1x2x128xf32> to vector<2x128xf32>
    %623 = vector.shape_cast %617 : vector<2x128xf32> to vector<1x2x128xf32>
    tpu.vector_store %619[%620, %c0_297, %c0_298], %623 {strides = array<i32>} : memref<8x2x128xf32, #tpu.memory_space<vmem>>, vector<1x2x128xf32>,
    %624 = vector.extract_strided_slice %616 {offsets = [0, 128], sizes = [2, 128], strides = [1, 1]} : vector<2x256xf32> to vector<2x128xf32>
    %c0_i32_299 = arith.constant 0 : i32
    %c0_i32_300 = arith.constant 0 : i32
    %c0_i32_301 = arith.constant 0 : i32
    %625 = tpu.memref_slice %arg8[%c1_i32_261, %c0_i32_299, %c0_i32_300, %c0_i32_301] : memref<2x8x2x128xf32, #tpu.memory_space<vmem>> -> memref<1x8x2x128xf32, #tpu.memory_space<vmem>>
    %626 = tpu.memref_squeeze %625 : memref<1x8x2x128xf32, #tpu.memory_space<vmem>> -> memref<8x2x128xf32, #tpu.memory_space<vmem>>
    %627 = arith.index_cast %c2_i32_290 : i32 to index
    %c0_302 = arith.constant 0 : index
    %c0_303 = arith.constant 0 : index
    %628 = vector.load %626[%627, %c0_302, %c0_303] : memref<8x2x128xf32, #tpu.memory_space<vmem>>, vector<1x2x128xf32>
    %629 = vector.shape_cast %628 : vector<1x2x128xf32> to vector<2x128xf32>
    %630 = vector.shape_cast %624 : vector<2x128xf32> to vector<1x2x128xf32>
    tpu.vector_store %626[%627, %c0_302, %c0_303], %630 {strides = array<i32>} : memref<8x2x128xf32, #tpu.memory_space<vmem>>, vector<1x2x128xf32>,
    %c3_i32_304 = arith.constant 3 : i32
    %631 = arith.index_cast %c3_i32_304 : i32 to index
    %c0_305 = arith.constant 0 : index
    %c0_306 = arith.constant 0 : index
    %632 = vector.load %arg7[%631, %c0_305, %c0_306] : memref<8x2x64xf32, #tpu.memory_space<vmem>>, vector<1x2x64xf32>
    %633 = vector.shape_cast %632 : vector<1x2x64xf32> to vector<2x64xf32>
    %634 = arith.truncf %633 : vector<2x64xf32> to vector<2x64xbf16>
    %cst_307 = arith.constant dense<0.000000e+00> : vector<2x256xf32>
    %635 = tpu.matmul %634, %565, %cst_307 {dimension_numbers = #tpu.dot_dimension_numbers<[1], [0], [0], [1], [0, 0, 1, 1], [], []>} : vector<2x64xbf16>, vector<64x256xbf16>, vector<2x256xf32> -> vector<2x256xf32>
    %636 = vector.broadcast %567 : vector<1x256xf32> to vector<2x256xf32>
    %637 = arith.addf %635, %636 : vector<2x256xf32>
    %638 = vector.extract_strided_slice %637 {offsets = [0, 0], sizes = [2, 128], strides = [1, 1]} : vector<2x256xf32> to vector<2x128xf32>
    %c0_i32_308 = arith.constant 0 : i32
    %c0_i32_309 = arith.constant 0 : i32
    %c0_i32_310 = arith.constant 0 : i32
    %639 = tpu.memref_slice %arg8[%c0_i32_260, %c0_i32_308, %c0_i32_309, %c0_i32_310] : memref<2x8x2x128xf32, #tpu.memory_space<vmem>> -> memref<1x8x2x128xf32, #tpu.memory_space<vmem>>
    %640 = tpu.memref_squeeze %639 : memref<1x8x2x128xf32, #tpu.memory_space<vmem>> -> memref<8x2x128xf32, #tpu.memory_space<vmem>>
    %641 = arith.index_cast %c3_i32_304 : i32 to index
    %c0_311 = arith.constant 0 : index
    %c0_312 = arith.constant 0 : index
    %642 = vector.load %640[%641, %c0_311, %c0_312] : memref<8x2x128xf32, #tpu.memory_space<vmem>>, vector<1x2x128xf32>
    %643 = vector.shape_cast %642 : vector<1x2x128xf32> to vector<2x128xf32>
    %644 = vector.shape_cast %638 : vector<2x128xf32> to vector<1x2x128xf32>
    tpu.vector_store %640[%641, %c0_311, %c0_312], %644 {strides = array<i32>} : memref<8x2x128xf32, #tpu.memory_space<vmem>>, vector<1x2x128xf32>,
    %645 = vector.extract_strided_slice %637 {offsets = [0, 128], sizes = [2, 128], strides = [1, 1]} : vector<2x256xf32> to vector<2x128xf32>
    %c0_i32_313 = arith.constant 0 : i32
    %c0_i32_314 = arith.constant 0 : i32
    %c0_i32_315 = arith.constant 0 : i32
    %646 = tpu.memref_slice %arg8[%c1_i32_261, %c0_i32_313, %c0_i32_314, %c0_i32_315] : memref<2x8x2x128xf32, #tpu.memory_space<vmem>> -> memref<1x8x2x128xf32, #tpu.memory_space<vmem>>
    %647 = tpu.memref_squeeze %646 : memref<1x8x2x128xf32, #tpu.memory_space<vmem>> -> memref<8x2x128xf32, #tpu.memory_space<vmem>>
    %648 = arith.index_cast %c3_i32_304 : i32 to index
    %c0_316 = arith.constant 0 : index
    %c0_317 = arith.constant 0 : index
    %649 = vector.load %647[%648, %c0_316, %c0_317] : memref<8x2x128xf32, #tpu.memory_space<vmem>>, vector<1x2x128xf32>
    %650 = vector.shape_cast %649 : vector<1x2x128xf32> to vector<2x128xf32>
    %651 = vector.shape_cast %645 : vector<2x128xf32> to vector<1x2x128xf32>
    tpu.vector_store %647[%648, %c0_316, %c0_317], %651 {strides = array<i32>} : memref<8x2x128xf32, #tpu.memory_space<vmem>>, vector<1x2x128xf32>,
    %c4_i32_318 = arith.constant 4 : i32
    %652 = arith.index_cast %c4_i32_318 : i32 to index
    %c0_319 = arith.constant 0 : index
    %c0_320 = arith.constant 0 : index
    %653 = vector.load %arg7[%652, %c0_319, %c0_320] : memref<8x2x64xf32, #tpu.memory_space<vmem>>, vector<1x2x64xf32>
    %654 = vector.shape_cast %653 : vector<1x2x64xf32> to vector<2x64xf32>
    %655 = arith.truncf %654 : vector<2x64xf32> to vector<2x64xbf16>
    %cst_321 = arith.constant dense<0.000000e+00> : vector<2x256xf32>
    %656 = tpu.matmul %655, %565, %cst_321 {dimension_numbers = #tpu.dot_dimension_numbers<[1], [0], [0], [1], [0, 0, 1, 1], [], []>} : vector<2x64xbf16>, vector<64x256xbf16>, vector<2x256xf32> -> vector<2x256xf32>
    %657 = vector.broadcast %567 : vector<1x256xf32> to vector<2x256xf32>
    %658 = arith.addf %656, %657 : vector<2x256xf32>
    %659 = vector.extract_strided_slice %658 {offsets = [0, 0], sizes = [2, 128], strides = [1, 1]} : vector<2x256xf32> to vector<2x128xf32>
    %c0_i32_322 = arith.constant 0 : i32
    %c0_i32_323 = arith.constant 0 : i32
    %c0_i32_324 = arith.constant 0 : i32
    %660 = tpu.memref_slice %arg8[%c0_i32_260, %c0_i32_322, %c0_i32_323, %c0_i32_324] : memref<2x8x2x128xf32, #tpu.memory_space<vmem>> -> memref<1x8x2x128xf32, #tpu.memory_space<vmem>>
    %661 = tpu.memref_squeeze %660 : memref<1x8x2x128xf32, #tpu.memory_space<vmem>> -> memref<8x2x128xf32, #tpu.memory_space<vmem>>
    %662 = arith.index_cast %c4_i32_318 : i32 to index
    %c0_325 = arith.constant 0 : index
    %c0_326 = arith.constant 0 : index
    %663 = vector.load %661[%662, %c0_325, %c0_326] : memref<8x2x128xf32, #tpu.memory_space<vmem>>, vector<1x2x128xf32>
    %664 = vector.shape_cast %663 : vector<1x2x128xf32> to vector<2x128xf32>
    %665 = vector.shape_cast %659 : vector<2x128xf32> to vector<1x2x128xf32>
    tpu.vector_store %661[%662, %c0_325, %c0_326], %665 {strides = array<i32>} : memref<8x2x128xf32, #tpu.memory_space<vmem>>, vector<1x2x128xf32>,
    %666 = vector.extract_strided_slice %658 {offsets = [0, 128], sizes = [2, 128], strides = [1, 1]} : vector<2x256xf32> to vector<2x128xf32>
    %c0_i32_327 = arith.constant 0 : i32
    %c0_i32_328 = arith.constant 0 : i32
    %c0_i32_329 = arith.constant 0 : i32
    %667 = tpu.memref_slice %arg8[%c1_i32_261, %c0_i32_327, %c0_i32_328, %c0_i32_329] : memref<2x8x2x128xf32, #tpu.memory_space<vmem>> -> memref<1x8x2x128xf32, #tpu.memory_space<vmem>>
    %668 = tpu.memref_squeeze %667 : memref<1x8x2x128xf32, #tpu.memory_space<vmem>> -> memref<8x2x128xf32, #tpu.memory_space<vmem>>
    %669 = arith.index_cast %c4_i32_318 : i32 to index
    %c0_330 = arith.constant 0 : index
    %c0_331 = arith.constant 0 : index
    %670 = vector.load %668[%669, %c0_330, %c0_331] : memref<8x2x128xf32, #tpu.memory_space<vmem>>, vector<1x2x128xf32>
    %671 = vector.shape_cast %670 : vector<1x2x128xf32> to vector<2x128xf32>
    %672 = vector.shape_cast %666 : vector<2x128xf32> to vector<1x2x128xf32>
    tpu.vector_store %668[%669, %c0_330, %c0_331], %672 {strides = array<i32>} : memref<8x2x128xf32, #tpu.memory_space<vmem>>, vector<1x2x128xf32>,
    %c5_i32_332 = arith.constant 5 : i32
    %673 = arith.index_cast %c5_i32_332 : i32 to index
    %c0_333 = arith.constant 0 : index
    %c0_334 = arith.constant 0 : index
    %674 = vector.load %arg7[%673, %c0_333, %c0_334] : memref<8x2x64xf32, #tpu.memory_space<vmem>>, vector<1x2x64xf32>
    %675 = vector.shape_cast %674 : vector<1x2x64xf32> to vector<2x64xf32>
    %676 = arith.truncf %675 : vector<2x64xf32> to vector<2x64xbf16>
    %cst_335 = arith.constant dense<0.000000e+00> : vector<2x256xf32>
    %677 = tpu.matmul %676, %565, %cst_335 {dimension_numbers = #tpu.dot_dimension_numbers<[1], [0], [0], [1], [0, 0, 1, 1], [], []>} : vector<2x64xbf16>, vector<64x256xbf16>, vector<2x256xf32> -> vector<2x256xf32>
    %678 = vector.broadcast %567 : vector<1x256xf32> to vector<2x256xf32>
    %679 = arith.addf %677, %678 : vector<2x256xf32>
    %680 = vector.extract_strided_slice %679 {offsets = [0, 0], sizes = [2, 128], strides = [1, 1]} : vector<2x256xf32> to vector<2x128xf32>
    %c0_i32_336 = arith.constant 0 : i32
    %c0_i32_337 = arith.constant 0 : i32
    %c0_i32_338 = arith.constant 0 : i32
    %681 = tpu.memref_slice %arg8[%c0_i32_260, %c0_i32_336, %c0_i32_337, %c0_i32_338] : memref<2x8x2x128xf32, #tpu.memory_space<vmem>> -> memref<1x8x2x128xf32, #tpu.memory_space<vmem>>
    %682 = tpu.memref_squeeze %681 : memref<1x8x2x128xf32, #tpu.memory_space<vmem>> -> memref<8x2x128xf32, #tpu.memory_space<vmem>>
    %683 = arith.index_cast %c5_i32_332 : i32 to index
    %c0_339 = arith.constant 0 : index
    %c0_340 = arith.constant 0 : index
    %684 = vector.load %682[%683, %c0_339, %c0_340] : memref<8x2x128xf32, #tpu.memory_space<vmem>>, vector<1x2x128xf32>
    %685 = vector.shape_cast %684 : vector<1x2x128xf32> to vector<2x128xf32>
    %686 = vector.shape_cast %680 : vector<2x128xf32> to vector<1x2x128xf32>
    tpu.vector_store %682[%683, %c0_339, %c0_340], %686 {strides = array<i32>} : memref<8x2x128xf32, #tpu.memory_space<vmem>>, vector<1x2x128xf32>,
    %687 = vector.extract_strided_slice %679 {offsets = [0, 128], sizes = [2, 128], strides = [1, 1]} : vector<2x256xf32> to vector<2x128xf32>
    %c0_i32_341 = arith.constant 0 : i32
    %c0_i32_342 = arith.constant 0 : i32
    %c0_i32_343 = arith.constant 0 : i32
    %688 = tpu.memref_slice %arg8[%c1_i32_261, %c0_i32_341, %c0_i32_342, %c0_i32_343] : memref<2x8x2x128xf32, #tpu.memory_space<vmem>> -> memref<1x8x2x128xf32, #tpu.memory_space<vmem>>
    %689 = tpu.memref_squeeze %688 : memref<1x8x2x128xf32, #tpu.memory_space<vmem>> -> memref<8x2x128xf32, #tpu.memory_space<vmem>>
    %690 = arith.index_cast %c5_i32_332 : i32 to index
    %c0_344 = arith.constant 0 : index
    %c0_345 = arith.constant 0 : index
    %691 = vector.load %689[%690, %c0_344, %c0_345] : memref<8x2x128xf32, #tpu.memory_space<vmem>>, vector<1x2x128xf32>
    %692 = vector.shape_cast %691 : vector<1x2x128xf32> to vector<2x128xf32>
    %693 = vector.shape_cast %687 : vector<2x128xf32> to vector<1x2x128xf32>
    tpu.vector_store %689[%690, %c0_344, %c0_345], %693 {strides = array<i32>} : memref<8x2x128xf32, #tpu.memory_space<vmem>>, vector<1x2x128xf32>,
    %c6_i32_346 = arith.constant 6 : i32
    %694 = arith.index_cast %c6_i32_346 : i32 to index
    %c0_347 = arith.constant 0 : index
    %c0_348 = arith.constant 0 : index
    %695 = vector.load %arg7[%694, %c0_347, %c0_348] : memref<8x2x64xf32, #tpu.memory_space<vmem>>, vector<1x2x64xf32>
    %696 = vector.shape_cast %695 : vector<1x2x64xf32> to vector<2x64xf32>
    %697 = arith.truncf %696 : vector<2x64xf32> to vector<2x64xbf16>
    %cst_349 = arith.constant dense<0.000000e+00> : vector<2x256xf32>
    %698 = tpu.matmul %697, %565, %cst_349 {dimension_numbers = #tpu.dot_dimension_numbers<[1], [0], [0], [1], [0, 0, 1, 1], [], []>} : vector<2x64xbf16>, vector<64x256xbf16>, vector<2x256xf32> -> vector<2x256xf32>
    %699 = vector.broadcast %567 : vector<1x256xf32> to vector<2x256xf32>
    %700 = arith.addf %698, %699 : vector<2x256xf32>
    %701 = vector.extract_strided_slice %700 {offsets = [0, 0], sizes = [2, 128], strides = [1, 1]} : vector<2x256xf32> to vector<2x128xf32>
    %c0_i32_350 = arith.constant 0 : i32
    %c0_i32_351 = arith.constant 0 : i32
    %c0_i32_352 = arith.constant 0 : i32
    %702 = tpu.memref_slice %arg8[%c0_i32_260, %c0_i32_350, %c0_i32_351, %c0_i32_352] : memref<2x8x2x128xf32, #tpu.memory_space<vmem>> -> memref<1x8x2x128xf32, #tpu.memory_space<vmem>>
    %703 = tpu.memref_squeeze %702 : memref<1x8x2x128xf32, #tpu.memory_space<vmem>> -> memref<8x2x128xf32, #tpu.memory_space<vmem>>
    %704 = arith.index_cast %c6_i32_346 : i32 to index
    %c0_353 = arith.constant 0 : index
    %c0_354 = arith.constant 0 : index
    %705 = vector.load %703[%704, %c0_353, %c0_354] : memref<8x2x128xf32, #tpu.memory_space<vmem>>, vector<1x2x128xf32>
    %706 = vector.shape_cast %705 : vector<1x2x128xf32> to vector<2x128xf32>
    %707 = vector.shape_cast %701 : vector<2x128xf32> to vector<1x2x128xf32>
    tpu.vector_store %703[%704, %c0_353, %c0_354], %707 {strides = array<i32>} : memref<8x2x128xf32, #tpu.memory_space<vmem>>, vector<1x2x128xf32>,
    %708 = vector.extract_strided_slice %700 {offsets = [0, 128], sizes = [2, 128], strides = [1, 1]} : vector<2x256xf32> to vector<2x128xf32>
    %c0_i32_355 = arith.constant 0 : i32
    %c0_i32_356 = arith.constant 0 : i32
    %c0_i32_357 = arith.constant 0 : i32
    %709 = tpu.memref_slice %arg8[%c1_i32_261, %c0_i32_355, %c0_i32_356, %c0_i32_357] : memref<2x8x2x128xf32, #tpu.memory_space<vmem>> -> memref<1x8x2x128xf32, #tpu.memory_space<vmem>>
    %710 = tpu.memref_squeeze %709 : memref<1x8x2x128xf32, #tpu.memory_space<vmem>> -> memref<8x2x128xf32, #tpu.memory_space<vmem>>
    %711 = arith.index_cast %c6_i32_346 : i32 to index
    %c0_358 = arith.constant 0 : index
    %c0_359 = arith.constant 0 : index
    %712 = vector.load %710[%711, %c0_358, %c0_359] : memref<8x2x128xf32, #tpu.memory_space<vmem>>, vector<1x2x128xf32>
    %713 = vector.shape_cast %712 : vector<1x2x128xf32> to vector<2x128xf32>
    %714 = vector.shape_cast %708 : vector<2x128xf32> to vector<1x2x128xf32>
    tpu.vector_store %710[%711, %c0_358, %c0_359], %714 {strides = array<i32>} : memref<8x2x128xf32, #tpu.memory_space<vmem>>, vector<1x2x128xf32>,
    %c7_i32_360 = arith.constant 7 : i32
    %715 = arith.index_cast %c7_i32_360 : i32 to index
    %c0_361 = arith.constant 0 : index
    %c0_362 = arith.constant 0 : index
    %716 = vector.load %arg7[%715, %c0_361, %c0_362] : memref<8x2x64xf32, #tpu.memory_space<vmem>>, vector<1x2x64xf32>
    %717 = vector.shape_cast %716 : vector<1x2x64xf32> to vector<2x64xf32>
    %718 = arith.truncf %717 : vector<2x64xf32> to vector<2x64xbf16>
    %cst_363 = arith.constant dense<0.000000e+00> : vector<2x256xf32>
    %719 = tpu.matmul %718, %565, %cst_363 {dimension_numbers = #tpu.dot_dimension_numbers<[1], [0], [0], [1], [0, 0, 1, 1], [], []>} : vector<2x64xbf16>, vector<64x256xbf16>, vector<2x256xf32> -> vector<2x256xf32>
    %720 = vector.broadcast %567 : vector<1x256xf32> to vector<2x256xf32>
    %721 = arith.addf %719, %720 : vector<2x256xf32>
    %722 = vector.extract_strided_slice %721 {offsets = [0, 0], sizes = [2, 128], strides = [1, 1]} : vector<2x256xf32> to vector<2x128xf32>
    %c0_i32_364 = arith.constant 0 : i32
    %c0_i32_365 = arith.constant 0 : i32
    %c0_i32_366 = arith.constant 0 : i32
    %723 = tpu.memref_slice %arg8[%c0_i32_260, %c0_i32_364, %c0_i32_365, %c0_i32_366] : memref<2x8x2x128xf32, #tpu.memory_space<vmem>> -> memref<1x8x2x128xf32, #tpu.memory_space<vmem>>
    %724 = tpu.memref_squeeze %723 : memref<1x8x2x128xf32, #tpu.memory_space<vmem>> -> memref<8x2x128xf32, #tpu.memory_space<vmem>>
    %725 = arith.index_cast %c7_i32_360 : i32 to index
    %c0_367 = arith.constant 0 : index
    %c0_368 = arith.constant 0 : index
    %726 = vector.load %724[%725, %c0_367, %c0_368] : memref<8x2x128xf32, #tpu.memory_space<vmem>>, vector<1x2x128xf32>
    %727 = vector.shape_cast %726 : vector<1x2x128xf32> to vector<2x128xf32>
    %728 = vector.shape_cast %722 : vector<2x128xf32> to vector<1x2x128xf32>
    tpu.vector_store %724[%725, %c0_367, %c0_368], %728 {strides = array<i32>} : memref<8x2x128xf32, #tpu.memory_space<vmem>>, vector<1x2x128xf32>,
    %729 = vector.extract_strided_slice %721 {offsets = [0, 128], sizes = [2, 128], strides = [1, 1]} : vector<2x256xf32> to vector<2x128xf32>
    %c0_i32_369 = arith.constant 0 : i32
    %c0_i32_370 = arith.constant 0 : i32
    %c0_i32_371 = arith.constant 0 : i32
    %730 = tpu.memref_slice %arg8[%c1_i32_261, %c0_i32_369, %c0_i32_370, %c0_i32_371] : memref<2x8x2x128xf32, #tpu.memory_space<vmem>> -> memref<1x8x2x128xf32, #tpu.memory_space<vmem>>
    %731 = tpu.memref_squeeze %730 : memref<1x8x2x128xf32, #tpu.memory_space<vmem>> -> memref<8x2x128xf32, #tpu.memory_space<vmem>>
    %732 = arith.index_cast %c7_i32_360 : i32 to index
    %c0_372 = arith.constant 0 : index
    %c0_373 = arith.constant 0 : index
    %733 = vector.load %731[%732, %c0_372, %c0_373] : memref<8x2x128xf32, #tpu.memory_space<vmem>>, vector<1x2x128xf32>
    %734 = vector.shape_cast %733 : vector<1x2x128xf32> to vector<2x128xf32>
    %735 = vector.shape_cast %729 : vector<2x128xf32> to vector<1x2x128xf32>
    tpu.vector_store %731[%732, %c0_372, %c0_373], %735 {strides = array<i32>} : memref<8x2x128xf32, #tpu.memory_space<vmem>>, vector<1x2x128xf32>,
    %c8_i32_374 = arith.constant 8 : i32
    %c1_375 = arith.constant 1 : index
    %c0_376 = arith.constant 0 : index
    %c0_377 = arith.constant 0 : index
    %c0_378 = arith.constant 0 : index
    %736 = vector.load %arg1[%c1_375, %c0_376, %c0_377, %c0_378] : memref<2x2x32x128xbf16, #tpu.memory_space<vmem>>, vector<1x1x32x128xbf16>
    %737 = vector.shape_cast %736 : vector<1x1x32x128xbf16> to vector<32x128xbf16>
    %c1_379 = arith.constant 1 : index
    %c1_380 = arith.constant 1 : index
    %c0_381 = arith.constant 0 : index
    %c0_382 = arith.constant 0 : index
    %738 = vector.load %arg1[%c1_379, %c1_380, %c0_381, %c0_382] : memref<2x2x32x128xbf16, #tpu.memory_space<vmem>>, vector<1x1x32x128xbf16>
    %739 = vector.shape_cast %738 : vector<1x1x32x128xbf16> to vector<32x128xbf16>
    %c1_383 = arith.constant 1 : index
    %c0_384 = arith.constant 0 : index
    %c0_385 = arith.constant 0 : index
    %c0_386 = arith.constant 0 : index
    %740 = vector.load %arg2[%c1_383, %c0_384, %c0_385, %c0_386] : memref<2x2x2x32xf32, #tpu.memory_space<vmem>>, vector<1x1x2x32xf32>
    %741 = vector.shape_cast %740 : vector<1x1x2x32xf32> to vector<2x32xf32>
    %c1_387 = arith.constant 1 : index
    %c0_388 = arith.constant 0 : index
    %c0_389 = arith.constant 0 : index
    %c0_390 = arith.constant 0 : index
    %742 = vector.load %arg3[%c1_387, %c0_388, %c0_389, %c0_390] : memref<2x2x2x32xf32, #tpu.memory_space<vmem>>, vector<1x1x2x32xf32>
    %743 = vector.shape_cast %742 : vector<1x1x2x32xf32> to vector<2x32xf32>
    %c1_391 = arith.constant 1 : index
    %c1_392 = arith.constant 1 : index
    %c0_393 = arith.constant 0 : index
    %c0_394 = arith.constant 0 : index
    %744 = vector.load %arg2[%c1_391, %c1_392, %c0_393, %c0_394] : memref<2x2x2x32xf32, #tpu.memory_space<vmem>>, vector<1x1x2x32xf32>
    %745 = vector.shape_cast %744 : vector<1x1x2x32xf32> to vector<2x32xf32>
    %c1_395 = arith.constant 1 : index
    %c1_396 = arith.constant 1 : index
    %c0_397 = arith.constant 0 : index
    %c0_398 = arith.constant 0 : index
    %746 = vector.load %arg3[%c1_395, %c1_396, %c0_397, %c0_398] : memref<2x2x2x32xf32, #tpu.memory_space<vmem>>, vector<1x1x2x32xf32>
    %747 = vector.shape_cast %746 : vector<1x1x2x32xf32> to vector<2x32xf32>
    %c0_i32_399 = arith.constant 0 : i32
    %c1_i32_400 = arith.constant 1 : i32
    %c0_i32_401 = arith.constant 0 : i32
    %c0_i32_402 = arith.constant 0 : i32
    %c0_i32_403 = arith.constant 0 : i32
    %c0_i32_404 = arith.constant 0 : i32
    %748 = tpu.memref_slice %arg8[%c0_i32_399, %c0_i32_402, %c0_i32_403, %c0_i32_404] : memref<2x8x2x128xf32, #tpu.memory_space<vmem>> -> memref<1x8x2x128xf32, #tpu.memory_space<vmem>>
    %749 = tpu.memref_squeeze %748 : memref<1x8x2x128xf32, #tpu.memory_space<vmem>> -> memref<8x2x128xf32, #tpu.memory_space<vmem>>
    %750 = arith.index_cast %c0_i32_401 : i32 to index
    %c0_405 = arith.constant 0 : index
    %c0_406 = arith.constant 0 : index
    %751 = vector.load %749[%750, %c0_405, %c0_406] : memref<8x2x128xf32, #tpu.memory_space<vmem>>, vector<1x2x128xf32>
    %752 = vector.shape_cast %751 : vector<1x2x128xf32> to vector<2x128xf32>
    %753 = arith.truncf %741 : vector<2x32xf32> to vector<2x32xbf16>
    %cst_407 = arith.constant dense<0.000000e+00> : vector<2x128xf32>
    %754 = tpu.matmul %753, %737, %cst_407 {dimension_numbers = #tpu.dot_dimension_numbers<[1], [0], [0], [1], [0, 0, 1, 1], [], []>} : vector<2x32xbf16>, vector<32x128xbf16>, vector<2x128xf32> -> vector<2x128xf32>
    %755 = arith.addf %752, %754 : vector<2x128xf32>
    %756 = math.tanh %755 : vector<2x128xf32>
    %757 = vector.extract_strided_slice %756 {offsets = [0, 0], sizes = [2, 32], strides = [1, 1]} : vector<2x128xf32> to vector<2x32xf32>
    %cst_408 = arith.constant 5.000000e-01 : f32
    %758 = vector.broadcast %cst_408 : f32 to vector<2x32xf32>
    %759 = arith.mulf %758, %757 : vector<2x32xf32>
    %cst_409 = arith.constant 5.000000e-01 : f32
    %760 = vector.broadcast %cst_409 : f32 to vector<2x32xf32>
    %761 = arith.addf %760, %759 : vector<2x32xf32>
    %762 = vector.extract_strided_slice %756 {offsets = [0, 32], sizes = [2, 32], strides = [1, 1]} : vector<2x128xf32> to vector<2x32xf32>
    %cst_410 = arith.constant 5.000000e-01 : f32
    %763 = vector.broadcast %cst_410 : f32 to vector<2x32xf32>
    %764 = arith.mulf %763, %762 : vector<2x32xf32>
    %cst_411 = arith.constant 5.000000e-01 : f32
    %765 = vector.broadcast %cst_411 : f32 to vector<2x32xf32>
    %766 = arith.addf %765, %764 : vector<2x32xf32>
    %767 = vector.extract_strided_slice %756 {offsets = [0, 64], sizes = [2, 32], strides = [1, 1]} : vector<2x128xf32> to vector<2x32xf32>
    %768 = vector.extract_strided_slice %756 {offsets = [0, 96], sizes = [2, 32], strides = [1, 1]} : vector<2x128xf32> to vector<2x32xf32>
    %cst_412 = arith.constant 5.000000e-01 : f32
    %769 = vector.broadcast %cst_412 : f32 to vector<2x32xf32>
    %770 = arith.mulf %769, %768 : vector<2x32xf32>
    %cst_413 = arith.constant 5.000000e-01 : f32
    %771 = vector.broadcast %cst_413 : f32 to vector<2x32xf32>
    %772 = arith.addf %771, %770 : vector<2x32xf32>
    %773 = arith.mulf %766, %743 : vector<2x32xf32>
    %774 = arith.mulf %761, %767 : vector<2x32xf32>
    %775 = arith.addf %773, %774 : vector<2x32xf32>
    %776 = math.tanh %775 : vector<2x32xf32>
    %777 = arith.mulf %772, %776 : vector<2x32xf32>
    %778 = arith.index_cast %c0_i32_401 : i32 to index
    %c0_414 = arith.constant 0 : index
    %c0_415 = arith.constant 0 : index
    %779 = vector.load %arg6[%778, %c0_414, %c0_415] : memref<8x2x64xf32, #tpu.memory_space<vmem>>, vector<1x2x32xf32>
    %780 = vector.shape_cast %779 : vector<1x2x32xf32> to vector<2x32xf32>
    %781 = vector.shape_cast %777 : vector<2x32xf32> to vector<1x2x32xf32>
    tpu.vector_store %arg6[%778, %c0_414, %c0_415], %781 {strides = array<i32>} : memref<8x2x64xf32, #tpu.memory_space<vmem>>, vector<1x2x32xf32>,
    %c7_i32_416 = arith.constant 7 : i32
    %782 = arith.subi %c7_i32_416, %c0_i32_401 : i32
    %c0_i32_417 = arith.constant 0 : i32
    %c0_i32_418 = arith.constant 0 : i32
    %c0_i32_419 = arith.constant 0 : i32
    %783 = tpu.memref_slice %arg8[%c1_i32_400, %c0_i32_417, %c0_i32_418, %c0_i32_419] : memref<2x8x2x128xf32, #tpu.memory_space<vmem>> -> memref<1x8x2x128xf32, #tpu.memory_space<vmem>>
    %784 = tpu.memref_squeeze %783 : memref<1x8x2x128xf32, #tpu.memory_space<vmem>> -> memref<8x2x128xf32, #tpu.memory_space<vmem>>
    %785 = arith.index_cast %782 : i32 to index
    %c0_420 = arith.constant 0 : index
    %c0_421 = arith.constant 0 : index
    %786 = vector.load %784[%785, %c0_420, %c0_421] : memref<8x2x128xf32, #tpu.memory_space<vmem>>, vector<1x2x128xf32>
    %787 = vector.shape_cast %786 : vector<1x2x128xf32> to vector<2x128xf32>
    %788 = arith.truncf %745 : vector<2x32xf32> to vector<2x32xbf16>
    %cst_422 = arith.constant dense<0.000000e+00> : vector<2x128xf32>
    %789 = tpu.matmul %788, %739, %cst_422 {dimension_numbers = #tpu.dot_dimension_numbers<[1], [0], [0], [1], [0, 0, 1, 1], [], []>} : vector<2x32xbf16>, vector<32x128xbf16>, vector<2x128xf32> -> vector<2x128xf32>
    %790 = arith.addf %787, %789 : vector<2x128xf32>
    %791 = math.tanh %790 : vector<2x128xf32>
    %792 = vector.extract_strided_slice %791 {offsets = [0, 0], sizes = [2, 32], strides = [1, 1]} : vector<2x128xf32> to vector<2x32xf32>
    %cst_423 = arith.constant 5.000000e-01 : f32
    %793 = vector.broadcast %cst_423 : f32 to vector<2x32xf32>
    %794 = arith.mulf %793, %792 : vector<2x32xf32>
    %cst_424 = arith.constant 5.000000e-01 : f32
    %795 = vector.broadcast %cst_424 : f32 to vector<2x32xf32>
    %796 = arith.addf %795, %794 : vector<2x32xf32>
    %797 = vector.extract_strided_slice %791 {offsets = [0, 32], sizes = [2, 32], strides = [1, 1]} : vector<2x128xf32> to vector<2x32xf32>
    %cst_425 = arith.constant 5.000000e-01 : f32
    %798 = vector.broadcast %cst_425 : f32 to vector<2x32xf32>
    %799 = arith.mulf %798, %797 : vector<2x32xf32>
    %cst_426 = arith.constant 5.000000e-01 : f32
    %800 = vector.broadcast %cst_426 : f32 to vector<2x32xf32>
    %801 = arith.addf %800, %799 : vector<2x32xf32>
    %802 = vector.extract_strided_slice %791 {offsets = [0, 64], sizes = [2, 32], strides = [1, 1]} : vector<2x128xf32> to vector<2x32xf32>
    %803 = vector.extract_strided_slice %791 {offsets = [0, 96], sizes = [2, 32], strides = [1, 1]} : vector<2x128xf32> to vector<2x32xf32>
    %cst_427 = arith.constant 5.000000e-01 : f32
    %804 = vector.broadcast %cst_427 : f32 to vector<2x32xf32>
    %805 = arith.mulf %804, %803 : vector<2x32xf32>
    %cst_428 = arith.constant 5.000000e-01 : f32
    %806 = vector.broadcast %cst_428 : f32 to vector<2x32xf32>
    %807 = arith.addf %806, %805 : vector<2x32xf32>
    %808 = arith.mulf %801, %747 : vector<2x32xf32>
    %809 = arith.mulf %796, %802 : vector<2x32xf32>
    %810 = arith.addf %808, %809 : vector<2x32xf32>
    %811 = math.tanh %810 : vector<2x32xf32>
    %812 = arith.mulf %807, %811 : vector<2x32xf32>
    %813 = arith.index_cast %782 : i32 to index
    %c0_429 = arith.constant 0 : index
    %c32_430 = arith.constant 32 : index
    %814 = vector.load %arg6[%813, %c0_429, %c32_430] : memref<8x2x64xf32, #tpu.memory_space<vmem>>, vector<1x2x32xf32>
    %815 = vector.shape_cast %814 : vector<1x2x32xf32> to vector<2x32xf32>
    %816 = vector.shape_cast %812 : vector<2x32xf32> to vector<1x2x32xf32>
    tpu.vector_store %arg6[%813, %c0_429, %c32_430], %816 {strides = array<i32>} : memref<8x2x64xf32, #tpu.memory_space<vmem>>, vector<1x2x32xf32>,
    %c1_i32_431 = arith.constant 1 : i32
    %c0_i32_432 = arith.constant 0 : i32
    %c0_i32_433 = arith.constant 0 : i32
    %c0_i32_434 = arith.constant 0 : i32
    %817 = tpu.memref_slice %arg8[%c0_i32_399, %c0_i32_432, %c0_i32_433, %c0_i32_434] : memref<2x8x2x128xf32, #tpu.memory_space<vmem>> -> memref<1x8x2x128xf32, #tpu.memory_space<vmem>>
    %818 = tpu.memref_squeeze %817 : memref<1x8x2x128xf32, #tpu.memory_space<vmem>> -> memref<8x2x128xf32, #tpu.memory_space<vmem>>
    %819 = arith.index_cast %c1_i32_431 : i32 to index
    %c0_435 = arith.constant 0 : index
    %c0_436 = arith.constant 0 : index
    %820 = vector.load %818[%819, %c0_435, %c0_436] : memref<8x2x128xf32, #tpu.memory_space<vmem>>, vector<1x2x128xf32>
    %821 = vector.shape_cast %820 : vector<1x2x128xf32> to vector<2x128xf32>
    %822 = arith.truncf %777 : vector<2x32xf32> to vector<2x32xbf16>
    %cst_437 = arith.constant dense<0.000000e+00> : vector<2x128xf32>
    %823 = tpu.matmul %822, %737, %cst_437 {dimension_numbers = #tpu.dot_dimension_numbers<[1], [0], [0], [1], [0, 0, 1, 1], [], []>} : vector<2x32xbf16>, vector<32x128xbf16>, vector<2x128xf32> -> vector<2x128xf32>
    %824 = arith.addf %821, %823 : vector<2x128xf32>
    %825 = math.tanh %824 : vector<2x128xf32>
    %826 = vector.extract_strided_slice %825 {offsets = [0, 0], sizes = [2, 32], strides = [1, 1]} : vector<2x128xf32> to vector<2x32xf32>
    %cst_438 = arith.constant 5.000000e-01 : f32
    %827 = vector.broadcast %cst_438 : f32 to vector<2x32xf32>
    %828 = arith.mulf %827, %826 : vector<2x32xf32>
    %cst_439 = arith.constant 5.000000e-01 : f32
    %829 = vector.broadcast %cst_439 : f32 to vector<2x32xf32>
    %830 = arith.addf %829, %828 : vector<2x32xf32>
    %831 = vector.extract_strided_slice %825 {offsets = [0, 32], sizes = [2, 32], strides = [1, 1]} : vector<2x128xf32> to vector<2x32xf32>
    %cst_440 = arith.constant 5.000000e-01 : f32
    %832 = vector.broadcast %cst_440 : f32 to vector<2x32xf32>
    %833 = arith.mulf %832, %831 : vector<2x32xf32>
    %cst_441 = arith.constant 5.000000e-01 : f32
    %834 = vector.broadcast %cst_441 : f32 to vector<2x32xf32>
    %835 = arith.addf %834, %833 : vector<2x32xf32>
    %836 = vector.extract_strided_slice %825 {offsets = [0, 64], sizes = [2, 32], strides = [1, 1]} : vector<2x128xf32> to vector<2x32xf32>
    %837 = vector.extract_strided_slice %825 {offsets = [0, 96], sizes = [2, 32], strides = [1, 1]} : vector<2x128xf32> to vector<2x32xf32>
    %cst_442 = arith.constant 5.000000e-01 : f32
    %838 = vector.broadcast %cst_442 : f32 to vector<2x32xf32>
    %839 = arith.mulf %838, %837 : vector<2x32xf32>
    %cst_443 = arith.constant 5.000000e-01 : f32
    %840 = vector.broadcast %cst_443 : f32 to vector<2x32xf32>
    %841 = arith.addf %840, %839 : vector<2x32xf32>
    %842 = arith.mulf %835, %775 : vector<2x32xf32>
    %843 = arith.mulf %830, %836 : vector<2x32xf32>
    %844 = arith.addf %842, %843 : vector<2x32xf32>
    %845 = math.tanh %844 : vector<2x32xf32>
    %846 = arith.mulf %841, %845 : vector<2x32xf32>
    %847 = arith.index_cast %c1_i32_431 : i32 to index
    %c0_444 = arith.constant 0 : index
    %c0_445 = arith.constant 0 : index
    %848 = vector.load %arg6[%847, %c0_444, %c0_445] : memref<8x2x64xf32, #tpu.memory_space<vmem>>, vector<1x2x32xf32>
    %849 = vector.shape_cast %848 : vector<1x2x32xf32> to vector<2x32xf32>
    %850 = vector.shape_cast %846 : vector<2x32xf32> to vector<1x2x32xf32>
    tpu.vector_store %arg6[%847, %c0_444, %c0_445], %850 {strides = array<i32>} : memref<8x2x64xf32, #tpu.memory_space<vmem>>, vector<1x2x32xf32>,
    %c7_i32_446 = arith.constant 7 : i32
    %851 = arith.subi %c7_i32_446, %c1_i32_431 : i32
    %c0_i32_447 = arith.constant 0 : i32
    %c0_i32_448 = arith.constant 0 : i32
    %c0_i32_449 = arith.constant 0 : i32
    %852 = tpu.memref_slice %arg8[%c1_i32_400, %c0_i32_447, %c0_i32_448, %c0_i32_449] : memref<2x8x2x128xf32, #tpu.memory_space<vmem>> -> memref<1x8x2x128xf32, #tpu.memory_space<vmem>>
    %853 = tpu.memref_squeeze %852 : memref<1x8x2x128xf32, #tpu.memory_space<vmem>> -> memref<8x2x128xf32, #tpu.memory_space<vmem>>
    %854 = arith.index_cast %851 : i32 to index
    %c0_450 = arith.constant 0 : index
    %c0_451 = arith.constant 0 : index
    %855 = vector.load %853[%854, %c0_450, %c0_451] : memref<8x2x128xf32, #tpu.memory_space<vmem>>, vector<1x2x128xf32>
    %856 = vector.shape_cast %855 : vector<1x2x128xf32> to vector<2x128xf32>
    %857 = arith.truncf %812 : vector<2x32xf32> to vector<2x32xbf16>
    %cst_452 = arith.constant dense<0.000000e+00> : vector<2x128xf32>
    %858 = tpu.matmul %857, %739, %cst_452 {dimension_numbers = #tpu.dot_dimension_numbers<[1], [0], [0], [1], [0, 0, 1, 1], [], []>} : vector<2x32xbf16>, vector<32x128xbf16>, vector<2x128xf32> -> vector<2x128xf32>
    %859 = arith.addf %856, %858 : vector<2x128xf32>
    %860 = math.tanh %859 : vector<2x128xf32>
    %861 = vector.extract_strided_slice %860 {offsets = [0, 0], sizes = [2, 32], strides = [1, 1]} : vector<2x128xf32> to vector<2x32xf32>
    %cst_453 = arith.constant 5.000000e-01 : f32
    %862 = vector.broadcast %cst_453 : f32 to vector<2x32xf32>
    %863 = arith.mulf %862, %861 : vector<2x32xf32>
    %cst_454 = arith.constant 5.000000e-01 : f32
    %864 = vector.broadcast %cst_454 : f32 to vector<2x32xf32>
    %865 = arith.addf %864, %863 : vector<2x32xf32>
    %866 = vector.extract_strided_slice %860 {offsets = [0, 32], sizes = [2, 32], strides = [1, 1]} : vector<2x128xf32> to vector<2x32xf32>
    %cst_455 = arith.constant 5.000000e-01 : f32
    %867 = vector.broadcast %cst_455 : f32 to vector<2x32xf32>
    %868 = arith.mulf %867, %866 : vector<2x32xf32>
    %cst_456 = arith.constant 5.000000e-01 : f32
    %869 = vector.broadcast %cst_456 : f32 to vector<2x32xf32>
    %870 = arith.addf %869, %868 : vector<2x32xf32>
    %871 = vector.extract_strided_slice %860 {offsets = [0, 64], sizes = [2, 32], strides = [1, 1]} : vector<2x128xf32> to vector<2x32xf32>
    %872 = vector.extract_strided_slice %860 {offsets = [0, 96], sizes = [2, 32], strides = [1, 1]} : vector<2x128xf32> to vector<2x32xf32>
    %cst_457 = arith.constant 5.000000e-01 : f32
    %873 = vector.broadcast %cst_457 : f32 to vector<2x32xf32>
    %874 = arith.mulf %873, %872 : vector<2x32xf32>
    %cst_458 = arith.constant 5.000000e-01 : f32
    %875 = vector.broadcast %cst_458 : f32 to vector<2x32xf32>
    %876 = arith.addf %875, %874 : vector<2x32xf32>
    %877 = arith.mulf %870, %810 : vector<2x32xf32>
    %878 = arith.mulf %865, %871 : vector<2x32xf32>
    %879 = arith.addf %877, %878 : vector<2x32xf32>
    %880 = math.tanh %879 : vector<2x32xf32>
    %881 = arith.mulf %876, %880 : vector<2x32xf32>
    %882 = arith.index_cast %851 : i32 to index
    %c0_459 = arith.constant 0 : index
    %c32_460 = arith.constant 32 : index
    %883 = vector.load %arg6[%882, %c0_459, %c32_460] : memref<8x2x64xf32, #tpu.memory_space<vmem>>, vector<1x2x32xf32>
    %884 = vector.shape_cast %883 : vector<1x2x32xf32> to vector<2x32xf32>
    %885 = vector.shape_cast %881 : vector<2x32xf32> to vector<1x2x32xf32>
    tpu.vector_store %arg6[%882, %c0_459, %c32_460], %885 {strides = array<i32>} : memref<8x2x64xf32, #tpu.memory_space<vmem>>, vector<1x2x32xf32>,
    %c2_i32_461 = arith.constant 2 : i32
    %c0_i32_462 = arith.constant 0 : i32
    %c0_i32_463 = arith.constant 0 : i32
    %c0_i32_464 = arith.constant 0 : i32
    %886 = tpu.memref_slice %arg8[%c0_i32_399, %c0_i32_462, %c0_i32_463, %c0_i32_464] : memref<2x8x2x128xf32, #tpu.memory_space<vmem>> -> memref<1x8x2x128xf32, #tpu.memory_space<vmem>>
    %887 = tpu.memref_squeeze %886 : memref<1x8x2x128xf32, #tpu.memory_space<vmem>> -> memref<8x2x128xf32, #tpu.memory_space<vmem>>
    %888 = arith.index_cast %c2_i32_461 : i32 to index
    %c0_465 = arith.constant 0 : index
    %c0_466 = arith.constant 0 : index
    %889 = vector.load %887[%888, %c0_465, %c0_466] : memref<8x2x128xf32, #tpu.memory_space<vmem>>, vector<1x2x128xf32>
    %890 = vector.shape_cast %889 : vector<1x2x128xf32> to vector<2x128xf32>
    %891 = arith.truncf %846 : vector<2x32xf32> to vector<2x32xbf16>
    %cst_467 = arith.constant dense<0.000000e+00> : vector<2x128xf32>
    %892 = tpu.matmul %891, %737, %cst_467 {dimension_numbers = #tpu.dot_dimension_numbers<[1], [0], [0], [1], [0, 0, 1, 1], [], []>} : vector<2x32xbf16>, vector<32x128xbf16>, vector<2x128xf32> -> vector<2x128xf32>
    %893 = arith.addf %890, %892 : vector<2x128xf32>
    %894 = math.tanh %893 : vector<2x128xf32>
    %895 = vector.extract_strided_slice %894 {offsets = [0, 0], sizes = [2, 32], strides = [1, 1]} : vector<2x128xf32> to vector<2x32xf32>
    %cst_468 = arith.constant 5.000000e-01 : f32
    %896 = vector.broadcast %cst_468 : f32 to vector<2x32xf32>
    %897 = arith.mulf %896, %895 : vector<2x32xf32>
    %cst_469 = arith.constant 5.000000e-01 : f32
    %898 = vector.broadcast %cst_469 : f32 to vector<2x32xf32>
    %899 = arith.addf %898, %897 : vector<2x32xf32>
    %900 = vector.extract_strided_slice %894 {offsets = [0, 32], sizes = [2, 32], strides = [1, 1]} : vector<2x128xf32> to vector<2x32xf32>
    %cst_470 = arith.constant 5.000000e-01 : f32
    %901 = vector.broadcast %cst_470 : f32 to vector<2x32xf32>
    %902 = arith.mulf %901, %900 : vector<2x32xf32>
    %cst_471 = arith.constant 5.000000e-01 : f32
    %903 = vector.broadcast %cst_471 : f32 to vector<2x32xf32>
    %904 = arith.addf %903, %902 : vector<2x32xf32>
    %905 = vector.extract_strided_slice %894 {offsets = [0, 64], sizes = [2, 32], strides = [1, 1]} : vector<2x128xf32> to vector<2x32xf32>
    %906 = vector.extract_strided_slice %894 {offsets = [0, 96], sizes = [2, 32], strides = [1, 1]} : vector<2x128xf32> to vector<2x32xf32>
    %cst_472 = arith.constant 5.000000e-01 : f32
    %907 = vector.broadcast %cst_472 : f32 to vector<2x32xf32>
    %908 = arith.mulf %907, %906 : vector<2x32xf32>
    %cst_473 = arith.constant 5.000000e-01 : f32
    %909 = vector.broadcast %cst_473 : f32 to vector<2x32xf32>
    %910 = arith.addf %909, %908 : vector<2x32xf32>
    %911 = arith.mulf %904, %844 : vector<2x32xf32>
    %912 = arith.mulf %899, %905 : vector<2x32xf32>
    %913 = arith.addf %911, %912 : vector<2x32xf32>
    %914 = math.tanh %913 : vector<2x32xf32>
    %915 = arith.mulf %910, %914 : vector<2x32xf32>
    %916 = arith.index_cast %c2_i32_461 : i32 to index
    %c0_474 = arith.constant 0 : index
    %c0_475 = arith.constant 0 : index
    %917 = vector.load %arg6[%916, %c0_474, %c0_475] : memref<8x2x64xf32, #tpu.memory_space<vmem>>, vector<1x2x32xf32>
    %918 = vector.shape_cast %917 : vector<1x2x32xf32> to vector<2x32xf32>
    %919 = vector.shape_cast %915 : vector<2x32xf32> to vector<1x2x32xf32>
    tpu.vector_store %arg6[%916, %c0_474, %c0_475], %919 {strides = array<i32>} : memref<8x2x64xf32, #tpu.memory_space<vmem>>, vector<1x2x32xf32>,
    %c7_i32_476 = arith.constant 7 : i32
    %920 = arith.subi %c7_i32_476, %c2_i32_461 : i32
    %c0_i32_477 = arith.constant 0 : i32
    %c0_i32_478 = arith.constant 0 : i32
    %c0_i32_479 = arith.constant 0 : i32
    %921 = tpu.memref_slice %arg8[%c1_i32_400, %c0_i32_477, %c0_i32_478, %c0_i32_479] : memref<2x8x2x128xf32, #tpu.memory_space<vmem>> -> memref<1x8x2x128xf32, #tpu.memory_space<vmem>>
    %922 = tpu.memref_squeeze %921 : memref<1x8x2x128xf32, #tpu.memory_space<vmem>> -> memref<8x2x128xf32, #tpu.memory_space<vmem>>
    %923 = arith.index_cast %920 : i32 to index
    %c0_480 = arith.constant 0 : index
    %c0_481 = arith.constant 0 : index
    %924 = vector.load %922[%923, %c0_480, %c0_481] : memref<8x2x128xf32, #tpu.memory_space<vmem>>, vector<1x2x128xf32>
    %925 = vector.shape_cast %924 : vector<1x2x128xf32> to vector<2x128xf32>
    %926 = arith.truncf %881 : vector<2x32xf32> to vector<2x32xbf16>
    %cst_482 = arith.constant dense<0.000000e+00> : vector<2x128xf32>
    %927 = tpu.matmul %926, %739, %cst_482 {dimension_numbers = #tpu.dot_dimension_numbers<[1], [0], [0], [1], [0, 0, 1, 1], [], []>} : vector<2x32xbf16>, vector<32x128xbf16>, vector<2x128xf32> -> vector<2x128xf32>
    %928 = arith.addf %925, %927 : vector<2x128xf32>
    %929 = math.tanh %928 : vector<2x128xf32>
    %930 = vector.extract_strided_slice %929 {offsets = [0, 0], sizes = [2, 32], strides = [1, 1]} : vector<2x128xf32> to vector<2x32xf32>
    %cst_483 = arith.constant 5.000000e-01 : f32
    %931 = vector.broadcast %cst_483 : f32 to vector<2x32xf32>
    %932 = arith.mulf %931, %930 : vector<2x32xf32>
    %cst_484 = arith.constant 5.000000e-01 : f32
    %933 = vector.broadcast %cst_484 : f32 to vector<2x32xf32>
    %934 = arith.addf %933, %932 : vector<2x32xf32>
    %935 = vector.extract_strided_slice %929 {offsets = [0, 32], sizes = [2, 32], strides = [1, 1]} : vector<2x128xf32> to vector<2x32xf32>
    %cst_485 = arith.constant 5.000000e-01 : f32
    %936 = vector.broadcast %cst_485 : f32 to vector<2x32xf32>
    %937 = arith.mulf %936, %935 : vector<2x32xf32>
    %cst_486 = arith.constant 5.000000e-01 : f32
    %938 = vector.broadcast %cst_486 : f32 to vector<2x32xf32>
    %939 = arith.addf %938, %937 : vector<2x32xf32>
    %940 = vector.extract_strided_slice %929 {offsets = [0, 64], sizes = [2, 32], strides = [1, 1]} : vector<2x128xf32> to vector<2x32xf32>
    %941 = vector.extract_strided_slice %929 {offsets = [0, 96], sizes = [2, 32], strides = [1, 1]} : vector<2x128xf32> to vector<2x32xf32>
    %cst_487 = arith.constant 5.000000e-01 : f32
    %942 = vector.broadcast %cst_487 : f32 to vector<2x32xf32>
    %943 = arith.mulf %942, %941 : vector<2x32xf32>
    %cst_488 = arith.constant 5.000000e-01 : f32
    %944 = vector.broadcast %cst_488 : f32 to vector<2x32xf32>
    %945 = arith.addf %944, %943 : vector<2x32xf32>
    %946 = arith.mulf %939, %879 : vector<2x32xf32>
    %947 = arith.mulf %934, %940 : vector<2x32xf32>
    %948 = arith.addf %946, %947 : vector<2x32xf32>
    %949 = math.tanh %948 : vector<2x32xf32>
    %950 = arith.mulf %945, %949 : vector<2x32xf32>
    %951 = arith.index_cast %920 : i32 to index
    %c0_489 = arith.constant 0 : index
    %c32_490 = arith.constant 32 : index
    %952 = vector.load %arg6[%951, %c0_489, %c32_490] : memref<8x2x64xf32, #tpu.memory_space<vmem>>, vector<1x2x32xf32>
    %953 = vector.shape_cast %952 : vector<1x2x32xf32> to vector<2x32xf32>
    %954 = vector.shape_cast %950 : vector<2x32xf32> to vector<1x2x32xf32>
    tpu.vector_store %arg6[%951, %c0_489, %c32_490], %954 {strides = array<i32>} : memref<8x2x64xf32, #tpu.memory_space<vmem>>, vector<1x2x32xf32>,
    %c3_i32_491 = arith.constant 3 : i32
    %c0_i32_492 = arith.constant 0 : i32
    %c0_i32_493 = arith.constant 0 : i32
    %c0_i32_494 = arith.constant 0 : i32
    %955 = tpu.memref_slice %arg8[%c0_i32_399, %c0_i32_492, %c0_i32_493, %c0_i32_494] : memref<2x8x2x128xf32, #tpu.memory_space<vmem>> -> memref<1x8x2x128xf32, #tpu.memory_space<vmem>>
    %956 = tpu.memref_squeeze %955 : memref<1x8x2x128xf32, #tpu.memory_space<vmem>> -> memref<8x2x128xf32, #tpu.memory_space<vmem>>
    %957 = arith.index_cast %c3_i32_491 : i32 to index
    %c0_495 = arith.constant 0 : index
    %c0_496 = arith.constant 0 : index
    %958 = vector.load %956[%957, %c0_495, %c0_496] : memref<8x2x128xf32, #tpu.memory_space<vmem>>, vector<1x2x128xf32>
    %959 = vector.shape_cast %958 : vector<1x2x128xf32> to vector<2x128xf32>
    %960 = arith.truncf %915 : vector<2x32xf32> to vector<2x32xbf16>
    %cst_497 = arith.constant dense<0.000000e+00> : vector<2x128xf32>
    %961 = tpu.matmul %960, %737, %cst_497 {dimension_numbers = #tpu.dot_dimension_numbers<[1], [0], [0], [1], [0, 0, 1, 1], [], []>} : vector<2x32xbf16>, vector<32x128xbf16>, vector<2x128xf32> -> vector<2x128xf32>
    %962 = arith.addf %959, %961 : vector<2x128xf32>
    %963 = math.tanh %962 : vector<2x128xf32>
    %964 = vector.extract_strided_slice %963 {offsets = [0, 0], sizes = [2, 32], strides = [1, 1]} : vector<2x128xf32> to vector<2x32xf32>
    %cst_498 = arith.constant 5.000000e-01 : f32
    %965 = vector.broadcast %cst_498 : f32 to vector<2x32xf32>
    %966 = arith.mulf %965, %964 : vector<2x32xf32>
    %cst_499 = arith.constant 5.000000e-01 : f32
    %967 = vector.broadcast %cst_499 : f32 to vector<2x32xf32>
    %968 = arith.addf %967, %966 : vector<2x32xf32>
    %969 = vector.extract_strided_slice %963 {offsets = [0, 32], sizes = [2, 32], strides = [1, 1]} : vector<2x128xf32> to vector<2x32xf32>
    %cst_500 = arith.constant 5.000000e-01 : f32
    %970 = vector.broadcast %cst_500 : f32 to vector<2x32xf32>
    %971 = arith.mulf %970, %969 : vector<2x32xf32>
    %cst_501 = arith.constant 5.000000e-01 : f32
    %972 = vector.broadcast %cst_501 : f32 to vector<2x32xf32>
    %973 = arith.addf %972, %971 : vector<2x32xf32>
    %974 = vector.extract_strided_slice %963 {offsets = [0, 64], sizes = [2, 32], strides = [1, 1]} : vector<2x128xf32> to vector<2x32xf32>
    %975 = vector.extract_strided_slice %963 {offsets = [0, 96], sizes = [2, 32], strides = [1, 1]} : vector<2x128xf32> to vector<2x32xf32>
    %cst_502 = arith.constant 5.000000e-01 : f32
    %976 = vector.broadcast %cst_502 : f32 to vector<2x32xf32>
    %977 = arith.mulf %976, %975 : vector<2x32xf32>
    %cst_503 = arith.constant 5.000000e-01 : f32
    %978 = vector.broadcast %cst_503 : f32 to vector<2x32xf32>
    %979 = arith.addf %978, %977 : vector<2x32xf32>
    %980 = arith.mulf %973, %913 : vector<2x32xf32>
    %981 = arith.mulf %968, %974 : vector<2x32xf32>
    %982 = arith.addf %980, %981 : vector<2x32xf32>
    %983 = math.tanh %982 : vector<2x32xf32>
    %984 = arith.mulf %979, %983 : vector<2x32xf32>
    %985 = arith.index_cast %c3_i32_491 : i32 to index
    %c0_504 = arith.constant 0 : index
    %c0_505 = arith.constant 0 : index
    %986 = vector.load %arg6[%985, %c0_504, %c0_505] : memref<8x2x64xf32, #tpu.memory_space<vmem>>, vector<1x2x32xf32>
    %987 = vector.shape_cast %986 : vector<1x2x32xf32> to vector<2x32xf32>
    %988 = vector.shape_cast %984 : vector<2x32xf32> to vector<1x2x32xf32>
    tpu.vector_store %arg6[%985, %c0_504, %c0_505], %988 {strides = array<i32>} : memref<8x2x64xf32, #tpu.memory_space<vmem>>, vector<1x2x32xf32>,
    %c7_i32_506 = arith.constant 7 : i32
    %989 = arith.subi %c7_i32_506, %c3_i32_491 : i32
    %c0_i32_507 = arith.constant 0 : i32
    %c0_i32_508 = arith.constant 0 : i32
    %c0_i32_509 = arith.constant 0 : i32
    %990 = tpu.memref_slice %arg8[%c1_i32_400, %c0_i32_507, %c0_i32_508, %c0_i32_509] : memref<2x8x2x128xf32, #tpu.memory_space<vmem>> -> memref<1x8x2x128xf32, #tpu.memory_space<vmem>>
    %991 = tpu.memref_squeeze %990 : memref<1x8x2x128xf32, #tpu.memory_space<vmem>> -> memref<8x2x128xf32, #tpu.memory_space<vmem>>
    %992 = arith.index_cast %989 : i32 to index
    %c0_510 = arith.constant 0 : index
    %c0_511 = arith.constant 0 : index
    %993 = vector.load %991[%992, %c0_510, %c0_511] : memref<8x2x128xf32, #tpu.memory_space<vmem>>, vector<1x2x128xf32>
    %994 = vector.shape_cast %993 : vector<1x2x128xf32> to vector<2x128xf32>
    %995 = arith.truncf %950 : vector<2x32xf32> to vector<2x32xbf16>
    %cst_512 = arith.constant dense<0.000000e+00> : vector<2x128xf32>
    %996 = tpu.matmul %995, %739, %cst_512 {dimension_numbers = #tpu.dot_dimension_numbers<[1], [0], [0], [1], [0, 0, 1, 1], [], []>} : vector<2x32xbf16>, vector<32x128xbf16>, vector<2x128xf32> -> vector<2x128xf32>
    %997 = arith.addf %994, %996 : vector<2x128xf32>
    %998 = math.tanh %997 : vector<2x128xf32>
    %999 = vector.extract_strided_slice %998 {offsets = [0, 0], sizes = [2, 32], strides = [1, 1]} : vector<2x128xf32> to vector<2x32xf32>
    %cst_513 = arith.constant 5.000000e-01 : f32
    %1000 = vector.broadcast %cst_513 : f32 to vector<2x32xf32>
    %1001 = arith.mulf %1000, %999 : vector<2x32xf32>
    %cst_514 = arith.constant 5.000000e-01 : f32
    %1002 = vector.broadcast %cst_514 : f32 to vector<2x32xf32>
    %1003 = arith.addf %1002, %1001 : vector<2x32xf32>
    %1004 = vector.extract_strided_slice %998 {offsets = [0, 32], sizes = [2, 32], strides = [1, 1]} : vector<2x128xf32> to vector<2x32xf32>
    %cst_515 = arith.constant 5.000000e-01 : f32
    %1005 = vector.broadcast %cst_515 : f32 to vector<2x32xf32>
    %1006 = arith.mulf %1005, %1004 : vector<2x32xf32>
    %cst_516 = arith.constant 5.000000e-01 : f32
    %1007 = vector.broadcast %cst_516 : f32 to vector<2x32xf32>
    %1008 = arith.addf %1007, %1006 : vector<2x32xf32>
    %1009 = vector.extract_strided_slice %998 {offsets = [0, 64], sizes = [2, 32], strides = [1, 1]} : vector<2x128xf32> to vector<2x32xf32>
    %1010 = vector.extract_strided_slice %998 {offsets = [0, 96], sizes = [2, 32], strides = [1, 1]} : vector<2x128xf32> to vector<2x32xf32>
    %cst_517 = arith.constant 5.000000e-01 : f32
    %1011 = vector.broadcast %cst_517 : f32 to vector<2x32xf32>
    %1012 = arith.mulf %1011, %1010 : vector<2x32xf32>
    %cst_518 = arith.constant 5.000000e-01 : f32
    %1013 = vector.broadcast %cst_518 : f32 to vector<2x32xf32>
    %1014 = arith.addf %1013, %1012 : vector<2x32xf32>
    %1015 = arith.mulf %1008, %948 : vector<2x32xf32>
    %1016 = arith.mulf %1003, %1009 : vector<2x32xf32>
    %1017 = arith.addf %1015, %1016 : vector<2x32xf32>
    %1018 = math.tanh %1017 : vector<2x32xf32>
    %1019 = arith.mulf %1014, %1018 : vector<2x32xf32>
    %1020 = arith.index_cast %989 : i32 to index
    %c0_519 = arith.constant 0 : index
    %c32_520 = arith.constant 32 : index
    %1021 = vector.load %arg6[%1020, %c0_519, %c32_520] : memref<8x2x64xf32, #tpu.memory_space<vmem>>, vector<1x2x32xf32>
    %1022 = vector.shape_cast %1021 : vector<1x2x32xf32> to vector<2x32xf32>
    %1023 = vector.shape_cast %1019 : vector<2x32xf32> to vector<1x2x32xf32>
    tpu.vector_store %arg6[%1020, %c0_519, %c32_520], %1023 {strides = array<i32>} : memref<8x2x64xf32, #tpu.memory_space<vmem>>, vector<1x2x32xf32>,
    %c4_i32_521 = arith.constant 4 : i32
    %c0_i32_522 = arith.constant 0 : i32
    %c0_i32_523 = arith.constant 0 : i32
    %c0_i32_524 = arith.constant 0 : i32
    %1024 = tpu.memref_slice %arg8[%c0_i32_399, %c0_i32_522, %c0_i32_523, %c0_i32_524] : memref<2x8x2x128xf32, #tpu.memory_space<vmem>> -> memref<1x8x2x128xf32, #tpu.memory_space<vmem>>
    %1025 = tpu.memref_squeeze %1024 : memref<1x8x2x128xf32, #tpu.memory_space<vmem>> -> memref<8x2x128xf32, #tpu.memory_space<vmem>>
    %1026 = arith.index_cast %c4_i32_521 : i32 to index
    %c0_525 = arith.constant 0 : index
    %c0_526 = arith.constant 0 : index
    %1027 = vector.load %1025[%1026, %c0_525, %c0_526] : memref<8x2x128xf32, #tpu.memory_space<vmem>>, vector<1x2x128xf32>
    %1028 = vector.shape_cast %1027 : vector<1x2x128xf32> to vector<2x128xf32>
    %1029 = arith.truncf %984 : vector<2x32xf32> to vector<2x32xbf16>
    %cst_527 = arith.constant dense<0.000000e+00> : vector<2x128xf32>
    %1030 = tpu.matmul %1029, %737, %cst_527 {dimension_numbers = #tpu.dot_dimension_numbers<[1], [0], [0], [1], [0, 0, 1, 1], [], []>} : vector<2x32xbf16>, vector<32x128xbf16>, vector<2x128xf32> -> vector<2x128xf32>
    %1031 = arith.addf %1028, %1030 : vector<2x128xf32>
    %1032 = math.tanh %1031 : vector<2x128xf32>
    %1033 = vector.extract_strided_slice %1032 {offsets = [0, 0], sizes = [2, 32], strides = [1, 1]} : vector<2x128xf32> to vector<2x32xf32>
    %cst_528 = arith.constant 5.000000e-01 : f32
    %1034 = vector.broadcast %cst_528 : f32 to vector<2x32xf32>
    %1035 = arith.mulf %1034, %1033 : vector<2x32xf32>
    %cst_529 = arith.constant 5.000000e-01 : f32
    %1036 = vector.broadcast %cst_529 : f32 to vector<2x32xf32>
    %1037 = arith.addf %1036, %1035 : vector<2x32xf32>
    %1038 = vector.extract_strided_slice %1032 {offsets = [0, 32], sizes = [2, 32], strides = [1, 1]} : vector<2x128xf32> to vector<2x32xf32>
    %cst_530 = arith.constant 5.000000e-01 : f32
    %1039 = vector.broadcast %cst_530 : f32 to vector<2x32xf32>
    %1040 = arith.mulf %1039, %1038 : vector<2x32xf32>
    %cst_531 = arith.constant 5.000000e-01 : f32
    %1041 = vector.broadcast %cst_531 : f32 to vector<2x32xf32>
    %1042 = arith.addf %1041, %1040 : vector<2x32xf32>
    %1043 = vector.extract_strided_slice %1032 {offsets = [0, 64], sizes = [2, 32], strides = [1, 1]} : vector<2x128xf32> to vector<2x32xf32>
    %1044 = vector.extract_strided_slice %1032 {offsets = [0, 96], sizes = [2, 32], strides = [1, 1]} : vector<2x128xf32> to vector<2x32xf32>
    %cst_532 = arith.constant 5.000000e-01 : f32
    %1045 = vector.broadcast %cst_532 : f32 to vector<2x32xf32>
    %1046 = arith.mulf %1045, %1044 : vector<2x32xf32>
    %cst_533 = arith.constant 5.000000e-01 : f32
    %1047 = vector.broadcast %cst_533 : f32 to vector<2x32xf32>
    %1048 = arith.addf %1047, %1046 : vector<2x32xf32>
    %1049 = arith.mulf %1042, %982 : vector<2x32xf32>
    %1050 = arith.mulf %1037, %1043 : vector<2x32xf32>
    %1051 = arith.addf %1049, %1050 : vector<2x32xf32>
    %1052 = math.tanh %1051 : vector<2x32xf32>
    %1053 = arith.mulf %1048, %1052 : vector<2x32xf32>
    %1054 = arith.index_cast %c4_i32_521 : i32 to index
    %c0_534 = arith.constant 0 : index
    %c0_535 = arith.constant 0 : index
    %1055 = vector.load %arg6[%1054, %c0_534, %c0_535] : memref<8x2x64xf32, #tpu.memory_space<vmem>>, vector<1x2x32xf32>
    %1056 = vector.shape_cast %1055 : vector<1x2x32xf32> to vector<2x32xf32>
    %1057 = vector.shape_cast %1053 : vector<2x32xf32> to vector<1x2x32xf32>
    tpu.vector_store %arg6[%1054, %c0_534, %c0_535], %1057 {strides = array<i32>} : memref<8x2x64xf32, #tpu.memory_space<vmem>>, vector<1x2x32xf32>,
    %c7_i32_536 = arith.constant 7 : i32
    %1058 = arith.subi %c7_i32_536, %c4_i32_521 : i32
    %c0_i32_537 = arith.constant 0 : i32
    %c0_i32_538 = arith.constant 0 : i32
    %c0_i32_539 = arith.constant 0 : i32
    %1059 = tpu.memref_slice %arg8[%c1_i32_400, %c0_i32_537, %c0_i32_538, %c0_i32_539] : memref<2x8x2x128xf32, #tpu.memory_space<vmem>> -> memref<1x8x2x128xf32, #tpu.memory_space<vmem>>
    %1060 = tpu.memref_squeeze %1059 : memref<1x8x2x128xf32, #tpu.memory_space<vmem>> -> memref<8x2x128xf32, #tpu.memory_space<vmem>>
    %1061 = arith.index_cast %1058 : i32 to index
    %c0_540 = arith.constant 0 : index
    %c0_541 = arith.constant 0 : index
    %1062 = vector.load %1060[%1061, %c0_540, %c0_541] : memref<8x2x128xf32, #tpu.memory_space<vmem>>, vector<1x2x128xf32>
    %1063 = vector.shape_cast %1062 : vector<1x2x128xf32> to vector<2x128xf32>
    %1064 = arith.truncf %1019 : vector<2x32xf32> to vector<2x32xbf16>
    %cst_542 = arith.constant dense<0.000000e+00> : vector<2x128xf32>
    %1065 = tpu.matmul %1064, %739, %cst_542 {dimension_numbers = #tpu.dot_dimension_numbers<[1], [0], [0], [1], [0, 0, 1, 1], [], []>} : vector<2x32xbf16>, vector<32x128xbf16>, vector<2x128xf32> -> vector<2x128xf32>
    %1066 = arith.addf %1063, %1065 : vector<2x128xf32>
    %1067 = math.tanh %1066 : vector<2x128xf32>
    %1068 = vector.extract_strided_slice %1067 {offsets = [0, 0], sizes = [2, 32], strides = [1, 1]} : vector<2x128xf32> to vector<2x32xf32>
    %cst_543 = arith.constant 5.000000e-01 : f32
    %1069 = vector.broadcast %cst_543 : f32 to vector<2x32xf32>
    %1070 = arith.mulf %1069, %1068 : vector<2x32xf32>
    %cst_544 = arith.constant 5.000000e-01 : f32
    %1071 = vector.broadcast %cst_544 : f32 to vector<2x32xf32>
    %1072 = arith.addf %1071, %1070 : vector<2x32xf32>
    %1073 = vector.extract_strided_slice %1067 {offsets = [0, 32], sizes = [2, 32], strides = [1, 1]} : vector<2x128xf32> to vector<2x32xf32>
    %cst_545 = arith.constant 5.000000e-01 : f32
    %1074 = vector.broadcast %cst_545 : f32 to vector<2x32xf32>
    %1075 = arith.mulf %1074, %1073 : vector<2x32xf32>
    %cst_546 = arith.constant 5.000000e-01 : f32
    %1076 = vector.broadcast %cst_546 : f32 to vector<2x32xf32>
    %1077 = arith.addf %1076, %1075 : vector<2x32xf32>
    %1078 = vector.extract_strided_slice %1067 {offsets = [0, 64], sizes = [2, 32], strides = [1, 1]} : vector<2x128xf32> to vector<2x32xf32>
    %1079 = vector.extract_strided_slice %1067 {offsets = [0, 96], sizes = [2, 32], strides = [1, 1]} : vector<2x128xf32> to vector<2x32xf32>
    %cst_547 = arith.constant 5.000000e-01 : f32
    %1080 = vector.broadcast %cst_547 : f32 to vector<2x32xf32>
    %1081 = arith.mulf %1080, %1079 : vector<2x32xf32>
    %cst_548 = arith.constant 5.000000e-01 : f32
    %1082 = vector.broadcast %cst_548 : f32 to vector<2x32xf32>
    %1083 = arith.addf %1082, %1081 : vector<2x32xf32>
    %1084 = arith.mulf %1077, %1017 : vector<2x32xf32>
    %1085 = arith.mulf %1072, %1078 : vector<2x32xf32>
    %1086 = arith.addf %1084, %1085 : vector<2x32xf32>
    %1087 = math.tanh %1086 : vector<2x32xf32>
    %1088 = arith.mulf %1083, %1087 : vector<2x32xf32>
    %1089 = arith.index_cast %1058 : i32 to index
    %c0_549 = arith.constant 0 : index
    %c32_550 = arith.constant 32 : index
    %1090 = vector.load %arg6[%1089, %c0_549, %c32_550] : memref<8x2x64xf32, #tpu.memory_space<vmem>>, vector<1x2x32xf32>
    %1091 = vector.shape_cast %1090 : vector<1x2x32xf32> to vector<2x32xf32>
    %1092 = vector.shape_cast %1088 : vector<2x32xf32> to vector<1x2x32xf32>
    tpu.vector_store %arg6[%1089, %c0_549, %c32_550], %1092 {strides = array<i32>} : memref<8x2x64xf32, #tpu.memory_space<vmem>>, vector<1x2x32xf32>,
    %c5_i32_551 = arith.constant 5 : i32
    %c0_i32_552 = arith.constant 0 : i32
    %c0_i32_553 = arith.constant 0 : i32
    %c0_i32_554 = arith.constant 0 : i32
    %1093 = tpu.memref_slice %arg8[%c0_i32_399, %c0_i32_552, %c0_i32_553, %c0_i32_554] : memref<2x8x2x128xf32, #tpu.memory_space<vmem>> -> memref<1x8x2x128xf32, #tpu.memory_space<vmem>>
    %1094 = tpu.memref_squeeze %1093 : memref<1x8x2x128xf32, #tpu.memory_space<vmem>> -> memref<8x2x128xf32, #tpu.memory_space<vmem>>
    %1095 = arith.index_cast %c5_i32_551 : i32 to index
    %c0_555 = arith.constant 0 : index
    %c0_556 = arith.constant 0 : index
    %1096 = vector.load %1094[%1095, %c0_555, %c0_556] : memref<8x2x128xf32, #tpu.memory_space<vmem>>, vector<1x2x128xf32>
    %1097 = vector.shape_cast %1096 : vector<1x2x128xf32> to vector<2x128xf32>
    %1098 = arith.truncf %1053 : vector<2x32xf32> to vector<2x32xbf16>
    %cst_557 = arith.constant dense<0.000000e+00> : vector<2x128xf32>
    %1099 = tpu.matmul %1098, %737, %cst_557 {dimension_numbers = #tpu.dot_dimension_numbers<[1], [0], [0], [1], [0, 0, 1, 1], [], []>} : vector<2x32xbf16>, vector<32x128xbf16>, vector<2x128xf32> -> vector<2x128xf32>
    %1100 = arith.addf %1097, %1099 : vector<2x128xf32>
    %1101 = math.tanh %1100 : vector<2x128xf32>
    %1102 = vector.extract_strided_slice %1101 {offsets = [0, 0], sizes = [2, 32], strides = [1, 1]} : vector<2x128xf32> to vector<2x32xf32>
    %cst_558 = arith.constant 5.000000e-01 : f32
    %1103 = vector.broadcast %cst_558 : f32 to vector<2x32xf32>
    %1104 = arith.mulf %1103, %1102 : vector<2x32xf32>
    %cst_559 = arith.constant 5.000000e-01 : f32
    %1105 = vector.broadcast %cst_559 : f32 to vector<2x32xf32>
    %1106 = arith.addf %1105, %1104 : vector<2x32xf32>
    %1107 = vector.extract_strided_slice %1101 {offsets = [0, 32], sizes = [2, 32], strides = [1, 1]} : vector<2x128xf32> to vector<2x32xf32>
    %cst_560 = arith.constant 5.000000e-01 : f32
    %1108 = vector.broadcast %cst_560 : f32 to vector<2x32xf32>
    %1109 = arith.mulf %1108, %1107 : vector<2x32xf32>
    %cst_561 = arith.constant 5.000000e-01 : f32
    %1110 = vector.broadcast %cst_561 : f32 to vector<2x32xf32>
    %1111 = arith.addf %1110, %1109 : vector<2x32xf32>
    %1112 = vector.extract_strided_slice %1101 {offsets = [0, 64], sizes = [2, 32], strides = [1, 1]} : vector<2x128xf32> to vector<2x32xf32>
    %1113 = vector.extract_strided_slice %1101 {offsets = [0, 96], sizes = [2, 32], strides = [1, 1]} : vector<2x128xf32> to vector<2x32xf32>
    %cst_562 = arith.constant 5.000000e-01 : f32
    %1114 = vector.broadcast %cst_562 : f32 to vector<2x32xf32>
    %1115 = arith.mulf %1114, %1113 : vector<2x32xf32>
    %cst_563 = arith.constant 5.000000e-01 : f32
    %1116 = vector.broadcast %cst_563 : f32 to vector<2x32xf32>
    %1117 = arith.addf %1116, %1115 : vector<2x32xf32>
    %1118 = arith.mulf %1111, %1051 : vector<2x32xf32>
    %1119 = arith.mulf %1106, %1112 : vector<2x32xf32>
    %1120 = arith.addf %1118, %1119 : vector<2x32xf32>
    %1121 = math.tanh %1120 : vector<2x32xf32>
    %1122 = arith.mulf %1117, %1121 : vector<2x32xf32>
    %1123 = arith.index_cast %c5_i32_551 : i32 to index
    %c0_564 = arith.constant 0 : index
    %c0_565 = arith.constant 0 : index
    %1124 = vector.load %arg6[%1123, %c0_564, %c0_565] : memref<8x2x64xf32, #tpu.memory_space<vmem>>, vector<1x2x32xf32>
    %1125 = vector.shape_cast %1124 : vector<1x2x32xf32> to vector<2x32xf32>
    %1126 = vector.shape_cast %1122 : vector<2x32xf32> to vector<1x2x32xf32>
    tpu.vector_store %arg6[%1123, %c0_564, %c0_565], %1126 {strides = array<i32>} : memref<8x2x64xf32, #tpu.memory_space<vmem>>, vector<1x2x32xf32>,
    %c7_i32_566 = arith.constant 7 : i32
    %1127 = arith.subi %c7_i32_566, %c5_i32_551 : i32
    %c0_i32_567 = arith.constant 0 : i32
    %c0_i32_568 = arith.constant 0 : i32
    %c0_i32_569 = arith.constant 0 : i32
    %1128 = tpu.memref_slice %arg8[%c1_i32_400, %c0_i32_567, %c0_i32_568, %c0_i32_569] : memref<2x8x2x128xf32, #tpu.memory_space<vmem>> -> memref<1x8x2x128xf32, #tpu.memory_space<vmem>>
    %1129 = tpu.memref_squeeze %1128 : memref<1x8x2x128xf32, #tpu.memory_space<vmem>> -> memref<8x2x128xf32, #tpu.memory_space<vmem>>
    %1130 = arith.index_cast %1127 : i32 to index
    %c0_570 = arith.constant 0 : index
    %c0_571 = arith.constant 0 : index
    %1131 = vector.load %1129[%1130, %c0_570, %c0_571] : memref<8x2x128xf32, #tpu.memory_space<vmem>>, vector<1x2x128xf32>
    %1132 = vector.shape_cast %1131 : vector<1x2x128xf32> to vector<2x128xf32>
    %1133 = arith.truncf %1088 : vector<2x32xf32> to vector<2x32xbf16>
    %cst_572 = arith.constant dense<0.000000e+00> : vector<2x128xf32>
    %1134 = tpu.matmul %1133, %739, %cst_572 {dimension_numbers = #tpu.dot_dimension_numbers<[1], [0], [0], [1], [0, 0, 1, 1], [], []>} : vector<2x32xbf16>, vector<32x128xbf16>, vector<2x128xf32> -> vector<2x128xf32>
    %1135 = arith.addf %1132, %1134 : vector<2x128xf32>
    %1136 = math.tanh %1135 : vector<2x128xf32>
    %1137 = vector.extract_strided_slice %1136 {offsets = [0, 0], sizes = [2, 32], strides = [1, 1]} : vector<2x128xf32> to vector<2x32xf32>
    %cst_573 = arith.constant 5.000000e-01 : f32
    %1138 = vector.broadcast %cst_573 : f32 to vector<2x32xf32>
    %1139 = arith.mulf %1138, %1137 : vector<2x32xf32>
    %cst_574 = arith.constant 5.000000e-01 : f32
    %1140 = vector.broadcast %cst_574 : f32 to vector<2x32xf32>
    %1141 = arith.addf %1140, %1139 : vector<2x32xf32>
    %1142 = vector.extract_strided_slice %1136 {offsets = [0, 32], sizes = [2, 32], strides = [1, 1]} : vector<2x128xf32> to vector<2x32xf32>
    %cst_575 = arith.constant 5.000000e-01 : f32
    %1143 = vector.broadcast %cst_575 : f32 to vector<2x32xf32>
    %1144 = arith.mulf %1143, %1142 : vector<2x32xf32>
    %cst_576 = arith.constant 5.000000e-01 : f32
    %1145 = vector.broadcast %cst_576 : f32 to vector<2x32xf32>
    %1146 = arith.addf %1145, %1144 : vector<2x32xf32>
    %1147 = vector.extract_strided_slice %1136 {offsets = [0, 64], sizes = [2, 32], strides = [1, 1]} : vector<2x128xf32> to vector<2x32xf32>
    %1148 = vector.extract_strided_slice %1136 {offsets = [0, 96], sizes = [2, 32], strides = [1, 1]} : vector<2x128xf32> to vector<2x32xf32>
    %cst_577 = arith.constant 5.000000e-01 : f32
    %1149 = vector.broadcast %cst_577 : f32 to vector<2x32xf32>
    %1150 = arith.mulf %1149, %1148 : vector<2x32xf32>
    %cst_578 = arith.constant 5.000000e-01 : f32
    %1151 = vector.broadcast %cst_578 : f32 to vector<2x32xf32>
    %1152 = arith.addf %1151, %1150 : vector<2x32xf32>
    %1153 = arith.mulf %1146, %1086 : vector<2x32xf32>
    %1154 = arith.mulf %1141, %1147 : vector<2x32xf32>
    %1155 = arith.addf %1153, %1154 : vector<2x32xf32>
    %1156 = math.tanh %1155 : vector<2x32xf32>
    %1157 = arith.mulf %1152, %1156 : vector<2x32xf32>
    %1158 = arith.index_cast %1127 : i32 to index
    %c0_579 = arith.constant 0 : index
    %c32_580 = arith.constant 32 : index
    %1159 = vector.load %arg6[%1158, %c0_579, %c32_580] : memref<8x2x64xf32, #tpu.memory_space<vmem>>, vector<1x2x32xf32>
    %1160 = vector.shape_cast %1159 : vector<1x2x32xf32> to vector<2x32xf32>
    %1161 = vector.shape_cast %1157 : vector<2x32xf32> to vector<1x2x32xf32>
    tpu.vector_store %arg6[%1158, %c0_579, %c32_580], %1161 {strides = array<i32>} : memref<8x2x64xf32, #tpu.memory_space<vmem>>, vector<1x2x32xf32>,
    %c6_i32_581 = arith.constant 6 : i32
    %c0_i32_582 = arith.constant 0 : i32
    %c0_i32_583 = arith.constant 0 : i32
    %c0_i32_584 = arith.constant 0 : i32
    %1162 = tpu.memref_slice %arg8[%c0_i32_399, %c0_i32_582, %c0_i32_583, %c0_i32_584] : memref<2x8x2x128xf32, #tpu.memory_space<vmem>> -> memref<1x8x2x128xf32, #tpu.memory_space<vmem>>
    %1163 = tpu.memref_squeeze %1162 : memref<1x8x2x128xf32, #tpu.memory_space<vmem>> -> memref<8x2x128xf32, #tpu.memory_space<vmem>>
    %1164 = arith.index_cast %c6_i32_581 : i32 to index
    %c0_585 = arith.constant 0 : index
    %c0_586 = arith.constant 0 : index
    %1165 = vector.load %1163[%1164, %c0_585, %c0_586] : memref<8x2x128xf32, #tpu.memory_space<vmem>>, vector<1x2x128xf32>
    %1166 = vector.shape_cast %1165 : vector<1x2x128xf32> to vector<2x128xf32>
    %1167 = arith.truncf %1122 : vector<2x32xf32> to vector<2x32xbf16>
    %cst_587 = arith.constant dense<0.000000e+00> : vector<2x128xf32>
    %1168 = tpu.matmul %1167, %737, %cst_587 {dimension_numbers = #tpu.dot_dimension_numbers<[1], [0], [0], [1], [0, 0, 1, 1], [], []>} : vector<2x32xbf16>, vector<32x128xbf16>, vector<2x128xf32> -> vector<2x128xf32>
    %1169 = arith.addf %1166, %1168 : vector<2x128xf32>
    %1170 = math.tanh %1169 : vector<2x128xf32>
    %1171 = vector.extract_strided_slice %1170 {offsets = [0, 0], sizes = [2, 32], strides = [1, 1]} : vector<2x128xf32> to vector<2x32xf32>
    %cst_588 = arith.constant 5.000000e-01 : f32
    %1172 = vector.broadcast %cst_588 : f32 to vector<2x32xf32>
    %1173 = arith.mulf %1172, %1171 : vector<2x32xf32>
    %cst_589 = arith.constant 5.000000e-01 : f32
    %1174 = vector.broadcast %cst_589 : f32 to vector<2x32xf32>
    %1175 = arith.addf %1174, %1173 : vector<2x32xf32>
    %1176 = vector.extract_strided_slice %1170 {offsets = [0, 32], sizes = [2, 32], strides = [1, 1]} : vector<2x128xf32> to vector<2x32xf32>
    %cst_590 = arith.constant 5.000000e-01 : f32
    %1177 = vector.broadcast %cst_590 : f32 to vector<2x32xf32>
    %1178 = arith.mulf %1177, %1176 : vector<2x32xf32>
    %cst_591 = arith.constant 5.000000e-01 : f32
    %1179 = vector.broadcast %cst_591 : f32 to vector<2x32xf32>
    %1180 = arith.addf %1179, %1178 : vector<2x32xf32>
    %1181 = vector.extract_strided_slice %1170 {offsets = [0, 64], sizes = [2, 32], strides = [1, 1]} : vector<2x128xf32> to vector<2x32xf32>
    %1182 = vector.extract_strided_slice %1170 {offsets = [0, 96], sizes = [2, 32], strides = [1, 1]} : vector<2x128xf32> to vector<2x32xf32>
    %cst_592 = arith.constant 5.000000e-01 : f32
    %1183 = vector.broadcast %cst_592 : f32 to vector<2x32xf32>
    %1184 = arith.mulf %1183, %1182 : vector<2x32xf32>
    %cst_593 = arith.constant 5.000000e-01 : f32
    %1185 = vector.broadcast %cst_593 : f32 to vector<2x32xf32>
    %1186 = arith.addf %1185, %1184 : vector<2x32xf32>
    %1187 = arith.mulf %1180, %1120 : vector<2x32xf32>
    %1188 = arith.mulf %1175, %1181 : vector<2x32xf32>
    %1189 = arith.addf %1187, %1188 : vector<2x32xf32>
    %1190 = math.tanh %1189 : vector<2x32xf32>
    %1191 = arith.mulf %1186, %1190 : vector<2x32xf32>
    %1192 = arith.index_cast %c6_i32_581 : i32 to index
    %c0_594 = arith.constant 0 : index
    %c0_595 = arith.constant 0 : index
    %1193 = vector.load %arg6[%1192, %c0_594, %c0_595] : memref<8x2x64xf32, #tpu.memory_space<vmem>>, vector<1x2x32xf32>
    %1194 = vector.shape_cast %1193 : vector<1x2x32xf32> to vector<2x32xf32>
    %1195 = vector.shape_cast %1191 : vector<2x32xf32> to vector<1x2x32xf32>
    tpu.vector_store %arg6[%1192, %c0_594, %c0_595], %1195 {strides = array<i32>} : memref<8x2x64xf32, #tpu.memory_space<vmem>>, vector<1x2x32xf32>,
    %c7_i32_596 = arith.constant 7 : i32
    %1196 = arith.subi %c7_i32_596, %c6_i32_581 : i32
    %c0_i32_597 = arith.constant 0 : i32
    %c0_i32_598 = arith.constant 0 : i32
    %c0_i32_599 = arith.constant 0 : i32
    %1197 = tpu.memref_slice %arg8[%c1_i32_400, %c0_i32_597, %c0_i32_598, %c0_i32_599] : memref<2x8x2x128xf32, #tpu.memory_space<vmem>> -> memref<1x8x2x128xf32, #tpu.memory_space<vmem>>
    %1198 = tpu.memref_squeeze %1197 : memref<1x8x2x128xf32, #tpu.memory_space<vmem>> -> memref<8x2x128xf32, #tpu.memory_space<vmem>>
    %1199 = arith.index_cast %1196 : i32 to index
    %c0_600 = arith.constant 0 : index
    %c0_601 = arith.constant 0 : index
    %1200 = vector.load %1198[%1199, %c0_600, %c0_601] : memref<8x2x128xf32, #tpu.memory_space<vmem>>, vector<1x2x128xf32>
    %1201 = vector.shape_cast %1200 : vector<1x2x128xf32> to vector<2x128xf32>
    %1202 = arith.truncf %1157 : vector<2x32xf32> to vector<2x32xbf16>
    %cst_602 = arith.constant dense<0.000000e+00> : vector<2x128xf32>
    %1203 = tpu.matmul %1202, %739, %cst_602 {dimension_numbers = #tpu.dot_dimension_numbers<[1], [0], [0], [1], [0, 0, 1, 1], [], []>} : vector<2x32xbf16>, vector<32x128xbf16>, vector<2x128xf32> -> vector<2x128xf32>
    %1204 = arith.addf %1201, %1203 : vector<2x128xf32>
    %1205 = math.tanh %1204 : vector<2x128xf32>
    %1206 = vector.extract_strided_slice %1205 {offsets = [0, 0], sizes = [2, 32], strides = [1, 1]} : vector<2x128xf32> to vector<2x32xf32>
    %cst_603 = arith.constant 5.000000e-01 : f32
    %1207 = vector.broadcast %cst_603 : f32 to vector<2x32xf32>
    %1208 = arith.mulf %1207, %1206 : vector<2x32xf32>
    %cst_604 = arith.constant 5.000000e-01 : f32
    %1209 = vector.broadcast %cst_604 : f32 to vector<2x32xf32>
    %1210 = arith.addf %1209, %1208 : vector<2x32xf32>
    %1211 = vector.extract_strided_slice %1205 {offsets = [0, 32], sizes = [2, 32], strides = [1, 1]} : vector<2x128xf32> to vector<2x32xf32>
    %cst_605 = arith.constant 5.000000e-01 : f32
    %1212 = vector.broadcast %cst_605 : f32 to vector<2x32xf32>
    %1213 = arith.mulf %1212, %1211 : vector<2x32xf32>
    %cst_606 = arith.constant 5.000000e-01 : f32
    %1214 = vector.broadcast %cst_606 : f32 to vector<2x32xf32>
    %1215 = arith.addf %1214, %1213 : vector<2x32xf32>
    %1216 = vector.extract_strided_slice %1205 {offsets = [0, 64], sizes = [2, 32], strides = [1, 1]} : vector<2x128xf32> to vector<2x32xf32>
    %1217 = vector.extract_strided_slice %1205 {offsets = [0, 96], sizes = [2, 32], strides = [1, 1]} : vector<2x128xf32> to vector<2x32xf32>
    %cst_607 = arith.constant 5.000000e-01 : f32
    %1218 = vector.broadcast %cst_607 : f32 to vector<2x32xf32>
    %1219 = arith.mulf %1218, %1217 : vector<2x32xf32>
    %cst_608 = arith.constant 5.000000e-01 : f32
    %1220 = vector.broadcast %cst_608 : f32 to vector<2x32xf32>
    %1221 = arith.addf %1220, %1219 : vector<2x32xf32>
    %1222 = arith.mulf %1215, %1155 : vector<2x32xf32>
    %1223 = arith.mulf %1210, %1216 : vector<2x32xf32>
    %1224 = arith.addf %1222, %1223 : vector<2x32xf32>
    %1225 = math.tanh %1224 : vector<2x32xf32>
    %1226 = arith.mulf %1221, %1225 : vector<2x32xf32>
    %1227 = arith.index_cast %1196 : i32 to index
    %c0_609 = arith.constant 0 : index
    %c32_610 = arith.constant 32 : index
    %1228 = vector.load %arg6[%1227, %c0_609, %c32_610] : memref<8x2x64xf32, #tpu.memory_space<vmem>>, vector<1x2x32xf32>
    %1229 = vector.shape_cast %1228 : vector<1x2x32xf32> to vector<2x32xf32>
    %1230 = vector.shape_cast %1226 : vector<2x32xf32> to vector<1x2x32xf32>
    tpu.vector_store %arg6[%1227, %c0_609, %c32_610], %1230 {strides = array<i32>} : memref<8x2x64xf32, #tpu.memory_space<vmem>>, vector<1x2x32xf32>,
    %c7_i32_611 = arith.constant 7 : i32
    %c0_i32_612 = arith.constant 0 : i32
    %c0_i32_613 = arith.constant 0 : i32
    %c0_i32_614 = arith.constant 0 : i32
    %1231 = tpu.memref_slice %arg8[%c0_i32_399, %c0_i32_612, %c0_i32_613, %c0_i32_614] : memref<2x8x2x128xf32, #tpu.memory_space<vmem>> -> memref<1x8x2x128xf32, #tpu.memory_space<vmem>>
    %1232 = tpu.memref_squeeze %1231 : memref<1x8x2x128xf32, #tpu.memory_space<vmem>> -> memref<8x2x128xf32, #tpu.memory_space<vmem>>
    %1233 = arith.index_cast %c7_i32_611 : i32 to index
    %c0_615 = arith.constant 0 : index
    %c0_616 = arith.constant 0 : index
    %1234 = vector.load %1232[%1233, %c0_615, %c0_616] : memref<8x2x128xf32, #tpu.memory_space<vmem>>, vector<1x2x128xf32>
    %1235 = vector.shape_cast %1234 : vector<1x2x128xf32> to vector<2x128xf32>
    %1236 = arith.truncf %1191 : vector<2x32xf32> to vector<2x32xbf16>
    %cst_617 = arith.constant dense<0.000000e+00> : vector<2x128xf32>
    %1237 = tpu.matmul %1236, %737, %cst_617 {dimension_numbers = #tpu.dot_dimension_numbers<[1], [0], [0], [1], [0, 0, 1, 1], [], []>} : vector<2x32xbf16>, vector<32x128xbf16>, vector<2x128xf32> -> vector<2x128xf32>
    %1238 = arith.addf %1235, %1237 : vector<2x128xf32>
    %1239 = math.tanh %1238 : vector<2x128xf32>
    %1240 = vector.extract_strided_slice %1239 {offsets = [0, 0], sizes = [2, 32], strides = [1, 1]} : vector<2x128xf32> to vector<2x32xf32>
    %cst_618 = arith.constant 5.000000e-01 : f32
    %1241 = vector.broadcast %cst_618 : f32 to vector<2x32xf32>
    %1242 = arith.mulf %1241, %1240 : vector<2x32xf32>
    %cst_619 = arith.constant 5.000000e-01 : f32
    %1243 = vector.broadcast %cst_619 : f32 to vector<2x32xf32>
    %1244 = arith.addf %1243, %1242 : vector<2x32xf32>
    %1245 = vector.extract_strided_slice %1239 {offsets = [0, 32], sizes = [2, 32], strides = [1, 1]} : vector<2x128xf32> to vector<2x32xf32>
    %cst_620 = arith.constant 5.000000e-01 : f32
    %1246 = vector.broadcast %cst_620 : f32 to vector<2x32xf32>
    %1247 = arith.mulf %1246, %1245 : vector<2x32xf32>
    %cst_621 = arith.constant 5.000000e-01 : f32
    %1248 = vector.broadcast %cst_621 : f32 to vector<2x32xf32>
    %1249 = arith.addf %1248, %1247 : vector<2x32xf32>
    %1250 = vector.extract_strided_slice %1239 {offsets = [0, 64], sizes = [2, 32], strides = [1, 1]} : vector<2x128xf32> to vector<2x32xf32>
    %1251 = vector.extract_strided_slice %1239 {offsets = [0, 96], sizes = [2, 32], strides = [1, 1]} : vector<2x128xf32> to vector<2x32xf32>
    %cst_622 = arith.constant 5.000000e-01 : f32
    %1252 = vector.broadcast %cst_622 : f32 to vector<2x32xf32>
    %1253 = arith.mulf %1252, %1251 : vector<2x32xf32>
    %cst_623 = arith.constant 5.000000e-01 : f32
    %1254 = vector.broadcast %cst_623 : f32 to vector<2x32xf32>
    %1255 = arith.addf %1254, %1253 : vector<2x32xf32>
    %1256 = arith.mulf %1249, %1189 : vector<2x32xf32>
    %1257 = arith.mulf %1244, %1250 : vector<2x32xf32>
    %1258 = arith.addf %1256, %1257 : vector<2x32xf32>
    %1259 = math.tanh %1258 : vector<2x32xf32>
    %1260 = arith.mulf %1255, %1259 : vector<2x32xf32>
    %1261 = arith.index_cast %c7_i32_611 : i32 to index
    %c0_624 = arith.constant 0 : index
    %c0_625 = arith.constant 0 : index
    %1262 = vector.load %arg6[%1261, %c0_624, %c0_625] : memref<8x2x64xf32, #tpu.memory_space<vmem>>, vector<1x2x32xf32>
    %1263 = vector.shape_cast %1262 : vector<1x2x32xf32> to vector<2x32xf32>
    %1264 = vector.shape_cast %1260 : vector<2x32xf32> to vector<1x2x32xf32>
    tpu.vector_store %arg6[%1261, %c0_624, %c0_625], %1264 {strides = array<i32>} : memref<8x2x64xf32, #tpu.memory_space<vmem>>, vector<1x2x32xf32>,
    %c7_i32_626 = arith.constant 7 : i32
    %1265 = arith.subi %c7_i32_626, %c7_i32_611 : i32
    %c0_i32_627 = arith.constant 0 : i32
    %c0_i32_628 = arith.constant 0 : i32
    %c0_i32_629 = arith.constant 0 : i32
    %1266 = tpu.memref_slice %arg8[%c1_i32_400, %c0_i32_627, %c0_i32_628, %c0_i32_629] : memref<2x8x2x128xf32, #tpu.memory_space<vmem>> -> memref<1x8x2x128xf32, #tpu.memory_space<vmem>>
    %1267 = tpu.memref_squeeze %1266 : memref<1x8x2x128xf32, #tpu.memory_space<vmem>> -> memref<8x2x128xf32, #tpu.memory_space<vmem>>
    %1268 = arith.index_cast %1265 : i32 to index
    %c0_630 = arith.constant 0 : index
    %c0_631 = arith.constant 0 : index
    %1269 = vector.load %1267[%1268, %c0_630, %c0_631] : memref<8x2x128xf32, #tpu.memory_space<vmem>>, vector<1x2x128xf32>
    %1270 = vector.shape_cast %1269 : vector<1x2x128xf32> to vector<2x128xf32>
    %1271 = arith.truncf %1226 : vector<2x32xf32> to vector<2x32xbf16>
    %cst_632 = arith.constant dense<0.000000e+00> : vector<2x128xf32>
    %1272 = tpu.matmul %1271, %739, %cst_632 {dimension_numbers = #tpu.dot_dimension_numbers<[1], [0], [0], [1], [0, 0, 1, 1], [], []>} : vector<2x32xbf16>, vector<32x128xbf16>, vector<2x128xf32> -> vector<2x128xf32>
    %1273 = arith.addf %1270, %1272 : vector<2x128xf32>
    %1274 = math.tanh %1273 : vector<2x128xf32>
    %1275 = vector.extract_strided_slice %1274 {offsets = [0, 0], sizes = [2, 32], strides = [1, 1]} : vector<2x128xf32> to vector<2x32xf32>
    %cst_633 = arith.constant 5.000000e-01 : f32
    %1276 = vector.broadcast %cst_633 : f32 to vector<2x32xf32>
    %1277 = arith.mulf %1276, %1275 : vector<2x32xf32>
    %cst_634 = arith.constant 5.000000e-01 : f32
    %1278 = vector.broadcast %cst_634 : f32 to vector<2x32xf32>
    %1279 = arith.addf %1278, %1277 : vector<2x32xf32>
    %1280 = vector.extract_strided_slice %1274 {offsets = [0, 32], sizes = [2, 32], strides = [1, 1]} : vector<2x128xf32> to vector<2x32xf32>
    %cst_635 = arith.constant 5.000000e-01 : f32
    %1281 = vector.broadcast %cst_635 : f32 to vector<2x32xf32>
    %1282 = arith.mulf %1281, %1280 : vector<2x32xf32>
    %cst_636 = arith.constant 5.000000e-01 : f32
    %1283 = vector.broadcast %cst_636 : f32 to vector<2x32xf32>
    %1284 = arith.addf %1283, %1282 : vector<2x32xf32>
    %1285 = vector.extract_strided_slice %1274 {offsets = [0, 64], sizes = [2, 32], strides = [1, 1]} : vector<2x128xf32> to vector<2x32xf32>
    %1286 = vector.extract_strided_slice %1274 {offsets = [0, 96], sizes = [2, 32], strides = [1, 1]} : vector<2x128xf32> to vector<2x32xf32>
    %cst_637 = arith.constant 5.000000e-01 : f32
    %1287 = vector.broadcast %cst_637 : f32 to vector<2x32xf32>
    %1288 = arith.mulf %1287, %1286 : vector<2x32xf32>
    %cst_638 = arith.constant 5.000000e-01 : f32
    %1289 = vector.broadcast %cst_638 : f32 to vector<2x32xf32>
    %1290 = arith.addf %1289, %1288 : vector<2x32xf32>
    %1291 = arith.mulf %1284, %1224 : vector<2x32xf32>
    %1292 = arith.mulf %1279, %1285 : vector<2x32xf32>
    %1293 = arith.addf %1291, %1292 : vector<2x32xf32>
    %1294 = math.tanh %1293 : vector<2x32xf32>
    %1295 = arith.mulf %1290, %1294 : vector<2x32xf32>
    %1296 = arith.index_cast %1265 : i32 to index
    %c0_639 = arith.constant 0 : index
    %c32_640 = arith.constant 32 : index
    %1297 = vector.load %arg6[%1296, %c0_639, %c32_640] : memref<8x2x64xf32, #tpu.memory_space<vmem>>, vector<1x2x32xf32>
    %1298 = vector.shape_cast %1297 : vector<1x2x32xf32> to vector<2x32xf32>
    %1299 = vector.shape_cast %1295 : vector<2x32xf32> to vector<1x2x32xf32>
    tpu.vector_store %arg6[%1296, %c0_639, %c32_640], %1299 {strides = array<i32>} : memref<8x2x64xf32, #tpu.memory_space<vmem>>, vector<1x2x32xf32>,
    %c8_i32_641 = arith.constant 8 : i32
    return
  }
}

</mosaic_0001>

<llo_original>
// kernel: tpu_custom_call.1
$region0: #{tpu_custom_call.1}
  #allocation0 [shape = 'u32[]', space=smem, size = 0x4, offset = 0x4, fixed_abs, tag = 'smem constant byte address 0x4 - core index']
  #allocation1 [shape = 'u32[72,128]{1,0:T(1,128)}', space=vmem, size = 0x9000, scoped, tag = 'internal scratch']
  #allocation2 [shape = 'f32[8,2,64]{2,1,0:T(2,128)}', space=vmem, size = 0x2000, scoped, tag = 'scratch operand']
  #allocation3 [shape = 'f32[2,8,2,128]{3,2,1,0:T(2,128)}', space=vmem, size = 0x4000, scoped, tag = 'scratch operand']
  %s0 = inlined_call_operand.hbm [shape: f32[2,8,2,128], index: 0, kind: input, shape index: {}]
  %s1 = inlined_call_operand.hbm [shape: bf16[2,2,32,128], index: 1, kind: input, shape index: {}]
  %s2 = inlined_call_operand.hbm [shape: f32[2,2,2,32], index: 2, kind: input, shape index: {}]
  %s3 = inlined_call_operand.hbm [shape: f32[2,2,2,32], index: 3, kind: input, shape index: {}]
  %s4 = inlined_call_operand.hbm [shape: bf16[1,64,256], index: 4, kind: input, shape index: {}]
  %s5 = inlined_call_operand.vmem [shape: f32[1,1,256], index: 5, kind: input, shape index: {}]
  %s6 = inlined_call_operand.hbm [shape: f32[8,2,64], index: 6, kind: output, shape index: {}]
  %s7 = sld [smem:[#allocation0]]
  $region54: #{tpu_custom_call.1} parent=0
    _
  %s9 = ssub.s32 1, %s7
  %s10 = scalar_select 0, %s9, %s7
  $region1: #{tpu_custom_call.1} parent=0
    #allocation4 [shape = 'u8[16384]{0}', space=vmem, size = 0x4000, scoped, tag = 'input window, operand 0, single buffered']
    #allocation5 [shape = 's32[1]{0}', space=sflag, size = 0x4, scoped, tag = 'scoped memory for tpu_custom_call.1']
    #allocation6 [shape = 's32[1]{0}', space=sflag, size = 0x4, scoped, tag = 'scoped memory for tpu_custom_call.1']
    #allocation7 [shape = 'u8[32768]{0}', space=vmem, size = 0x8000, scoped, tag = 'input window, operand 1, single buffered']
    #allocation8 [shape = 's32[1]{0}', space=sflag, size = 0x4, scoped, tag = 'scoped memory for tpu_custom_call.1']
    #allocation9 [shape = 'u8[4096]{0}', space=vmem, size = 0x1000, scoped, tag = 'input window, operand 2, single buffered']
    #allocation10 [shape = 'u8[4096]{0}', space=vmem, size = 0x1000, scoped, tag = 'input window, operand 3, single buffered']
    #allocation11 [shape = 's32[1]{0}', space=sflag, size = 0x4, scoped, tag = 'scoped memory for tpu_custom_call.1']
    #allocation12 [shape = 'u8[32768]{0}', space=vmem, size = 0x8000, scoped, tag = 'input window, operand 4, single buffered']
    #allocation13 [shape = 'u8[8192]{0}', space=vmem, size = 0x2000, scoped, tag = 'output window, operand 0, single buffered']
    %11 = vsyncpa [#allocation5], 0
    %12 = vsyncpa [#allocation8], 0
    %13 = vsyncpa [#allocation11], 0
    %14 = vsyncpa [#allocation6], 0
    // Predicated region
    $region2: #{tpu_custom_call.1} parent=1 // pred_check
      _
    $region3: #{tpu_custom_call.1} parent=1 // pred_check_branch
      %16 = sbr.rel (0) target = $region5
    $region4: #{tpu_custom_call.1} parent=1 // pred_region
      %18 = vsyncadd [#allocation5], 0
      %s19 = sshll.u32 %s0, 4
      %s20 = int_to_ptr.hbm [resolvable:$true] %s19
      %s21 = sshll.u32 [#allocation4], 4
      %s22 = int_to_ptr.vmem [resolvable:$true] %s21
      %27 = dma.hbm_to_vmem [thread:$0]  %s20, 512, %s22, [#allocation5], 32, 32, 2
    $region5: #{tpu_custom_call.1} parent=1 // pred_fallthru
      _
    // Predicated region
    $region6: #{tpu_custom_call.1} parent=1 // pred_check
      _
    $region7: #{tpu_custom_call.1} parent=1 // pred_check_branch
      %29 = sbr.rel (0) target = $region9
    $region8: #{tpu_custom_call.1} parent=1 // pred_region
      %31 = vsyncadd [#allocation8], 0
      %s32 = sshll.u32 %s1, 4
      %s33 = int_to_ptr.hbm [resolvable:$true] %s32
      %s34 = sshll.u32 [#allocation7], 4
      %s35 = int_to_ptr.vmem [resolvable:$true] %s34
      %40 = dma.hbm_to_vmem [thread:$0]  %s33, 1024, %s35, [#allocation8], 64, 64, 4
    $region9: #{tpu_custom_call.1} parent=1 // pred_fallthru
      _
    // Predicated region
    $region10: #{tpu_custom_call.1} parent=1 // pred_check
      _
    $region11: #{tpu_custom_call.1} parent=1 // pred_check_branch
      %42 = sbr.rel (0) target = $region13
    $region12: #{tpu_custom_call.1} parent=1 // pred_region
      %44 = vsyncadd [#allocation8], 0
      %s45 = sshll.u32 %s2, 4
      %s46 = int_to_ptr.hbm [resolvable:$true] %s45
      %s47 = sshll.u32 [#allocation9], 4
      %s48 = int_to_ptr.vmem [resolvable:$true] %s47
      %53 = dma.hbm_to_vmem [thread:$0]  %s46, 128, %s48, [#allocation8], 32, 32, 2
    $region13: #{tpu_custom_call.1} parent=1 // pred_fallthru
      _
    // Predicated region
    $region14: #{tpu_custom_call.1} parent=1 // pred_check
      _
    $region15: #{tpu_custom_call.1} parent=1 // pred_check_branch
      %55 = sbr.rel (0) target = $region17
    $region16: #{tpu_custom_call.1} parent=1 // pred_region
      %57 = vsyncadd [#allocation11], 0
      %s58 = sshll.u32 %s3, 4
      %s59 = int_to_ptr.hbm [resolvable:$true] %s58
      %s60 = sshll.u32 [#allocation10], 4
      %s61 = int_to_ptr.vmem [resolvable:$true] %s60
      %66 = dma.hbm_to_vmem [thread:$0]  %s59, 128, %s61, [#allocation11], 32, 32, 2
    $region17: #{tpu_custom_call.1} parent=1 // pred_fallthru
      _
    // Predicated region
    $region18: #{tpu_custom_call.1} parent=1 // pred_check
      _
    $region19: #{tpu_custom_call.1} parent=1 // pred_check_branch
      %68 = sbr.rel (0) target = $region21
    $region20: #{tpu_custom_call.1} parent=1 // pred_region
      %70 = vsyncadd [#allocation11], 0
      %s71 = sshll.u32 %s4, 4
      %s72 = int_to_ptr.hbm [resolvable:$true] %s71
      %s73 = sshll.u32 [#allocation12], 4
      %s74 = int_to_ptr.vmem [resolvable:$true] %s73
      %79 = dma.hbm_to_vmem [thread:$0]  %s72, 1024, %s74, [#allocation11], 128, 128, 8
    $region21: #{tpu_custom_call.1} parent=1 // pred_fallthru
      _
    // Predicated region
    $region22: #{tpu_custom_call.1} parent=1 // pred_check
      _
    $region23: #{tpu_custom_call.1} parent=1 // pred_check_branch
      %81 = sbr.rel (0) target = $region25
    $region24: #{tpu_custom_call.1} parent=1 // pred_region
      _
    $region25: #{tpu_custom_call.1} parent=1 // pred_fallthru
      _
    // Predicated region
    $region26: #{tpu_custom_call.1} parent=1 // pred_check
      _
    $region27: #{tpu_custom_call.1} parent=1 // pred_check_branch
      %83 = sbr.rel (0) target = $region29
    $region28: #{tpu_custom_call.1} parent=1 // pred_region
      %85 = dma.done [#allocation5], 512
    $region29: #{tpu_custom_call.1} parent=1 // pred_fallthru
      _
    // Predicated region
    $region30: #{tpu_custom_call.1} parent=1 // pred_check
      _
    $region31: #{tpu_custom_call.1} parent=1 // pred_check_branch
      %87 = sbr.rel (0) target = $region33
    $region32: #{tpu_custom_call.1} parent=1 // pred_region
      %89 = dma.done [#allocation8], 1024
    $region33: #{tpu_custom_call.1} parent=1 // pred_fallthru
      _
    // Predicated region
    $region34: #{tpu_custom_call.1} parent=1 // pred_check
      _
    $region35: #{tpu_custom_call.1} parent=1 // pred_check_branch
      %91 = sbr.rel (0) target = $region37
    $region36: #{tpu_custom_call.1} parent=1 // pred_region
      %93 = dma.done [#allocation8], 128
    $region37: #{tpu_custom_call.1} parent=1 // pred_fallthru
      _
    // Predicated region
    $region38: #{tpu_custom_call.1} parent=1 // pred_check
      _
    $region39: #{tpu_custom_call.1} parent=1 // pred_check_branch
      %95 = sbr.rel (0) target = $region41
    $region40: #{tpu_custom_call.1} parent=1 // pred_region
      %97 = dma.done [#allocation11], 128
    $region41: #{tpu_custom_call.1} parent=1 // pred_fallthru
      _
    // Predicated region
    $region42: #{tpu_custom_call.1} parent=1 // pred_check
      _
    $region43: #{tpu_custom_call.1} parent=1 // pred_check_branch
      %99 = sbr.rel (0) target = $region45
    $region44: #{tpu_custom_call.1} parent=1 // pred_region
      %101 = dma.done [#allocation11], 1024
    $region45: #{tpu_custom_call.1} parent=1 // pred_fallthru
      _
    %v103 = vld [vmem:[#allocation7] sm:$0xf]
    %v104 = vld [vmem:[#allocation7 + $0x4] sm:$0xf]
    %v105 = vld [vmem:[#allocation7 + $0x8] sm:$0xf]
    %v106 = vld [vmem:[#allocation7 + $0xc] sm:$0xf]
    %s107 = scalar_lea.vmem [#allocation7], 16
    %v108 = vld [vmem:[%s107] sm:$0xf]
    %v109 = vld [vmem:[%s107 + $0x4] sm:$0xf]
    %v110 = vld [vmem:[%s107 + $0x8] sm:$0xf]
    %v111 = vld [vmem:[%s107 + $0xc] sm:$0xf]
    %v112 = vld [vmem:[#allocation9] sm:$0x3]
    %v113 = vld [vmem:[#allocation10] sm:$0x3]
    %s114 = scalar_lea.vmem [#allocation9], 2
    %v115 = vld [vmem:[%s114] sm:$0x3]
    %s116 = scalar_lea.vmem [#allocation10], 2
    %v117 = vld [vmem:[%s116] sm:$0x3]
    %v118 = vld [vmem:[#allocation4] sm:$0x3]
    %v119 = vpack.c.bf16 %v112, %v112
    %v124 = vunpack.c.l.b16 %v103
    %v125 = vunpack.c.l.b16 %v104
    %v126 = vunpack.c.l.b16 %v105
    %v127 = vunpack.c.l.b16 %v106
    %v128 = vpack.c.b16 %v125, %v124
    %v129 = vpack.c.b16 %v127, %v126
    %vm132 = vcmask 261120
    %v134 = vsel %vm132, %v119, 0
    %136 = vmatpush.bf16.msra.mxu0 0
    %137 = vmatpush.bf16.msra.mxu0 0
    %138 = vmatpush.bf16.msra.mxu0 0
    %139 = vmatpush.bf16.msra.mxu0 0
    %140 = vmatpush.bf16.msra.mxu0 0
    %141 = vmatpush.bf16.msra.mxu0 0
    %142 = vmatpush.bf16.msra.mxu0 %v129
    %143 = vmatpush.bf16.msra.mxu0 %v128
    %144 = vmatmul.bf16.gmra.mxu0 %v134
    %v145 = vpop.f32.mrf.mxu0
    %v146 = vadd.f32 0.0, %v145
    %v147 = vpop.f32.mrf.mxu0
    %148 = vdwg.mxu0
    %v149 = vadd.f32 %v118, %v146
    %v150 = vtanh.pop %v149
    %v151 = vmul.f32 %v150, 0.5
    %v152 = vadd.f32 %v151, 0.5
    %154 = vrot.lane.b32.xlu0 %v113, 32
    %v155 = vpop.permute.xlu0 %154
    %v157 = vmul.f32 %v152, %v155
    %159 = vrot.lane.b32.xlu0 %v150, 64
    %v160 = vpop.permute.xlu0 %159
    %v162 = vmul.f32 %v152, %v160
    %164 = vrot.lane.b32.xlu0 %v162, 32
    %v165 = vpop.permute.xlu0 %164
    %v167 = vadd.f32 %v157, %v165
    %v168 = vtanh.pop %v167
    %170 = vrot.lane.b32.xlu0 %v168, 64
    %v171 = vpop.permute.xlu0 %170
    %v173 = vmul.f32 %v152, %v171
    %175 = vrot.lane.b32.xlu0 %v173, 32
    %v176 = vpop.permute.xlu0 %175
    %vm178 = vcmask 254976
    %179 = vst.msk [vmem:[#allocation2] sm:$0x3] %vm178, %v176
    %s180 = scalar_lea.vmem [#allocation4], 16
    %s181 = scalar_lea.vmem %s180, 14 [#allocation4]
    %v182 = vld [vmem:[%s181] sm:$0x3]
    %v183 = vpack.c.bf16 %v115, %v115
    %v188 = vunpack.c.l.b16 %v108
    %v189 = vunpack.c.l.b16 %v109
    %v190 = vunpack.c.l.b16 %v110
    %v191 = vunpack.c.l.b16 %v111
    %v192 = vpack.c.b16 %v189, %v188
    %v193 = vpack.c.b16 %v191, %v190
    %v197 = vsel %vm132, %v183, 0
    %199 = vmatpush.bf16.msra.mxu0 0
    %200 = vmatpush.bf16.msra.mxu0 0
    %201 = vmatpush.bf16.msra.mxu0 0
    %202 = vmatpush.bf16.msra.mxu0 0
    %203 = vmatpush.bf16.msra.mxu0 0
    %204 = vmatpush.bf16.msra.mxu0 0
    %205 = vmatpush.bf16.msra.mxu0 %v193
    %206 = vmatpush.bf16.msra.mxu0 %v192
    %207 = vmatmul.bf16.gmra.mxu0 %v197
    %v208 = vpop.f32.mrf.mxu0
    %v209 = vadd.f32 0.0, %v208
    %v210 = vpop.f32.mrf.mxu0
    %211 = vdwg.mxu0
    %v212 = vadd.f32 %v182, %v209
    %v213 = vtanh.pop %v212
    %v214 = vmul.f32 %v213, 0.5
    %v215 = vadd.f32 %v214, 0.5
    %217 = vrot.lane.b32.xlu0 %v117, 32
    %v218 = vpop.permute.xlu0 %217
    %v220 = vmul.f32 %v215, %v218
    %222 = vrot.lane.b32.xlu0 %v213, 64
    %v223 = vpop.permute.xlu0 %222
    %v225 = vmul.f32 %v215, %v223
    %227 = vrot.lane.b32.xlu0 %v225, 32
    %v228 = vpop.permute.xlu0 %227
    %v230 = vadd.f32 %v220, %v228
    %v231 = vtanh.pop %v230
    %233 = vrot.lane.b32.xlu0 %v231, 64
    %v234 = vpop.permute.xlu0 %233
    %v236 = vmul.f32 %v215, %v234
    %238 = vrot.lane.b32.xlu0 %v236, 64
    %v239 = vpop.permute.xlu0 %238
    %s241 = scalar_lea.vmem [#allocation2], 14
    %vm242 = vcmask 517376
    %243 = vst.msk [vmem:[%s241] sm:$0x3] %vm242, %v239
    %s244 = scalar_lea.vmem [#allocation4], 2
    %v245 = vld [vmem:[%s244] sm:$0x3]
    %v246 = vpack.c.bf16 %v173, %v173
    %248 = vrot.lane.b32.xlu0 %v246, 32
    %v249 = vpop.permute.xlu0 %248
    %v251 = vsel %vm132, %v249, 0
    %253 = vmatpush.bf16.msra.mxu0 0
    %254 = vmatpush.bf16.msra.mxu0 0
    %255 = vmatpush.bf16.msra.mxu0 0
    %256 = vmatpush.bf16.msra.mxu0 0
    %257 = vmatpush.bf16.msra.mxu0 0
    %258 = vmatpush.bf16.msra.mxu0 0
    %259 = vmatpush.bf16.msra.mxu0 %v129
    %260 = vmatpush.bf16.msra.mxu0 %v128
    %261 = vmatmul.bf16.gmra.mxu0 %v251
    %v262 = vpop.f32.mrf.mxu0
    %v263 = vadd.f32 0.0, %v262
    %v264 = vpop.f32.mrf.mxu0
    %265 = vdwg.mxu0
    %v266 = vadd.f32 %v245, %v263
    %v267 = vtanh.pop %v266
    %v268 = vmul.f32 %v267, 0.5
    %v269 = vadd.f32 %v268, 0.5
    %v270 = vmul.f32 %v269, %v167
    %272 = vrot.lane.b32.xlu0 %v267, 64
    %v273 = vpop.permute.xlu0 %272
    %v275 = vmul.f32 %v269, %v273
    %277 = vrot.lane.b32.xlu0 %v275, 32
    %v278 = vpop.permute.xlu0 %277
    %v280 = vadd.f32 %v270, %v278
    %v281 = vtanh.pop %v280
    %283 = vrot.lane.b32.xlu0 %v281, 64
    %v284 = vpop.permute.xlu0 %283
    %v286 = vmul.f32 %v269, %v284
    %288 = vrot.lane.b32.xlu0 %v286, 32
    %v289 = vpop.permute.xlu0 %288
    %s291 = scalar_lea.vmem [#allocation2], 2
    %292 = vst.msk [vmem:[%s291] sm:$0x3] %vm178, %v289
    %s293 = scalar_lea.vmem %s180, 12 [#allocation4]
    %v294 = vld [vmem:[%s293] sm:$0x3]
    %v295 = vpack.c.bf16 %v236, %v236
    %297 = vrot.lane.b32.xlu0 %v295, 32
    %v298 = vpop.permute.xlu0 %297
    %v300 = vsel %vm132, %v298, 0
    %302 = vmatpush.bf16.msra.mxu0 0
    %303 = vmatpush.bf16.msra.mxu0 0
    %304 = vmatpush.bf16.msra.mxu0 0
    %305 = vmatpush.bf16.msra.mxu0 0
    %306 = vmatpush.bf16.msra.mxu0 0
    %307 = vmatpush.bf16.msra.mxu0 0
    %308 = vmatpush.bf16.msra.mxu0 %v193
    %309 = vmatpush.bf16.msra.mxu0 %v192
    %310 = vmatmul.bf16.gmra.mxu0 %v300
    %v311 = vpop.f32.mrf.mxu0
    %v312 = vadd.f32 0.0, %v311
    %v313 = vpop.f32.mrf.mxu0
    %314 = vdwg.mxu0
    %v315 = vadd.f32 %v294, %v312
    %v316 = vtanh.pop %v315
    %v317 = vmul.f32 %v316, 0.5
    %v318 = vadd.f32 %v317, 0.5
    %v319 = vmul.f32 %v318, %v230
    %321 = vrot.lane.b32.xlu0 %v316, 64
    %v322 = vpop.permute.xlu0 %321
    %v324 = vmul.f32 %v318, %v322
    %326 = vrot.lane.b32.xlu0 %v324, 32
    %v327 = vpop.permute.xlu0 %326
    %v329 = vadd.f32 %v319, %v327
    %v330 = vtanh.pop %v329
    %332 = vrot.lane.b32.xlu0 %v330, 64
    %v333 = vpop.permute.xlu0 %332
    %v335 = vmul.f32 %v318, %v333
    %337 = vrot.lane.b32.xlu0 %v335, 64
    %v338 = vpop.permute.xlu0 %337
    %s340 = scalar_lea.vmem [#allocation2], 12
    %341 = vst.msk [vmem:[%s340] sm:$0x3] %vm242, %v338
    %s342 = scalar_lea.vmem [#allocation4], 4
    %v343 = vld [vmem:[%s342] sm:$0x3]
    %v344 = vpack.c.bf16 %v286, %v286
    %346 = vrot.lane.b32.xlu0 %v344, 32
    %v347 = vpop.permute.xlu0 %346
    %v349 = vsel %vm132, %v347, 0
    %351 = vmatpush.bf16.msra.mxu0 0
    %352 = vmatpush.bf16.msra.mxu0 0
    %353 = vmatpush.bf16.msra.mxu0 0
    %354 = vmatpush.bf16.msra.mxu0 0
    %355 = vmatpush.bf16.msra.mxu0 0
    %356 = vmatpush.bf16.msra.mxu0 0
    %357 = vmatpush.bf16.msra.mxu0 %v129
    %358 = vmatpush.bf16.msra.mxu0 %v128
    %359 = vmatmul.bf16.gmra.mxu0 %v349
    %v360 = vpop.f32.mrf.mxu0
    %v361 = vadd.f32 0.0, %v360
    %v362 = vpop.f32.mrf.mxu0
    %363 = vdwg.mxu0
    %v364 = vadd.f32 %v343, %v361
    %v365 = vtanh.pop %v364
    %v366 = vmul.f32 %v365, 0.5
    %v367 = vadd.f32 %v366, 0.5
    %v368 = vmul.f32 %v367, %v280
    %370 = vrot.lane.b32.xlu0 %v365, 64
    %v371 = vpop.permute.xlu0 %370
    %v373 = vmul.f32 %v367, %v371
    %375 = vrot.lane.b32.xlu0 %v373, 32
    %v376 = vpop.permute.xlu0 %375
    %v378 = vadd.f32 %v368, %v376
    %v379 = vtanh.pop %v378
    %381 = vrot.lane.b32.xlu0 %v379, 64
    %v382 = vpop.permute.xlu0 %381
    %v384 = vmul.f32 %v367, %v382
    %386 = vrot.lane.b32.xlu0 %v384, 32
    %v387 = vpop.permute.xlu0 %386
    %s389 = scalar_lea.vmem [#allocation2], 4
    %390 = vst.msk [vmem:[%s389] sm:$0x3] %vm178, %v387
    %s391 = scalar_lea.vmem %s180, 10 [#allocation4]
    %v392 = vld [vmem:[%s391] sm:$0x3]
    %v393 = vpack.c.bf16 %v335, %v335
    %395 = vrot.lane.b32.xlu0 %v393, 32
    %v396 = vpop.permute.xlu0 %395
    %v398 = vsel %vm132, %v396, 0
    %400 = vmatpush.bf16.msra.mxu0 0
    %401 = vmatpush.bf16.msra.mxu0 0
    %402 = vmatpush.bf16.msra.mxu0 0
    %403 = vmatpush.bf16.msra.mxu0 0
    %404 = vmatpush.bf16.msra.mxu0 0
    %405 = vmatpush.bf16.msra.mxu0 0
    %406 = vmatpush.bf16.msra.mxu0 %v193
    %407 = vmatpush.bf16.msra.mxu0 %v192
    %408 = vmatmul.bf16.gmra.mxu0 %v398
    %v409 = vpop.f32.mrf.mxu0
    %v410 = vadd.f32 0.0, %v409
    %v411 = vpop.f32.mrf.mxu0
    %412 = vdwg.mxu0
    %v413 = vadd.f32 %v392, %v410
    %v414 = vtanh.pop %v413
    %v415 = vmul.f32 %v414, 0.5
    %v416 = vadd.f32 %v415, 0.5
    %v417 = vmul.f32 %v416, %v329
    %419 = vrot.lane.b32.xlu0 %v414, 64
    %v420 = vpop.permute.xlu0 %419
    %v422 = vmul.f32 %v416, %v420
    %424 = vrot.lane.b32.xlu0 %v422, 32
    %v425 = vpop.permute.xlu0 %424
    %v427 = vadd.f32 %v417, %v425
    %v428 = vtanh.pop %v427
    %430 = vrot.lane.b32.xlu0 %v428, 64
    %v431 = vpop.permute.xlu0 %430
    %v433 = vmul.f32 %v416, %v431
    %435 = vrot.lane.b32.xlu0 %v433, 64
    %v436 = vpop.permute.xlu0 %435
    %s438 = scalar_lea.vmem [#allocation2], 10
    %439 = vst.msk [vmem:[%s438] sm:$0x3] %vm242, %v436
    %s440 = scalar_lea.vmem [#allocation4], 6
    %v441 = vld [vmem:[%s440] sm:$0x3]
    %v442 = vpack.c.bf16 %v384, %v384
    %444 = vrot.lane.b32.xlu0 %v442, 32
    %v445 = vpop.permute.xlu0 %444
    %v447 = vsel %vm132, %v445, 0
    %449 = vmatpush.bf16.msra.mxu0 0
    %450 = vmatpush.bf16.msra.mxu0 0
    %451 = vmatpush.bf16.msra.mxu0 0
    %452 = vmatpush.bf16.msra.mxu0 0
    %453 = vmatpush.bf16.msra.mxu0 0
    %454 = vmatpush.bf16.msra.mxu0 0
    %455 = vmatpush.bf16.msra.mxu0 %v129
    %456 = vmatpush.bf16.msra.mxu0 %v128
    %457 = vmatmul.bf16.gmra.mxu0 %v447
    %v458 = vpop.f32.mrf.mxu0
    %v459 = vadd.f32 0.0, %v458
    %v460 = vpop.f32.mrf.mxu0
    %461 = vdwg.mxu0
    %v462 = vadd.f32 %v441, %v459
    %v463 = vtanh.pop %v462
    %v464 = vmul.f32 %v463, 0.5
    %v465 = vadd.f32 %v464, 0.5
    %v466 = vmul.f32 %v465, %v378
    %468 = vrot.lane.b32.xlu0 %v463, 64
    %v469 = vpop.permute.xlu0 %468
    %v471 = vmul.f32 %v465, %v469
    %473 = vrot.lane.b32.xlu0 %v471, 32
    %v474 = vpop.permute.xlu0 %473
    %v476 = vadd.f32 %v466, %v474
    %v477 = vtanh.pop %v476
    %479 = vrot.lane.b32.xlu0 %v477, 64
    %v480 = vpop.permute.xlu0 %479
    %v482 = vmul.f32 %v465, %v480
    %484 = vrot.lane.b32.xlu0 %v482, 32
    %v485 = vpop.permute.xlu0 %484
    %s487 = scalar_lea.vmem [#allocation2], 6
    %488 = vst.msk [vmem:[%s487] sm:$0x3] %vm178, %v485
    %s489 = scalar_lea.vmem %s180, 8 [#allocation4]
    %v490 = vld [vmem:[%s489] sm:$0x3]
    %v491 = vpack.c.bf16 %v433, %v433
    %493 = vrot.lane.b32.xlu0 %v491, 32
    %v494 = vpop.permute.xlu0 %493
    %v496 = vsel %vm132, %v494, 0
    %498 = vmatpush.bf16.msra.mxu0 0
    %499 = vmatpush.bf16.msra.mxu0 0
    %500 = vmatpush.bf16.msra.mxu0 0
    %501 = vmatpush.bf16.msra.mxu0 0
    %502 = vmatpush.bf16.msra.mxu0 0
    %503 = vmatpush.bf16.msra.mxu0 0
    %504 = vmatpush.bf16.msra.mxu0 %v193
    %505 = vmatpush.bf16.msra.mxu0 %v192
    %506 = vmatmul.bf16.gmra.mxu0 %v496
    %v507 = vpop.f32.mrf.mxu0
    %v508 = vadd.f32 0.0, %v507
    %v509 = vpop.f32.mrf.mxu0
    %510 = vdwg.mxu0
    %v511 = vadd.f32 %v490, %v508
    %v512 = vtanh.pop %v511
    %v513 = vmul.f32 %v512, 0.5
    %v514 = vadd.f32 %v513, 0.5
    %v515 = vmul.f32 %v514, %v427
    %517 = vrot.lane.b32.xlu0 %v512, 64
    %v518 = vpop.permute.xlu0 %517
    %v520 = vmul.f32 %v514, %v518
    %522 = vrot.lane.b32.xlu0 %v520, 32
    %v523 = vpop.permute.xlu0 %522
    %v525 = vadd.f32 %v515, %v523
    %v526 = vtanh.pop %v525
    %528 = vrot.lane.b32.xlu0 %v526, 64
    %v529 = vpop.permute.xlu0 %528
    %v531 = vmul.f32 %v514, %v529
    %533 = vrot.lane.b32.xlu0 %v531, 64
    %v534 = vpop.permute.xlu0 %533
    %s536 = scalar_lea.vmem [#allocation2], 8
    %537 = vst.msk [vmem:[%s536] sm:$0x3] %vm242, %v534
    %s538 = scalar_lea.vmem [#allocation4], 8
    %v539 = vld [vmem:[%s538] sm:$0x3]
    %v540 = vpack.c.bf16 %v482, %v482
    %542 = vrot.lane.b32.xlu0 %v540, 32
    %v543 = vpop.permute.xlu0 %542
    %v545 = vsel %vm132, %v543, 0
    %547 = vmatpush.bf16.msra.mxu0 0
    %548 = vmatpush.bf16.msra.mxu0 0
    %549 = vmatpush.bf16.msra.mxu0 0
    %550 = vmatpush.bf16.msra.mxu0 0
    %551 = vmatpush.bf16.msra.mxu0 0
    %552 = vmatpush.bf16.msra.mxu0 0
    %553 = vmatpush.bf16.msra.mxu0 %v129
    %554 = vmatpush.bf16.msra.mxu0 %v128
    %555 = vmatmul.bf16.gmra.mxu0 %v545
    %v556 = vpop.f32.mrf.mxu0
    %v557 = vadd.f32 0.0, %v556
    %v558 = vpop.f32.mrf.mxu0
    %559 = vdwg.mxu0
    %v560 = vadd.f32 %v539, %v557
    %v561 = vtanh.pop %v560
    %v562 = vmul.f32 %v561, 0.5
    %v563 = vadd.f32 %v562, 0.5
    %v564 = vmul.f32 %v563, %v476
    %566 = vrot.lane.b32.xlu0 %v561, 64
    %v567 = vpop.permute.xlu0 %566
    %v569 = vmul.f32 %v563, %v567
    %571 = vrot.lane.b32.xlu0 %v569, 32
    %v572 = vpop.permute.xlu0 %571
    %v574 = vadd.f32 %v564, %v572
    %v575 = vtanh.pop %v574
    %577 = vrot.lane.b32.xlu0 %v575, 64
    %v578 = vpop.permute.xlu0 %577
    %v580 = vmul.f32 %v563, %v578
    %582 = vrot.lane.b32.xlu0 %v580, 32
    %v583 = vpop.permute.xlu0 %582
    %585 = vst.msk [vmem:[%s536] sm:$0x3] %vm178, %v583
    %s586 = scalar_lea.vmem %s180, 6 [#allocation4]
    %v587 = vld [vmem:[%s586] sm:$0x3]
    %v588 = vpack.c.bf16 %v531, %v531
    %590 = vrot.lane.b32.xlu0 %v588, 32
    %v591 = vpop.permute.xlu0 %590
    %v593 = vsel %vm132, %v591, 0
    %595 = vmatpush.bf16.msra.mxu0 0
    %596 = vmatpush.bf16.msra.mxu0 0
    %597 = vmatpush.bf16.msra.mxu0 0
    %598 = vmatpush.bf16.msra.mxu0 0
    %599 = vmatpush.bf16.msra.mxu0 0
    %600 = vmatpush.bf16.msra.mxu0 0
    %601 = vmatpush.bf16.msra.mxu0 %v193
    %602 = vmatpush.bf16.msra.mxu0 %v192
    %603 = vmatmul.bf16.gmra.mxu0 %v593
    %v604 = vpop.f32.mrf.mxu0
    %v605 = vadd.f32 0.0, %v604
    %v606 = vpop.f32.mrf.mxu0
    %607 = vdwg.mxu0
    %v608 = vadd.f32 %v587, %v605
    %v609 = vtanh.pop %v608
    %v610 = vmul.f32 %v609, 0.5
    %v611 = vadd.f32 %v610, 0.5
    %v612 = vmul.f32 %v611, %v525
    %614 = vrot.lane.b32.xlu0 %v609, 64
    %v615 = vpop.permute.xlu0 %614
    %v617 = vmul.f32 %v611, %v615
    %619 = vrot.lane.b32.xlu0 %v617, 32
    %v620 = vpop.permute.xlu0 %619
    %v622 = vadd.f32 %v612, %v620
    %v623 = vtanh.pop %v622
    %625 = vrot.lane.b32.xlu0 %v623, 64
    %v626 = vpop.permute.xlu0 %625
    %v628 = vmul.f32 %v611, %v626
    %630 = vrot.lane.b32.xlu0 %v628, 64
    %v631 = vpop.permute.xlu0 %630
    %633 = vst.msk [vmem:[%s487] sm:$0x3] %vm242, %v631
    %s634 = scalar_lea.vmem [#allocation4], 10
    %v635 = vld [vmem:[%s634] sm:$0x3]
    %v636 = vpack.c.bf16 %v580, %v580
    %638 = vrot.lane.b32.xlu0 %v636, 32
    %v639 = vpop.permute.xlu0 %638
    %v641 = vsel %vm132, %v639, 0
    %643 = vmatpush.bf16.msra.mxu0 0
    %644 = vmatpush.bf16.msra.mxu0 0
    %645 = vmatpush.bf16.msra.mxu0 0
    %646 = vmatpush.bf16.msra.mxu0 0
    %647 = vmatpush.bf16.msra.mxu0 0
    %648 = vmatpush.bf16.msra.mxu0 0
    %649 = vmatpush.bf16.msra.mxu0 %v129
    %650 = vmatpush.bf16.msra.mxu0 %v128
    %651 = vmatmul.bf16.gmra.mxu0 %v641
    %v652 = vpop.f32.mrf.mxu0
    %v653 = vadd.f32 0.0, %v652
    %v654 = vpop.f32.mrf.mxu0
    %655 = vdwg.mxu0
    %v656 = vadd.f32 %v635, %v653
    %v657 = vtanh.pop %v656
    %v658 = vmul.f32 %v657, 0.5
    %v659 = vadd.f32 %v658, 0.5
    %v660 = vmul.f32 %v659, %v574
    %662 = vrot.lane.b32.xlu0 %v657, 64
    %v663 = vpop.permute.xlu0 %662
    %v665 = vmul.f32 %v659, %v663
    %667 = vrot.lane.b32.xlu0 %v665, 32
    %v668 = vpop.permute.xlu0 %667
    %v670 = vadd.f32 %v660, %v668
    %v671 = vtanh.pop %v670
    %673 = vrot.lane.b32.xlu0 %v671, 64
    %v674 = vpop.permute.xlu0 %673
    %v676 = vmul.f32 %v659, %v674
    %678 = vrot.lane.b32.xlu0 %v676, 32
    %v679 = vpop.permute.xlu0 %678
    %681 = vst.msk [vmem:[%s438] sm:$0x3] %vm178, %v679
    %s682 = scalar_lea.vmem %s180, 4 [#allocation4]
    %v683 = vld [vmem:[%s682] sm:$0x3]
    %v684 = vpack.c.bf16 %v628, %v628
    %686 = vrot.lane.b32.xlu0 %v684, 32
    %v687 = vpop.permute.xlu0 %686
    %v689 = vsel %vm132, %v687, 0
    %691 = vmatpush.bf16.msra.mxu0 0
    %692 = vmatpush.bf16.msra.mxu0 0
    %693 = vmatpush.bf16.msra.mxu0 0
    %694 = vmatpush.bf16.msra.mxu0 0
    %695 = vmatpush.bf16.msra.mxu0 0
    %696 = vmatpush.bf16.msra.mxu0 0
    %697 = vmatpush.bf16.msra.mxu0 %v193
    %698 = vmatpush.bf16.msra.mxu0 %v192
    %699 = vmatmul.bf16.gmra.mxu0 %v689
    %v700 = vpop.f32.mrf.mxu0
    %v701 = vadd.f32 0.0, %v700
    %v702 = vpop.f32.mrf.mxu0
    %703 = vdwg.mxu0
    %v704 = vadd.f32 %v683, %v701
    %v705 = vtanh.pop %v704
    %v706 = vmul.f32 %v705, 0.5
    %v707 = vadd.f32 %v706, 0.5
    %v708 = vmul.f32 %v707, %v622
    %710 = vrot.lane.b32.xlu0 %v705, 64
    %v711 = vpop.permute.xlu0 %710
    %v713 = vmul.f32 %v707, %v711
    %715 = vrot.lane.b32.xlu0 %v713, 32
    %v716 = vpop.permute.xlu0 %715
    %v718 = vadd.f32 %v708, %v716
    %v719 = vtanh.pop %v718
    %721 = vrot.lane.b32.xlu0 %v719, 64
    %v722 = vpop.permute.xlu0 %721
    %v724 = vmul.f32 %v707, %v722
    %726 = vrot.lane.b32.xlu0 %v724, 64
    %v727 = vpop.permute.xlu0 %726
    %729 = vst.msk [vmem:[%s389] sm:$0x3] %vm242, %v727
    %s730 = scalar_lea.vmem [#allocation4], 12
    %v731 = vld [vmem:[%s730] sm:$0x3]
    %v732 = vpack.c.bf16 %v676, %v676
    %734 = vrot.lane.b32.xlu0 %v732, 32
    %v735 = vpop.permute.xlu0 %734
    %v737 = vsel %vm132, %v735, 0
    %739 = vmatpush.bf16.msra.mxu0 0
    %740 = vmatpush.bf16.msra.mxu0 0
    %741 = vmatpush.bf16.msra.mxu0 0
    %742 = vmatpush.bf16.msra.mxu0 0
    %743 = vmatpush.bf16.msra.mxu0 0
    %744 = vmatpush.bf16.msra.mxu0 0
    %745 = vmatpush.bf16.msra.mxu0 %v129
    %746 = vmatpush.bf16.msra.mxu0 %v128
    %747 = vmatmul.bf16.gmra.mxu0 %v737
    %v748 = vpop.f32.mrf.mxu0
    %v749 = vadd.f32 0.0, %v748
    %v750 = vpop.f32.mrf.mxu0
    %751 = vdwg.mxu0
    %v752 = vadd.f32 %v731, %v749
    %v753 = vtanh.pop %v752
    %v754 = vmul.f32 %v753, 0.5
    %v755 = vadd.f32 %v754, 0.5
    %v756 = vmul.f32 %v755, %v670
    %758 = vrot.lane.b32.xlu0 %v753, 64
    %v759 = vpop.permute.xlu0 %758
    %v761 = vmul.f32 %v755, %v759
    %763 = vrot.lane.b32.xlu0 %v761, 32
    %v764 = vpop.permute.xlu0 %763
    %v766 = vadd.f32 %v756, %v764
    %v767 = vtanh.pop %v766
    %769 = vrot.lane.b32.xlu0 %v767, 64
    %v770 = vpop.permute.xlu0 %769
    %v772 = vmul.f32 %v755, %v770
    %774 = vrot.lane.b32.xlu0 %v772, 32
    %v775 = vpop.permute.xlu0 %774
    %777 = vst.msk [vmem:[%s340] sm:$0x3] %vm178, %v775
    %s778 = scalar_lea.vmem %s180, 2 [#allocation4]
    %v779 = vld [vmem:[%s778] sm:$0x3]
    %v780 = vpack.c.bf16 %v724, %v724
    %782 = vrot.lane.b32.xlu0 %v780, 32
    %v783 = vpop.permute.xlu0 %782
    %v785 = vsel %vm132, %v783, 0
    %787 = vmatpush.bf16.msra.mxu0 0
    %788 = vmatpush.bf16.msra.mxu0 0
    %789 = vmatpush.bf16.msra.mxu0 0
    %790 = vmatpush.bf16.msra.mxu0 0
    %791 = vmatpush.bf16.msra.mxu0 0
    %792 = vmatpush.bf16.msra.mxu0 0
    %793 = vmatpush.bf16.msra.mxu0 %v193
    %794 = vmatpush.bf16.msra.mxu0 %v192
    %795 = vmatmul.bf16.gmra.mxu0 %v785
    %v796 = vpop.f32.mrf.mxu0
    %v797 = vadd.f32 0.0, %v796
    %v798 = vpop.f32.mrf.mxu0
    %799 = vdwg.mxu0
    %v800 = vadd.f32 %v779, %v797
    %v801 = vtanh.pop %v800
    %v802 = vmul.f32 %v801, 0.5
    %v803 = vadd.f32 %v802, 0.5
    %v804 = vmul.f32 %v803, %v718
    %806 = vrot.lane.b32.xlu0 %v801, 64
    %v807 = vpop.permute.xlu0 %806
    %v809 = vmul.f32 %v803, %v807
    %811 = vrot.lane.b32.xlu0 %v809, 32
    %v812 = vpop.permute.xlu0 %811
    %v814 = vadd.f32 %v804, %v812
    %v815 = vtanh.pop %v814
    %817 = vrot.lane.b32.xlu0 %v815, 64
    %v818 = vpop.permute.xlu0 %817
    %v820 = vmul.f32 %v803, %v818
    %822 = vrot.lane.b32.xlu0 %v820, 64
    %v823 = vpop.permute.xlu0 %822
    %825 = vst.msk [vmem:[%s291] sm:$0x3] %vm242, %v823
    %s826 = scalar_lea.vmem [#allocation4], 14
    %v827 = vld [vmem:[%s826] sm:$0x3]
    %v828 = vpack.c.bf16 %v772, %v772
    %830 = vrot.lane.b32.xlu0 %v828, 32
    %v831 = vpop.permute.xlu0 %830
    %v833 = vsel %vm132, %v831, 0
    %835 = vmatpush.bf16.msra.mxu0 0
    %836 = vmatpush.bf16.msra.mxu0 0
    %837 = vmatpush.bf16.msra.mxu0 0
    %838 = vmatpush.bf16.msra.mxu0 0
    %839 = vmatpush.bf16.msra.mxu0 0
    %840 = vmatpush.bf16.msra.mxu0 0
    %841 = vmatpush.bf16.msra.mxu0 %v129
    %842 = vmatpush.bf16.msra.mxu0 %v128
    %843 = vmatmul.bf16.gmra.mxu0 %v833
    %v844 = vpop.f32.mrf.mxu0
    %v845 = vadd.f32 0.0, %v844
    %v846 = vpop.f32.mrf.mxu0
    %847 = vdwg.mxu0
    %v848 = vadd.f32 %v827, %v845
    %v849 = vtanh.pop %v848
    %v850 = vmul.f32 %v849, 0.5
    %v851 = vadd.f32 %v850, 0.5
    %v852 = vmul.f32 %v851, %v766
    %854 = vrot.lane.b32.xlu0 %v849, 64
    %v855 = vpop.permute.xlu0 %854
    %v857 = vmul.f32 %v851, %v855
    %859 = vrot.lane.b32.xlu0 %v857, 32
    %v860 = vpop.permute.xlu0 %859
    %v862 = vadd.f32 %v852, %v860
    %v863 = vtanh.pop %v862
    %865 = vrot.lane.b32.xlu0 %v863, 64
    %v866 = vpop.permute.xlu0 %865
    %v868 = vmul.f32 %v851, %v866
    %870 = vrot.lane.b32.xlu0 %v868, 32
    %v871 = vpop.permute.xlu0 %870
    %873 = vst.msk [vmem:[%s241] sm:$0x3] %vm178, %v871
    %v874 = vld [vmem:[%s180] sm:$0x3]
    %v875 = vpack.c.bf16 %v820, %v820
    %877 = vrot.lane.b32.xlu0 %v875, 32
    %v878 = vpop.permute.xlu0 %877
    %v880 = vsel %vm132, %v878, 0
    %882 = vmatpush.bf16.msra.mxu0 0
    %883 = vmatpush.bf16.msra.mxu0 0
    %884 = vmatpush.bf16.msra.mxu0 0
    %885 = vmatpush.bf16.msra.mxu0 0
    %886 = vmatpush.bf16.msra.mxu0 0
    %887 = vmatpush.bf16.msra.mxu0 0
    %888 = vmatpush.bf16.msra.mxu0 %v193
    %889 = vmatpush.bf16.msra.mxu0 %v192
    %890 = vmatmul.bf16.gmra.mxu0 %v880
    %v891 = vpop.f32.mrf.mxu0
    %v892 = vadd.f32 0.0, %v891
    %v893 = vpop.f32.mrf.mxu0
    %894 = vdwg.mxu0
    %v895 = vadd.f32 %v874, %v892
    %v896 = vtanh.pop %v895
    %v897 = vmul.f32 %v896, 0.5
    %v898 = vadd.f32 %v897, 0.5
    %v899 = vmul.f32 %v898, %v814
    %901 = vrot.lane.b32.xlu0 %v896, 64
    %v902 = vpop.permute.xlu0 %901
    %v904 = vmul.f32 %v898, %v902
    %906 = vrot.lane.b32.xlu0 %v904, 32
    %v907 = vpop.permute.xlu0 %906
    %v909 = vadd.f32 %v899, %v907
    %v910 = vtanh.pop %v909
    %912 = vrot.lane.b32.xlu0 %v910, 64
    %v913 = vpop.permute.xlu0 %912
    %v915 = vmul.f32 %v898, %v913
    %917 = vrot.lane.b32.xlu0 %v915, 64
    %v918 = vpop.permute.xlu0 %917
    %920 = vst.msk [vmem:[#allocation2] sm:$0x3] %vm242, %v918
    %v921 = vld [vmem:[#allocation12] sm:$0xff]
    %v922 = vld [vmem:[#allocation12 + $0x8] sm:$0xff]
    %v923 = vld [vmem:[#allocation12 + $0x10] sm:$0xff]
    %v924 = vld [vmem:[#allocation12 + $0x18] sm:$0xff]
    %v925 = vld [vmem:[#allocation12 + $0x20] sm:$0xff]
    %v926 = vld [vmem:[#allocation12 + $0x28] sm:$0xff]
    %v927 = vld [vmem:[#allocation12 + $0x30] sm:$0xff]
    %v928 = vld [vmem:[#allocation12 + $0x38] sm:$0xff]
    %v929 = vld [vmem:[%s5] sm:$0x3]
    %v930 = vld [vmem:[#allocation2] sm:$0x3]
    %v931 = vpack.c.bf16 %v930, %v930
    %v933 = vperm.slane %v929, 0
    %v934 = vperm.slane %v929, 1
    %v945 = vunpack.c.l.b16 %v921
    %v946 = vunpack.c.h.b16 %v921
    %v947 = vunpack.c.l.b16 %v922
    %v948 = vunpack.c.h.b16 %v922
    %v949 = vunpack.c.l.b16 %v923
    %v950 = vunpack.c.h.b16 %v923
    %v951 = vunpack.c.l.b16 %v924
    %v952 = vunpack.c.h.b16 %v924
    %v953 = vunpack.c.l.b16 %v925
    %v954 = vunpack.c.h.b16 %v925
    %v955 = vunpack.c.l.b16 %v926
    %v956 = vunpack.c.h.b16 %v926
    %v957 = vunpack.c.l.b16 %v927
    %v958 = vunpack.c.h.b16 %v927
    %v959 = vunpack.c.l.b16 %v928
    %v960 = vunpack.c.h.b16 %v928
    %v961 = vpack.c.b16 %v947, %v945
    %v962 = vpack.c.b16 %v948, %v946
    %v963 = vpack.c.b16 %v951, %v949
    %v964 = vpack.c.b16 %v952, %v950
    %v965 = vpack.c.b16 %v955, %v953
    %v966 = vpack.c.b16 %v956, %v954
    %v967 = vpack.c.b16 %v959, %v957
    %v968 = vpack.c.b16 %v960, %v958
    %vm977 = vcmask 523264
    %v979 = vsel %vm977, %v931, 0
    %981 = vmatpush.bf16.msra.mxu0 0
    %982 = vmatpush.bf16.msra.mxu0 0
    %983 = vmatpush.bf16.msra.mxu0 0
    %984 = vmatpush.bf16.msra.mxu0 0
    %985 = vmatpush.bf16.msra.mxu0 %v967
    %986 = vmatpush.bf16.msra.mxu0 %v965
    %987 = vmatpush.bf16.msra.mxu0 %v963
    %988 = vmatpush.bf16.msra.mxu0 %v961
    %989 = vmatmul.bf16.gmra.mxu0 %v979
    %v990 = vpop.f32.mrf.mxu0
    %v991 = vadd.f32 %v933, %v990
    %v992 = vpop.f32.mrf.mxu0
    %993 = vdwg.mxu0
    %994 = vmatpush.bf16.msra.mxu0 0
    %995 = vmatpush.bf16.msra.mxu0 0
    %996 = vmatpush.bf16.msra.mxu0 0
    %997 = vmatpush.bf16.msra.mxu0 0
    %998 = vmatpush.bf16.msra.mxu0 %v968
    %999 = vmatpush.bf16.msra.mxu0 %v966
    %1000 = vmatpush.bf16.msra.mxu0 %v964
    %1001 = vmatpush.bf16.msra.mxu0 %v962
    %1002 = vmatmul.bf16.gmra.mxu0 %v979
    %v1003 = vpop.f32.mrf.mxu0
    %v1004 = vadd.f32 %v934, %v1003
    %v1005 = vpop.f32.mrf.mxu0
    %1006 = vdwg.mxu0
    %1007 = vst [vmem:[#allocation3] sm:$0x3] %v991
    %s1008 = scalar_lea.vmem [#allocation3], 16
    %1009 = vst [vmem:[%s1008] sm:$0x3] %v1004
    %v1010 = vld [vmem:[%s291] sm:$0x3]
    %v1011 = vpack.c.bf16 %v1010, %v1010
    %v1013 = vsel %vm977, %v1011, 0
    %1015 = vmatpush.bf16.msra.mxu0 0
    %1016 = vmatpush.bf16.msra.mxu0 0
    %1017 = vmatpush.bf16.msra.mxu0 0
    %1018 = vmatpush.bf16.msra.mxu0 0
    %1019 = vmatpush.bf16.msra.mxu0 %v967
    %1020 = vmatpush.bf16.msra.mxu0 %v965
    %1021 = vmatpush.bf16.msra.mxu0 %v963
    %1022 = vmatpush.bf16.msra.mxu0 %v961
    %1023 = vmatmul.bf16.gmra.mxu0 %v1013
    %v1024 = vpop.f32.mrf.mxu0
    %v1025 = vadd.f32 %v933, %v1024
    %v1026 = vpop.f32.mrf.mxu0
    %1027 = vdwg.mxu0
    %1028 = vmatpush.bf16.msra.mxu0 0
    %1029 = vmatpush.bf16.msra.mxu0 0
    %1030 = vmatpush.bf16.msra.mxu0 0
    %1031 = vmatpush.bf16.msra.mxu0 0
    %1032 = vmatpush.bf16.msra.mxu0 %v968
    %1033 = vmatpush.bf16.msra.mxu0 %v966
    %1034 = vmatpush.bf16.msra.mxu0 %v964
    %1035 = vmatpush.bf16.msra.mxu0 %v962
    %1036 = vmatmul.bf16.gmra.mxu0 %v1013
    %v1037 = vpop.f32.mrf.mxu0
    %v1038 = vadd.f32 %v934, %v1037
    %v1039 = vpop.f32.mrf.mxu0
    %1040 = vdwg.mxu0
    %s1041 = scalar_lea.vmem [#allocation3], 2
    %1042 = vst [vmem:[%s1041] sm:$0x3] %v1025
    %s1043 = scalar_lea.vmem %s1008, 2 [#allocation3]
    %1044 = vst [vmem:[%s1043] sm:$0x3] %v1038
    %v1045 = vld [vmem:[%s389] sm:$0x3]
    %v1046 = vpack.c.bf16 %v1045, %v1045
    %v1048 = vsel %vm977, %v1046, 0
    %1050 = vmatpush.bf16.msra.mxu0 0
    %1051 = vmatpush.bf16.msra.mxu0 0
    %1052 = vmatpush.bf16.msra.mxu0 0
    %1053 = vmatpush.bf16.msra.mxu0 0
    %1054 = vmatpush.bf16.msra.mxu0 %v967
    %1055 = vmatpush.bf16.msra.mxu0 %v965
    %1056 = vmatpush.bf16.msra.mxu0 %v963
    %1057 = vmatpush.bf16.msra.mxu0 %v961
    %1058 = vmatmul.bf16.gmra.mxu0 %v1048
    %v1059 = vpop.f32.mrf.mxu0
    %v1060 = vadd.f32 %v933, %v1059
    %v1061 = vpop.f32.mrf.mxu0
    %1062 = vdwg.mxu0
    %1063 = vmatpush.bf16.msra.mxu0 0
    %1064 = vmatpush.bf16.msra.mxu0 0
    %1065 = vmatpush.bf16.msra.mxu0 0
    %1066 = vmatpush.bf16.msra.mxu0 0
    %1067 = vmatpush.bf16.msra.mxu0 %v968
    %1068 = vmatpush.bf16.msra.mxu0 %v966
    %1069 = vmatpush.bf16.msra.mxu0 %v964
    %1070 = vmatpush.bf16.msra.mxu0 %v962
    %1071 = vmatmul.bf16.gmra.mxu0 %v1048
    %v1072 = vpop.f32.mrf.mxu0
    %v1073 = vadd.f32 %v934, %v1072
    %v1074 = vpop.f32.mrf.mxu0
    %1075 = vdwg.mxu0
    %s1076 = scalar_lea.vmem [#allocation3], 4
    %1077 = vst [vmem:[%s1076] sm:$0x3] %v1060
    %s1078 = scalar_lea.vmem %s1008, 4 [#allocation3]
    %1079 = vst [vmem:[%s1078] sm:$0x3] %v1073
    %v1080 = vld [vmem:[%s487] sm:$0x3]
    %v1081 = vpack.c.bf16 %v1080, %v1080
    %v1083 = vsel %vm977, %v1081, 0
    %1085 = vmatpush.bf16.msra.mxu0 0
    %1086 = vmatpush.bf16.msra.mxu0 0
    %1087 = vmatpush.bf16.msra.mxu0 0
    %1088 = vmatpush.bf16.msra.mxu0 0
    %1089 = vmatpush.bf16.msra.mxu0 %v967
    %1090 = vmatpush.bf16.msra.mxu0 %v965
    %1091 = vmatpush.bf16.msra.mxu0 %v963
    %1092 = vmatpush.bf16.msra.mxu0 %v961
    %1093 = vmatmul.bf16.gmra.mxu0 %v1083
    %v1094 = vpop.f32.mrf.mxu0
    %v1095 = vadd.f32 %v933, %v1094
    %v1096 = vpop.f32.mrf.mxu0
    %1097 = vdwg.mxu0
    %1098 = vmatpush.bf16.msra.mxu0 0
    %1099 = vmatpush.bf16.msra.mxu0 0
    %1100 = vmatpush.bf16.msra.mxu0 0
    %1101 = vmatpush.bf16.msra.mxu0 0
    %1102 = vmatpush.bf16.msra.mxu0 %v968
    %1103 = vmatpush.bf16.msra.mxu0 %v966
    %1104 = vmatpush.bf16.msra.mxu0 %v964
    %1105 = vmatpush.bf16.msra.mxu0 %v962
    %1106 = vmatmul.bf16.gmra.mxu0 %v1083
    %v1107 = vpop.f32.mrf.mxu0
    %v1108 = vadd.f32 %v934, %v1107
    %v1109 = vpop.f32.mrf.mxu0
    %1110 = vdwg.mxu0
    %s1111 = scalar_lea.vmem [#allocation3], 6
    %1112 = vst [vmem:[%s1111] sm:$0x3] %v1095
    %s1113 = scalar_lea.vmem %s1008, 6 [#allocation3]
    %1114 = vst [vmem:[%s1113] sm:$0x3] %v1108
    %v1115 = vld [vmem:[%s536] sm:$0x3]
    %v1116 = vpack.c.bf16 %v1115, %v1115
    %v1118 = vsel %vm977, %v1116, 0
    %1120 = vmatpush.bf16.msra.mxu0 0
    %1121 = vmatpush.bf16.msra.mxu0 0
    %1122 = vmatpush.bf16.msra.mxu0 0
    %1123 = vmatpush.bf16.msra.mxu0 0
    %1124 = vmatpush.bf16.msra.mxu0 %v967
    %1125 = vmatpush.bf16.msra.mxu0 %v965
    %1126 = vmatpush.bf16.msra.mxu0 %v963
    %1127 = vmatpush.bf16.msra.mxu0 %v961
    %1128 = vmatmul.bf16.gmra.mxu0 %v1118
    %v1129 = vpop.f32.mrf.mxu0
    %v1130 = vadd.f32 %v933, %v1129
    %v1131 = vpop.f32.mrf.mxu0
    %1132 = vdwg.mxu0
    %1133 = vmatpush.bf16.msra.mxu0 0
    %1134 = vmatpush.bf16.msra.mxu0 0
    %1135 = vmatpush.bf16.msra.mxu0 0
    %1136 = vmatpush.bf16.msra.mxu0 0
    %1137 = vmatpush.bf16.msra.mxu0 %v968
    %1138 = vmatpush.bf16.msra.mxu0 %v966
    %1139 = vmatpush.bf16.msra.mxu0 %v964
    %1140 = vmatpush.bf16.msra.mxu0 %v962
    %1141 = vmatmul.bf16.gmra.mxu0 %v1118
    %v1142 = vpop.f32.mrf.mxu0
    %v1143 = vadd.f32 %v934, %v1142
    %v1144 = vpop.f32.mrf.mxu0
    %1145 = vdwg.mxu0
    %s1146 = scalar_lea.vmem [#allocation3], 8
    %1147 = vst [vmem:[%s1146] sm:$0x3] %v1130
    %s1148 = scalar_lea.vmem %s1008, 8 [#allocation3]
    %1149 = vst [vmem:[%s1148] sm:$0x3] %v1143
    %v1150 = vld [vmem:[%s438] sm:$0x3]
    %v1151 = vpack.c.bf16 %v1150, %v1150
    %v1153 = vsel %vm977, %v1151, 0
    %1155 = vmatpush.bf16.msra.mxu0 0
    %1156 = vmatpush.bf16.msra.mxu0 0
    %1157 = vmatpush.bf16.msra.mxu0 0
    %1158 = vmatpush.bf16.msra.mxu0 0
    %1159 = vmatpush.bf16.msra.mxu0 %v967
    %1160 = vmatpush.bf16.msra.mxu0 %v965
    %1161 = vmatpush.bf16.msra.mxu0 %v963
    %1162 = vmatpush.bf16.msra.mxu0 %v961
    %1163 = vmatmul.bf16.gmra.mxu0 %v1153
    %v1164 = vpop.f32.mrf.mxu0
    %v1165 = vadd.f32 %v933, %v1164
    %v1166 = vpop.f32.mrf.mxu0
    %1167 = vdwg.mxu0
    %1168 = vmatpush.bf16.msra.mxu0 0
    %1169 = vmatpush.bf16.msra.mxu0 0
    %1170 = vmatpush.bf16.msra.mxu0 0
    %1171 = vmatpush.bf16.msra.mxu0 0
    %1172 = vmatpush.bf16.msra.mxu0 %v968
    %1173 = vmatpush.bf16.msra.mxu0 %v966
    %1174 = vmatpush.bf16.msra.mxu0 %v964
    %1175 = vmatpush.bf16.msra.mxu0 %v962
    %1176 = vmatmul.bf16.gmra.mxu0 %v1153
    %v1177 = vpop.f32.mrf.mxu0
    %v1178 = vadd.f32 %v934, %v1177
    %v1179 = vpop.f32.mrf.mxu0
    %1180 = vdwg.mxu0
    %s1181 = scalar_lea.vmem [#allocation3], 10
    %1182 = vst [vmem:[%s1181] sm:$0x3] %v1165
    %s1183 = scalar_lea.vmem %s1008, 10 [#allocation3]
    %1184 = vst [vmem:[%s1183] sm:$0x3] %v1178
    %v1185 = vld [vmem:[%s340] sm:$0x3]
    %v1186 = vpack.c.bf16 %v1185, %v1185
    %v1188 = vsel %vm977, %v1186, 0
    %1190 = vmatpush.bf16.msra.mxu0 0
    %1191 = vmatpush.bf16.msra.mxu0 0
    %1192 = vmatpush.bf16.msra.mxu0 0
    %1193 = vmatpush.bf16.msra.mxu0 0
    %1194 = vmatpush.bf16.msra.mxu0 %v967
    %1195 = vmatpush.bf16.msra.mxu0 %v965
    %1196 = vmatpush.bf16.msra.mxu0 %v963
    %1197 = vmatpush.bf16.msra.mxu0 %v961
    %1198 = vmatmul.bf16.gmra.mxu0 %v1188
    %v1199 = vpop.f32.mrf.mxu0
    %v1200 = vadd.f32 %v933, %v1199
    %v1201 = vpop.f32.mrf.mxu0
    %1202 = vdwg.mxu0
    %1203 = vmatpush.bf16.msra.mxu0 0
    %1204 = vmatpush.bf16.msra.mxu0 0
    %1205 = vmatpush.bf16.msra.mxu0 0
    %1206 = vmatpush.bf16.msra.mxu0 0
    %1207 = vmatpush.bf16.msra.mxu0 %v968
    %1208 = vmatpush.bf16.msra.mxu0 %v966
    %1209 = vmatpush.bf16.msra.mxu0 %v964
    %1210 = vmatpush.bf16.msra.mxu0 %v962
    %1211 = vmatmul.bf16.gmra.mxu0 %v1188
    %v1212 = vpop.f32.mrf.mxu0
    %v1213 = vadd.f32 %v934, %v1212
    %v1214 = vpop.f32.mrf.mxu0
    %1215 = vdwg.mxu0
    %s1216 = scalar_lea.vmem [#allocation3], 12
    %1217 = vst [vmem:[%s1216] sm:$0x3] %v1200
    %s1218 = scalar_lea.vmem %s1008, 12 [#allocation3]
    %1219 = vst [vmem:[%s1218] sm:$0x3] %v1213
    %v1220 = vld [vmem:[%s241] sm:$0x3]
    %v1221 = vpack.c.bf16 %v1220, %v1220
    %v1223 = vsel %vm977, %v1221, 0
    %1225 = vmatpush.bf16.msra.mxu0 0
    %1226 = vmatpush.bf16.msra.mxu0 0
    %1227 = vmatpush.bf16.msra.mxu0 0
    %1228 = vmatpush.bf16.msra.mxu0 0
    %1229 = vmatpush.bf16.msra.mxu0 %v967
    %1230 = vmatpush.bf16.msra.mxu0 %v965
    %1231 = vmatpush.bf16.msra.mxu0 %v963
    %1232 = vmatpush.bf16.msra.mxu0 %v961
    %1233 = vmatmul.bf16.gmra.mxu0 %v1223
    %v1234 = vpop.f32.mrf.mxu0
    %v1235 = vadd.f32 %v933, %v1234
    %v1236 = vpop.f32.mrf.mxu0
    %1237 = vdwg.mxu0
    %1238 = vmatpush.bf16.msra.mxu0 0
    %1239 = vmatpush.bf16.msra.mxu0 0
    %1240 = vmatpush.bf16.msra.mxu0 0
    %1241 = vmatpush.bf16.msra.mxu0 0
    %1242 = vmatpush.bf16.msra.mxu0 %v968
    %1243 = vmatpush.bf16.msra.mxu0 %v966
    %1244 = vmatpush.bf16.msra.mxu0 %v964
    %1245 = vmatpush.bf16.msra.mxu0 %v962
    %1246 = vmatmul.bf16.gmra.mxu0 %v1223
    %v1247 = vpop.f32.mrf.mxu0
    %v1248 = vadd.f32 %v934, %v1247
    %v1249 = vpop.f32.mrf.mxu0
    %1250 = vdwg.mxu0
    %s1251 = scalar_lea.vmem [#allocation3], 14
    %1252 = vst [vmem:[%s1251] sm:$0x3] %v1235
    %s1253 = scalar_lea.vmem %s1008, 14 [#allocation3]
    %1254 = vst [vmem:[%s1253] sm:$0x3] %v1248
    %s1255 = scalar_lea.vmem [#allocation7], 32
    %v1256 = vld [vmem:[%s1255] sm:$0xf]
    %v1257 = vld [vmem:[%s1255 + $0x4] sm:$0xf]
    %v1258 = vld [vmem:[%s1255 + $0x8] sm:$0xf]
    %v1259 = vld [vmem:[%s1255 + $0xc] sm:$0xf]
    %s1260 = scalar_lea.vmem [#allocation7], 48
    %v1261 = vld [vmem:[%s1260] sm:$0xf]
    %v1262 = vld [vmem:[%s1260 + $0x4] sm:$0xf]
    %v1263 = vld [vmem:[%s1260 + $0x8] sm:$0xf]
    %v1264 = vld [vmem:[%s1260 + $0xc] sm:$0xf]
    %s1265 = scalar_lea.vmem [#allocation9], 4
    %v1266 = vld [vmem:[%s1265] sm:$0x3]
    %s1267 = scalar_lea.vmem [#allocation10], 4
    %v1268 = vld [vmem:[%s1267] sm:$0x3]
    %s1269 = scalar_lea.vmem [#allocation9], 6
    %v1270 = vld [vmem:[%s1269] sm:$0x3]
    %s1271 = scalar_lea.vmem [#allocation10], 6
    %v1272 = vld [vmem:[%s1271] sm:$0x3]
    %v1273 = vld [vmem:[#allocation3] sm:$0x3]
    %v1274 = vpack.c.bf16 %v1266, %v1266
    %v1279 = vunpack.c.l.b16 %v1256
    %v1280 = vunpack.c.l.b16 %v1257
    %v1281 = vunpack.c.l.b16 %v1258
    %v1282 = vunpack.c.l.b16 %v1259
    %v1283 = vpack.c.b16 %v1280, %v1279
    %v1284 = vpack.c.b16 %v1282, %v1281
    %v1288 = vsel %vm132, %v1274, 0
    %1290 = vmatpush.bf16.msra.mxu0 0
    %1291 = vmatpush.bf16.msra.mxu0 0
    %1292 = vmatpush.bf16.msra.mxu0 0
    %1293 = vmatpush.bf16.msra.mxu0 0
    %1294 = vmatpush.bf16.msra.mxu0 0
    %1295 = vmatpush.bf16.msra.mxu0 0
    %1296 = vmatpush.bf16.msra.mxu0 %v1284
    %1297 = vmatpush.bf16.msra.mxu0 %v1283
    %1298 = vmatmul.bf16.gmra.mxu0 %v1288
    %v1299 = vpop.f32.mrf.mxu0
    %v1300 = vadd.f32 0.0, %v1299
    %v1301 = vpop.f32.mrf.mxu0
    %1302 = vdwg.mxu0
    %v1303 = vadd.f32 %v1273, %v1300
    %v1304 = vtanh.pop %v1303
    %v1305 = vmul.f32 %v1304, 0.5
    %v1306 = vadd.f32 %v1305, 0.5
    %1308 = vrot.lane.b32.xlu0 %v1268, 32
    %v1309 = vpop.permute.xlu0 %1308
    %v1311 = vmul.f32 %v1306, %v1309
    %1313 = vrot.lane.b32.xlu0 %v1304, 64
    %v1314 = vpop.permute.xlu0 %1313
    %v1316 = vmul.f32 %v1306, %v1314
    %1318 = vrot.lane.b32.xlu0 %v1316, 32
    %v1319 = vpop.permute.xlu0 %1318
    %v1321 = vadd.f32 %v1311, %v1319
    %v1322 = vtanh.pop %v1321
    %1324 = vrot.lane.b32.xlu0 %v1322, 64
    %v1325 = vpop.permute.xlu0 %1324
    %v1327 = vmul.f32 %v1306, %v1325
    %1329 = vrot.lane.b32.xlu0 %v1327, 32
    %v1330 = vpop.permute.xlu0 %1329
    %1332 = vst.msk [vmem:[#allocation13] sm:$0x3] %vm178, %v1330
    %v1333 = vld [vmem:[%s1253] sm:$0x3]
    %v1334 = vpack.c.bf16 %v1270, %v1270
    %v1339 = vunpack.c.l.b16 %v1261
    %v1340 = vunpack.c.l.b16 %v1262
    %v1341 = vunpack.c.l.b16 %v1263
    %v1342 = vunpack.c.l.b16 %v1264
    %v1343 = vpack.c.b16 %v1340, %v1339
    %v1344 = vpack.c.b16 %v1342, %v1341
    %v1348 = vsel %vm132, %v1334, 0
    %1350 = vmatpush.bf16.msra.mxu0 0
    %1351 = vmatpush.bf16.msra.mxu0 0
    %1352 = vmatpush.bf16.msra.mxu0 0
    %1353 = vmatpush.bf16.msra.mxu0 0
    %1354 = vmatpush.bf16.msra.mxu0 0
    %1355 = vmatpush.bf16.msra.mxu0 0
    %1356 = vmatpush.bf16.msra.mxu0 %v1344
    %1357 = vmatpush.bf16.msra.mxu0 %v1343
    %1358 = vmatmul.bf16.gmra.mxu0 %v1348
    %v1359 = vpop.f32.mrf.mxu0
    %v1360 = vadd.f32 0.0, %v1359
    %v1361 = vpop.f32.mrf.mxu0
    %1362 = vdwg.mxu0
    %v1363 = vadd.f32 %v1333, %v1360
    %v1364 = vtanh.pop %v1363
    %v1365 = vmul.f32 %v1364, 0.5
    %v1366 = vadd.f32 %v1365, 0.5
    %1368 = vrot.lane.b32.xlu0 %v1272, 32
    %v1369 = vpop.permute.xlu0 %1368
    %v1371 = vmul.f32 %v1366, %v1369
    %1373 = vrot.lane.b32.xlu0 %v1364, 64
    %v1374 = vpop.permute.xlu0 %1373
    %v1376 = vmul.f32 %v1366, %v1374
    %1378 = vrot.lane.b32.xlu0 %v1376, 32
    %v1379 = vpop.permute.xlu0 %1378
    %v1381 = vadd.f32 %v1371, %v1379
    %v1382 = vtanh.pop %v1381
    %1384 = vrot.lane.b32.xlu0 %v1382, 64
    %v1385 = vpop.permute.xlu0 %1384
    %v1387 = vmul.f32 %v1366, %v1385
    %1389 = vrot.lane.b32.xlu0 %v1387, 64
    %v1390 = vpop.permute.xlu0 %1389
    %s1392 = scalar_lea.vmem [#allocation13], 14
    %1393 = vst.msk [vmem:[%s1392] sm:$0x3] %vm242, %v1390
    %v1394 = vld [vmem:[%s1041] sm:$0x3]
    %v1395 = vpack.c.bf16 %v1327, %v1327
    %1397 = vrot.lane.b32.xlu0 %v1395, 32
    %v1398 = vpop.permute.xlu0 %1397
    %v1400 = vsel %vm132, %v1398, 0
    %1402 = vmatpush.bf16.msra.mxu0 0
    %1403 = vmatpush.bf16.msra.mxu0 0
    %1404 = vmatpush.bf16.msra.mxu0 0
    %1405 = vmatpush.bf16.msra.mxu0 0
    %1406 = vmatpush.bf16.msra.mxu0 0
    %1407 = vmatpush.bf16.msra.mxu0 0
    %1408 = vmatpush.bf16.msra.mxu0 %v1284
    %1409 = vmatpush.bf16.msra.mxu0 %v1283
    %1410 = vmatmul.bf16.gmra.mxu0 %v1400
    %v1411 = vpop.f32.mrf.mxu0
    %v1412 = vadd.f32 0.0, %v1411
    %v1413 = vpop.f32.mrf.mxu0
    %1414 = vdwg.mxu0
    %v1415 = vadd.f32 %v1394, %v1412
    %v1416 = vtanh.pop %v1415
    %v1417 = vmul.f32 %v1416, 0.5
    %v1418 = vadd.f32 %v1417, 0.5
    %v1419 = vmul.f32 %v1418, %v1321
    %1421 = vrot.lane.b32.xlu0 %v1416, 64
    %v1422 = vpop.permute.xlu0 %1421
    %v1424 = vmul.f32 %v1418, %v1422
    %1426 = vrot.lane.b32.xlu0 %v1424, 32
    %v1427 = vpop.permute.xlu0 %1426
    %v1429 = vadd.f32 %v1419, %v1427
    %v1430 = vtanh.pop %v1429
    %1432 = vrot.lane.b32.xlu0 %v1430, 64
    %v1433 = vpop.permute.xlu0 %1432
    %v1435 = vmul.f32 %v1418, %v1433
    %1437 = vrot.lane.b32.xlu0 %v1435, 32
    %v1438 = vpop.permute.xlu0 %1437
    %s1440 = scalar_lea.vmem [#allocation13], 2
    %1441 = vst.msk [vmem:[%s1440] sm:$0x3] %vm178, %v1438
    %v1442 = vld [vmem:[%s1218] sm:$0x3]
    %v1443 = vpack.c.bf16 %v1387, %v1387
    %1445 = vrot.lane.b32.xlu0 %v1443, 32
    %v1446 = vpop.permute.xlu0 %1445
    %v1448 = vsel %vm132, %v1446, 0
    %1450 = vmatpush.bf16.msra.mxu0 0
    %1451 = vmatpush.bf16.msra.mxu0 0
    %1452 = vmatpush.bf16.msra.mxu0 0
    %1453 = vmatpush.bf16.msra.mxu0 0
    %1454 = vmatpush.bf16.msra.mxu0 0
    %1455 = vmatpush.bf16.msra.mxu0 0
    %1456 = vmatpush.bf16.msra.mxu0 %v1344
    %1457 = vmatpush.bf16.msra.mxu0 %v1343
    %1458 = vmatmul.bf16.gmra.mxu0 %v1448
    %v1459 = vpop.f32.mrf.mxu0
    %v1460 = vadd.f32 0.0, %v1459
    %v1461 = vpop.f32.mrf.mxu0
    %1462 = vdwg.mxu0
    %v1463 = vadd.f32 %v1442, %v1460
    %v1464 = vtanh.pop %v1463
    %v1465 = vmul.f32 %v1464, 0.5
    %v1466 = vadd.f32 %v1465, 0.5
    %v1467 = vmul.f32 %v1466, %v1381
    %1469 = vrot.lane.b32.xlu0 %v1464, 64
    %v1470 = vpop.permute.xlu0 %1469
    %v1472 = vmul.f32 %v1466, %v1470
    %1474 = vrot.lane.b32.xlu0 %v1472, 32
    %v1475 = vpop.permute.xlu0 %1474
    %v1477 = vadd.f32 %v1467, %v1475
    %v1478 = vtanh.pop %v1477
    %1480 = vrot.lane.b32.xlu0 %v1478, 64
    %v1481 = vpop.permute.xlu0 %1480
    %v1483 = vmul.f32 %v1466, %v1481
    %1485 = vrot.lane.b32.xlu0 %v1483, 64
    %v1486 = vpop.permute.xlu0 %1485
    %s1488 = scalar_lea.vmem [#allocation13], 12
    %1489 = vst.msk [vmem:[%s1488] sm:$0x3] %vm242, %v1486
    %v1490 = vld [vmem:[%s1076] sm:$0x3]
    %v1491 = vpack.c.bf16 %v1435, %v1435
    %1493 = vrot.lane.b32.xlu0 %v1491, 32
    %v1494 = vpop.permute.xlu0 %1493
    %v1496 = vsel %vm132, %v1494, 0
    %1498 = vmatpush.bf16.msra.mxu0 0
    %1499 = vmatpush.bf16.msra.mxu0 0
    %1500 = vmatpush.bf16.msra.mxu0 0
    %1501 = vmatpush.bf16.msra.mxu0 0
    %1502 = vmatpush.bf16.msra.mxu0 0
    %1503 = vmatpush.bf16.msra.mxu0 0
    %1504 = vmatpush.bf16.msra.mxu0 %v1284
    %1505 = vmatpush.bf16.msra.mxu0 %v1283
    %1506 = vmatmul.bf16.gmra.mxu0 %v1496
    %v1507 = vpop.f32.mrf.mxu0
    %v1508 = vadd.f32 0.0, %v1507
    %v1509 = vpop.f32.mrf.mxu0
    %1510 = vdwg.mxu0
    %v1511 = vadd.f32 %v1490, %v1508
    %v1512 = vtanh.pop %v1511
    %v1513 = vmul.f32 %v1512, 0.5
    %v1514 = vadd.f32 %v1513, 0.5
    %v1515 = vmul.f32 %v1514, %v1429
    %1517 = vrot.lane.b32.xlu0 %v1512, 64
    %v1518 = vpop.permute.xlu0 %1517
    %v1520 = vmul.f32 %v1514, %v1518
    %1522 = vrot.lane.b32.xlu0 %v1520, 32
    %v1523 = vpop.permute.xlu0 %1522
    %v1525 = vadd.f32 %v1515, %v1523
    %v1526 = vtanh.pop %v1525
    %1528 = vrot.lane.b32.xlu0 %v1526, 64
    %v1529 = vpop.permute.xlu0 %1528
    %v1531 = vmul.f32 %v1514, %v1529
    %1533 = vrot.lane.b32.xlu0 %v1531, 32
    %v1534 = vpop.permute.xlu0 %1533
    %s1536 = scalar_lea.vmem [#allocation13], 4
    %1537 = vst.msk [vmem:[%s1536] sm:$0x3] %vm178, %v1534
    %v1538 = vld [vmem:[%s1183] sm:$0x3]
    %v1539 = vpack.c.bf16 %v1483, %v1483
    %1541 = vrot.lane.b32.xlu0 %v1539, 32
    %v1542 = vpop.permute.xlu0 %1541
    %v1544 = vsel %vm132, %v1542, 0
    %1546 = vmatpush.bf16.msra.mxu0 0
    %1547 = vmatpush.bf16.msra.mxu0 0
    %1548 = vmatpush.bf16.msra.mxu0 0
    %1549 = vmatpush.bf16.msra.mxu0 0
    %1550 = vmatpush.bf16.msra.mxu0 0
    %1551 = vmatpush.bf16.msra.mxu0 0
    %1552 = vmatpush.bf16.msra.mxu0 %v1344
    %1553 = vmatpush.bf16.msra.mxu0 %v1343
    %1554 = vmatmul.bf16.gmra.mxu0 %v1544
    %v1555 = vpop.f32.mrf.mxu0
    %v1556 = vadd.f32 0.0, %v1555
    %v1557 = vpop.f32.mrf.mxu0
    %1558 = vdwg.mxu0
    %v1559 = vadd.f32 %v1538, %v1556
    %v1560 = vtanh.pop %v1559
    %v1561 = vmul.f32 %v1560, 0.5
    %v1562 = vadd.f32 %v1561, 0.5
    %v1563 = vmul.f32 %v1562, %v1477
    %1565 = vrot.lane.b32.xlu0 %v1560, 64
    %v1566 = vpop.permute.xlu0 %1565
    %v1568 = vmul.f32 %v1562, %v1566
    %1570 = vrot.lane.b32.xlu0 %v1568, 32
    %v1571 = vpop.permute.xlu0 %1570
    %v1573 = vadd.f32 %v1563, %v1571
    %v1574 = vtanh.pop %v1573
    %1576 = vrot.lane.b32.xlu0 %v1574, 64
    %v1577 = vpop.permute.xlu0 %1576
    %v1579 = vmul.f32 %v1562, %v1577
    %1581 = vrot.lane.b32.xlu0 %v1579, 64
    %v1582 = vpop.permute.xlu0 %1581
    %s1584 = scalar_lea.vmem [#allocation13], 10
    %1585 = vst.msk [vmem:[%s1584] sm:$0x3] %vm242, %v1582
    %v1586 = vld [vmem:[%s1111] sm:$0x3]
    %v1587 = vpack.c.bf16 %v1531, %v1531
    %1589 = vrot.lane.b32.xlu0 %v1587, 32
    %v1590 = vpop.permute.xlu0 %1589
    %v1592 = vsel %vm132, %v1590, 0
    %1594 = vmatpush.bf16.msra.mxu0 0
    %1595 = vmatpush.bf16.msra.mxu0 0
    %1596 = vmatpush.bf16.msra.mxu0 0
    %1597 = vmatpush.bf16.msra.mxu0 0
    %1598 = vmatpush.bf16.msra.mxu0 0
    %1599 = vmatpush.bf16.msra.mxu0 0
    %1600 = vmatpush.bf16.msra.mxu0 %v1284
    %1601 = vmatpush.bf16.msra.mxu0 %v1283
    %1602 = vmatmul.bf16.gmra.mxu0 %v1592
    %v1603 = vpop.f32.mrf.mxu0
    %v1604 = vadd.f32 0.0, %v1603
    %v1605 = vpop.f32.mrf.mxu0
    %1606 = vdwg.mxu0
    %v1607 = vadd.f32 %v1586, %v1604
    %v1608 = vtanh.pop %v1607
    %v1609 = vmul.f32 %v1608, 0.5
    %v1610 = vadd.f32 %v1609, 0.5
    %v1611 = vmul.f32 %v1610, %v1525
    %1613 = vrot.lane.b32.xlu0 %v1608, 64
    %v1614 = vpop.permute.xlu0 %1613
    %v1616 = vmul.f32 %v1610, %v1614
    %1618 = vrot.lane.b32.xlu0 %v1616, 32
    %v1619 = vpop.permute.xlu0 %1618
    %v1621 = vadd.f32 %v1611, %v1619
    %v1622 = vtanh.pop %v1621
    %1624 = vrot.lane.b32.xlu0 %v1622, 64
    %v1625 = vpop.permute.xlu0 %1624
    %v1627 = vmul.f32 %v1610, %v1625
    %1629 = vrot.lane.b32.xlu0 %v1627, 32
    %v1630 = vpop.permute.xlu0 %1629
    %s1632 = scalar_lea.vmem [#allocation13], 6
    %1633 = vst.msk [vmem:[%s1632] sm:$0x3] %vm178, %v1630
    %v1634 = vld [vmem:[%s1148] sm:$0x3]
    %v1635 = vpack.c.bf16 %v1579, %v1579
    %1637 = vrot.lane.b32.xlu0 %v1635, 32
    %v1638 = vpop.permute.xlu0 %1637
    %v1640 = vsel %vm132, %v1638, 0
    %1642 = vmatpush.bf16.msra.mxu0 0
    %1643 = vmatpush.bf16.msra.mxu0 0
    %1644 = vmatpush.bf16.msra.mxu0 0
    %1645 = vmatpush.bf16.msra.mxu0 0
    %1646 = vmatpush.bf16.msra.mxu0 0
    %1647 = vmatpush.bf16.msra.mxu0 0
    %1648 = vmatpush.bf16.msra.mxu0 %v1344
    %1649 = vmatpush.bf16.msra.mxu0 %v1343
    %1650 = vmatmul.bf16.gmra.mxu0 %v1640
    %v1651 = vpop.f32.mrf.mxu0
    %v1652 = vadd.f32 0.0, %v1651
    %v1653 = vpop.f32.mrf.mxu0
    %1654 = vdwg.mxu0
    %v1655 = vadd.f32 %v1634, %v1652
    %v1656 = vtanh.pop %v1655
    %v1657 = vmul.f32 %v1656, 0.5
    %v1658 = vadd.f32 %v1657, 0.5
    %v1659 = vmul.f32 %v1658, %v1573
    %1661 = vrot.lane.b32.xlu0 %v1656, 64
    %v1662 = vpop.permute.xlu0 %1661
    %v1664 = vmul.f32 %v1658, %v1662
    %1666 = vrot.lane.b32.xlu0 %v1664, 32
    %v1667 = vpop.permute.xlu0 %1666
    %v1669 = vadd.f32 %v1659, %v1667
    %v1670 = vtanh.pop %v1669
    %1672 = vrot.lane.b32.xlu0 %v1670, 64
    %v1673 = vpop.permute.xlu0 %1672
    %v1675 = vmul.f32 %v1658, %v1673
    %1677 = vrot.lane.b32.xlu0 %v1675, 64
    %v1678 = vpop.permute.xlu0 %1677
    %s1680 = scalar_lea.vmem [#allocation13], 8
    %1681 = vst.msk [vmem:[%s1680] sm:$0x3] %vm242, %v1678
    %v1682 = vld [vmem:[%s1146] sm:$0x3]
    %v1683 = vpack.c.bf16 %v1627, %v1627
    %1685 = vrot.lane.b32.xlu0 %v1683, 32
    %v1686 = vpop.permute.xlu0 %1685
    %v1688 = vsel %vm132, %v1686, 0
    %1690 = vmatpush.bf16.msra.mxu0 0
    %1691 = vmatpush.bf16.msra.mxu0 0
    %1692 = vmatpush.bf16.msra.mxu0 0
    %1693 = vmatpush.bf16.msra.mxu0 0
    %1694 = vmatpush.bf16.msra.mxu0 0
    %1695 = vmatpush.bf16.msra.mxu0 0
    %1696 = vmatpush.bf16.msra.mxu0 %v1284
    %1697 = vmatpush.bf16.msra.mxu0 %v1283
    %1698 = vmatmul.bf16.gmra.mxu0 %v1688
    %v1699 = vpop.f32.mrf.mxu0
    %v1700 = vadd.f32 0.0, %v1699
    %v1701 = vpop.f32.mrf.mxu0
    %1702 = vdwg.mxu0
    %v1703 = vadd.f32 %v1682, %v1700
    %v1704 = vtanh.pop %v1703
    %v1705 = vmul.f32 %v1704, 0.5
    %v1706 = vadd.f32 %v1705, 0.5
    %v1707 = vmul.f32 %v1706, %v1621
    %1709 = vrot.lane.b32.xlu0 %v1704, 64
    %v1710 = vpop.permute.xlu0 %1709
    %v1712 = vmul.f32 %v1706, %v1710
    %1714 = vrot.lane.b32.xlu0 %v1712, 32
    %v1715 = vpop.permute.xlu0 %1714
    %v1717 = vadd.f32 %v1707, %v1715
    %v1718 = vtanh.pop %v1717
    %1720 = vrot.lane.b32.xlu0 %v1718, 64
    %v1721 = vpop.permute.xlu0 %1720
    %v1723 = vmul.f32 %v1706, %v1721
    %1725 = vrot.lane.b32.xlu0 %v1723, 32
    %v1726 = vpop.permute.xlu0 %1725
    %1728 = vst.msk [vmem:[%s1680] sm:$0x3] %vm178, %v1726
    %v1729 = vld [vmem:[%s1113] sm:$0x3]
    %v1730 = vpack.c.bf16 %v1675, %v1675
    %1732 = vrot.lane.b32.xlu0 %v1730, 32
    %v1733 = vpop.permute.xlu0 %1732
    %v1735 = vsel %vm132, %v1733, 0
    %1737 = vmatpush.bf16.msra.mxu0 0
    %1738 = vmatpush.bf16.msra.mxu0 0
    %1739 = vmatpush.bf16.msra.mxu0 0
    %1740 = vmatpush.bf16.msra.mxu0 0
    %1741 = vmatpush.bf16.msra.mxu0 0
    %1742 = vmatpush.bf16.msra.mxu0 0
    %1743 = vmatpush.bf16.msra.mxu0 %v1344
    %1744 = vmatpush.bf16.msra.mxu0 %v1343
    %1745 = vmatmul.bf16.gmra.mxu0 %v1735
    %v1746 = vpop.f32.mrf.mxu0
    %v1747 = vadd.f32 0.0, %v1746
    %v1748 = vpop.f32.mrf.mxu0
    %1749 = vdwg.mxu0
    %v1750 = vadd.f32 %v1729, %v1747
    %v1751 = vtanh.pop %v1750
    %v1752 = vmul.f32 %v1751, 0.5
    %v1753 = vadd.f32 %v1752, 0.5
    %v1754 = vmul.f32 %v1753, %v1669
    %1756 = vrot.lane.b32.xlu0 %v1751, 64
    %v1757 = vpop.permute.xlu0 %1756
    %v1759 = vmul.f32 %v1753, %v1757
    %1761 = vrot.lane.b32.xlu0 %v1759, 32
    %v1762 = vpop.permute.xlu0 %1761
    %v1764 = vadd.f32 %v1754, %v1762
    %v1765 = vtanh.pop %v1764
    %1767 = vrot.lane.b32.xlu0 %v1765, 64
    %v1768 = vpop.permute.xlu0 %1767
    %v1770 = vmul.f32 %v1753, %v1768
    %1772 = vrot.lane.b32.xlu0 %v1770, 64
    %v1773 = vpop.permute.xlu0 %1772
    %1775 = vst.msk [vmem:[%s1632] sm:$0x3] %vm242, %v1773
    %v1776 = vld [vmem:[%s1181] sm:$0x3]
    %v1777 = vpack.c.bf16 %v1723, %v1723
    %1779 = vrot.lane.b32.xlu0 %v1777, 32
    %v1780 = vpop.permute.xlu0 %1779
    %v1782 = vsel %vm132, %v1780, 0
    %1784 = vmatpush.bf16.msra.mxu0 0
    %1785 = vmatpush.bf16.msra.mxu0 0
    %1786 = vmatpush.bf16.msra.mxu0 0
    %1787 = vmatpush.bf16.msra.mxu0 0
    %1788 = vmatpush.bf16.msra.mxu0 0
    %1789 = vmatpush.bf16.msra.mxu0 0
    %1790 = vmatpush.bf16.msra.mxu0 %v1284
    %1791 = vmatpush.bf16.msra.mxu0 %v1283
    %1792 = vmatmul.bf16.gmra.mxu0 %v1782
    %v1793 = vpop.f32.mrf.mxu0
    %v1794 = vadd.f32 0.0, %v1793
    %v1795 = vpop.f32.mrf.mxu0
    %1796 = vdwg.mxu0
    %v1797 = vadd.f32 %v1776, %v1794
    %v1798 = vtanh.pop %v1797
    %v1799 = vmul.f32 %v1798, 0.5
    %v1800 = vadd.f32 %v1799, 0.5
    %v1801 = vmul.f32 %v1800, %v1717
    %1803 = vrot.lane.b32.xlu0 %v1798, 64
    %v1804 = vpop.permute.xlu0 %1803
    %v1806 = vmul.f32 %v1800, %v1804
    %1808 = vrot.lane.b32.xlu0 %v1806, 32
    %v1809 = vpop.permute.xlu0 %1808
    %v1811 = vadd.f32 %v1801, %v1809
    %v1812 = vtanh.pop %v1811
    %1814 = vrot.lane.b32.xlu0 %v1812, 64
    %v1815 = vpop.permute.xlu0 %1814
    %v1817 = vmul.f32 %v1800, %v1815
    %1819 = vrot.lane.b32.xlu0 %v1817, 32
    %v1820 = vpop.permute.xlu0 %1819
    %1822 = vst.msk [vmem:[%s1584] sm:$0x3] %vm178, %v1820
    %v1823 = vld [vmem:[%s1078] sm:$0x3]
    %v1824 = vpack.c.bf16 %v1770, %v1770
    %1826 = vrot.lane.b32.xlu0 %v1824, 32
    %v1827 = vpop.permute.xlu0 %1826
    %v1829 = vsel %vm132, %v1827, 0
    %1831 = vmatpush.bf16.msra.mxu0 0
    %1832 = vmatpush.bf16.msra.mxu0 0
    %1833 = vmatpush.bf16.msra.mxu0 0
    %1834 = vmatpush.bf16.msra.mxu0 0
    %1835 = vmatpush.bf16.msra.mxu0 0
    %1836 = vmatpush.bf16.msra.mxu0 0
    %1837 = vmatpush.bf16.msra.mxu0 %v1344
    %1838 = vmatpush.bf16.msra.mxu0 %v1343
    %1839 = vmatmul.bf16.gmra.mxu0 %v1829
    %v1840 = vpop.f32.mrf.mxu0
    %v1841 = vadd.f32 0.0, %v1840
    %v1842 = vpop.f32.mrf.mxu0
    %1843 = vdwg.mxu0
    %v1844 = vadd.f32 %v1823, %v1841
    %v1845 = vtanh.pop %v1844
    %v1846 = vmul.f32 %v1845, 0.5
    %v1847 = vadd.f32 %v1846, 0.5
    %v1848 = vmul.f32 %v1847, %v1764
    %1850 = vrot.lane.b32.xlu0 %v1845, 64
    %v1851 = vpop.permute.xlu0 %1850
    %v1853 = vmul.f32 %v1847, %v1851
    %1855 = vrot.lane.b32.xlu0 %v1853, 32
    %v1856 = vpop.permute.xlu0 %1855
    %v1858 = vadd.f32 %v1848, %v1856
    %v1859 = vtanh.pop %v1858
    %1861 = vrot.lane.b32.xlu0 %v1859, 64
    %v1862 = vpop.permute.xlu0 %1861
    %v1864 = vmul.f32 %v1847, %v1862
    %1866 = vrot.lane.b32.xlu0 %v1864, 64
    %v1867 = vpop.permute.xlu0 %1866
    %1869 = vst.msk [vmem:[%s1536] sm:$0x3] %vm242, %v1867
    %v1870 = vld [vmem:[%s1216] sm:$0x3]
    %v1871 = vpack.c.bf16 %v1817, %v1817
    %1873 = vrot.lane.b32.xlu0 %v1871, 32
    %v1874 = vpop.permute.xlu0 %1873
    %v1876 = vsel %vm132, %v1874, 0
    %1878 = vmatpush.bf16.msra.mxu0 0
    %1879 = vmatpush.bf16.msra.mxu0 0
    %1880 = vmatpush.bf16.msra.mxu0 0
    %1881 = vmatpush.bf16.msra.mxu0 0
    %1882 = vmatpush.bf16.msra.mxu0 0
    %1883 = vmatpush.bf16.msra.mxu0 0
    %1884 = vmatpush.bf16.msra.mxu0 %v1284
    %1885 = vmatpush.bf16.msra.mxu0 %v1283
    %1886 = vmatmul.bf16.gmra.mxu0 %v1876
    %v1887 = vpop.f32.mrf.mxu0
    %v1888 = vadd.f32 0.0, %v1887
    %v1889 = vpop.f32.mrf.mxu0
    %1890 = vdwg.mxu0
    %v1891 = vadd.f32 %v1870, %v1888
    %v1892 = vtanh.pop %v1891
    %v1893 = vmul.f32 %v1892, 0.5
    %v1894 = vadd.f32 %v1893, 0.5
    %v1895 = vmul.f32 %v1894, %v1811
    %1897 = vrot.lane.b32.xlu0 %v1892, 64
    %v1898 = vpop.permute.xlu0 %1897
    %v1900 = vmul.f32 %v1894, %v1898
    %1902 = vrot.lane.b32.xlu0 %v1900, 32
    %v1903 = vpop.permute.xlu0 %1902
    %v1905 = vadd.f32 %v1895, %v1903
    %v1906 = vtanh.pop %v1905
    %1908 = vrot.lane.b32.xlu0 %v1906, 64
    %v1909 = vpop.permute.xlu0 %1908
    %v1911 = vmul.f32 %v1894, %v1909
    %1913 = vrot.lane.b32.xlu0 %v1911, 32
    %v1914 = vpop.permute.xlu0 %1913
    %1916 = vst.msk [vmem:[%s1488] sm:$0x3] %vm178, %v1914
    %v1917 = vld [vmem:[%s1043] sm:$0x3]
    %v1918 = vpack.c.bf16 %v1864, %v1864
    %1920 = vrot.lane.b32.xlu0 %v1918, 32
    %v1921 = vpop.permute.xlu0 %1920
    %v1923 = vsel %vm132, %v1921, 0
    %1925 = vmatpush.bf16.msra.mxu0 0
    %1926 = vmatpush.bf16.msra.mxu0 0
    %1927 = vmatpush.bf16.msra.mxu0 0
    %1928 = vmatpush.bf16.msra.mxu0 0
    %1929 = vmatpush.bf16.msra.mxu0 0
    %1930 = vmatpush.bf16.msra.mxu0 0
    %1931 = vmatpush.bf16.msra.mxu0 %v1344
    %1932 = vmatpush.bf16.msra.mxu0 %v1343
    %1933 = vmatmul.bf16.gmra.mxu0 %v1923
    %v1934 = vpop.f32.mrf.mxu0
    %v1935 = vadd.f32 0.0, %v1934
    %v1936 = vpop.f32.mrf.mxu0
    %1937 = vdwg.mxu0
    %v1938 = vadd.f32 %v1917, %v1935
    %v1939 = vtanh.pop %v1938
    %v1940 = vmul.f32 %v1939, 0.5
    %v1941 = vadd.f32 %v1940, 0.5
    %v1942 = vmul.f32 %v1941, %v1858
    %1944 = vrot.lane.b32.xlu0 %v1939, 64
    %v1945 = vpop.permute.xlu0 %1944
    %v1947 = vmul.f32 %v1941, %v1945
    %1949 = vrot.lane.b32.xlu0 %v1947, 32
    %v1950 = vpop.permute.xlu0 %1949
    %v1952 = vadd.f32 %v1942, %v1950
    %v1953 = vtanh.pop %v1952
    %1955 = vrot.lane.b32.xlu0 %v1953, 64
    %v1956 = vpop.permute.xlu0 %1955
    %v1958 = vmul.f32 %v1941, %v1956
    %1960 = vrot.lane.b32.xlu0 %v1958, 64
    %v1961 = vpop.permute.xlu0 %1960
    %1963 = vst.msk [vmem:[%s1440] sm:$0x3] %vm242, %v1961
    %v1964 = vld [vmem:[%s1251] sm:$0x3]
    %v1965 = vpack.c.bf16 %v1911, %v1911
    %1967 = vrot.lane.b32.xlu0 %v1965, 32
    %v1968 = vpop.permute.xlu0 %1967
    %v1970 = vsel %vm132, %v1968, 0
    %1972 = vmatpush.bf16.msra.mxu0 0
    %1973 = vmatpush.bf16.msra.mxu0 0
    %1974 = vmatpush.bf16.msra.mxu0 0
    %1975 = vmatpush.bf16.msra.mxu0 0
    %1976 = vmatpush.bf16.msra.mxu0 0
    %1977 = vmatpush.bf16.msra.mxu0 0
    %1978 = vmatpush.bf16.msra.mxu0 %v1284
    %1979 = vmatpush.bf16.msra.mxu0 %v1283
    %1980 = vmatmul.bf16.gmra.mxu0 %v1970
    %v1981 = vpop.f32.mrf.mxu0
    %v1982 = vadd.f32 0.0, %v1981
    %v1983 = vpop.f32.mrf.mxu0
    %1984 = vdwg.mxu0
    %v1985 = vadd.f32 %v1964, %v1982
    %v1986 = vtanh.pop %v1985
    %v1987 = vmul.f32 %v1986, 0.5
    %v1988 = vadd.f32 %v1987, 0.5
    %v1989 = vmul.f32 %v1988, %v1905
    %1991 = vrot.lane.b32.xlu0 %v1986, 64
    %v1992 = vpop.permute.xlu0 %1991
    %v1994 = vmul.f32 %v1988, %v1992
    %1996 = vrot.lane.b32.xlu0 %v1994, 32
    %v1997 = vpop.permute.xlu0 %1996
    %v1999 = vadd.f32 %v1989, %v1997
    %v2000 = vtanh.pop %v1999
    %2002 = vrot.lane.b32.xlu0 %v2000, 64
    %v2003 = vpop.permute.xlu0 %2002
    %v2005 = vmul.f32 %v1988, %v2003
    %2007 = vrot.lane.b32.xlu0 %v2005, 32
    %v2008 = vpop.permute.xlu0 %2007
    %2010 = vst.msk [vmem:[%s1392] sm:$0x3] %vm178, %v2008
    %v2011 = vld [vmem:[%s1008] sm:$0x3]
    %v2012 = vpack.c.bf16 %v1958, %v1958
    %2014 = vrot.lane.b32.xlu0 %v2012, 32
    %v2015 = vpop.permute.xlu0 %2014
    %v2017 = vsel %vm132, %v2015, 0
    %2019 = vmatpush.bf16.msra.mxu0 0
    %2020 = vmatpush.bf16.msra.mxu0 0
    %2021 = vmatpush.bf16.msra.mxu0 0
    %2022 = vmatpush.bf16.msra.mxu0 0
    %2023 = vmatpush.bf16.msra.mxu0 0
    %2024 = vmatpush.bf16.msra.mxu0 0
    %2025 = vmatpush.bf16.msra.mxu0 %v1344
    %2026 = vmatpush.bf16.msra.mxu0 %v1343
    %2027 = vmatmul.bf16.gmra.mxu0 %v2017
    %v2028 = vpop.f32.mrf.mxu0
    %v2029 = vadd.f32 0.0, %v2028
    %v2030 = vpop.f32.mrf.mxu0
    %2031 = vdwg.mxu0
    %v2032 = vadd.f32 %v2011, %v2029
    %v2033 = vtanh.pop %v2032
    %v2034 = vmul.f32 %v2033, 0.5
    %v2035 = vadd.f32 %v2034, 0.5
    %v2036 = vmul.f32 %v2035, %v1952
    %2038 = vrot.lane.b32.xlu0 %v2033, 64
    %v2039 = vpop.permute.xlu0 %2038
    %v2041 = vmul.f32 %v2035, %v2039
    %2043 = vrot.lane.b32.xlu0 %v2041, 32
    %v2044 = vpop.permute.xlu0 %2043
    %v2046 = vadd.f32 %v2036, %v2044
    %v2047 = vtanh.pop %v2046
    %2049 = vrot.lane.b32.xlu0 %v2047, 64
    %v2050 = vpop.permute.xlu0 %2049
    %v2052 = vmul.f32 %v2035, %v2050
    %2054 = vrot.lane.b32.xlu0 %v2052, 64
    %v2055 = vpop.permute.xlu0 %2054
    %2057 = vst.msk [vmem:[#allocation13] sm:$0x3] %vm242, %v2055
    // Predicated region
    $region46: #{tpu_custom_call.1} parent=1 // pred_check
      _
    $region47: #{tpu_custom_call.1} parent=1 // pred_check_branch
      %2059 = sbr.rel (0) target = $region49
    $region48: #{tpu_custom_call.1} parent=1 // pred_region
      %2061 = vsyncadd [#allocation6], 0
      %s2062 = sshll.u32 [#allocation13], 4
      %s2063 = int_to_ptr.vmem [resolvable:$true] %s2062
      %s2064 = sshll.u32 %s6, 4
      %s2065 = int_to_ptr.hbm [resolvable:$true] %s2064
      %2070 = dma.vmem_to_hbm [thread:$0]  %s2063, 256, %s2065, [#allocation6], 32, 32, 2
    $region49: #{tpu_custom_call.1} parent=1 // pred_fallthru
      _
    // Predicated region
    $region50: #{tpu_custom_call.1} parent=1 // pred_check
      _
    $region51: #{tpu_custom_call.1} parent=1 // pred_check_branch
      %2072 = sbr.rel (0) target = $region53
    $region52: #{tpu_custom_call.1} parent=1 // pred_region
      %2074 = dma.done [#allocation6], 256
    $region53: #{tpu_custom_call.1} parent=1 // pred_fallthru
      _
    %2075 = vsyncpa [#allocation5], 1
    %2076 = vsyncpa [#allocation8], 1
    %2077 = vsyncpa [#allocation11], 1
    %2078 = vsyncpa [#allocation6], 1

</llo_original>
